<compile_context>
chip_gen: v7x
topology: tpu7x:2x2x1
jax: 0.10.0
libtpu: 0.0.40
codegen_flags: <defaults>
</compile_context>

<pallas_src>
import jax
import jax.numpy as jnp
from jax import lax
from jax.experimental import pallas as pl
from jax.experimental.pallas import tpu as pltpu


# The 8 off-center 3x3 taps, shared by the weight folding and the kernel so the
# slab column order always matches the fused-weight row order.
_OFF_TAPS = [(dy, dx) for dy in range(3) for dx in range(3) if (dy, dx) != (1, 1)]


# ----------------------------------------------------------------------------
# Fused-stage Pallas kernel: `depth` MLPBlocks over one (bt, H, W, C) NHWC tile.
# ----------------------------------------------------------------------------
def make_stage_kernel(depth, H, W, C, Cc, K, Kpad):
    def kernel(x_ref, wf_ref, b1_ref, w2_ref, o_ref, act_ref, pat_ref):
        bt = x_ref.shape[0]
        rows = bt * H * W

        # f32 residual carry for the whole stage (block chaining stays in VMEM).
        act_ref[...] = x_ref[...].astype(jnp.float32)

        # Zero only the regions the per-block stores never touch:
        #   * zero-padding lane columns [K:Kpad]
        #   * the 1-pixel halo strips of each off-center tap
        # They are never overwritten, so zeroing once per grid step is enough
        # and it is NOT program_id-gated (megacore safe).
        if Kpad > K:
            pat_ref[:, :, :, K:Kpad] = jnp.zeros((bt, H, W, Kpad - K),
                                                 pat_ref.dtype)
        for t, (dy, dx) in enumerate(_OFF_TAPS):
            oy, ox = dy - 1, dx - 1
            i0, i1 = max(0, -oy), min(H, H - oy)
            j0, j1 = max(0, -ox), min(W, W - ox)
            col = C + t * Cc
            if i0 > 0:
                pat_ref[:, 0:i0, :, col:col + Cc] = jnp.zeros(
                    (bt, i0, W, Cc), pat_ref.dtype)
            if i1 < H:
                pat_ref[:, i1:H, :, col:col + Cc] = jnp.zeros(
                    (bt, H - i1, W, Cc), pat_ref.dtype)
            if j0 > 0:
                pat_ref[:, :, 0:j0, col:col + Cc] = jnp.zeros(
                    (bt, H, j0, Cc), pat_ref.dtype)
            if j1 < W:
                pat_ref[:, :, j1:W, col:col + Cc] = jnp.zeros(
                    (bt, H, W - j1, Cc), pat_ref.dtype)

        for d in range(depth):
            # bf16 copy of the full-C activation lives at slab columns [0:C];
            # its first Cc lanes double as the source for the 8 shifted taps
            # (ref-sliced loads/stores -- no lane sub-slice of a full-tile value).
            pat_ref[:, :, :, 0:C] = act_ref[...].astype(pat_ref.dtype)
            for t, (dy, dx) in enumerate(_OFF_TAPS):
                oy, ox = dy - 1, dx - 1
                i0, i1 = max(0, -oy), min(H, H - oy)
                j0, j1 = max(0, -ox), min(W, W - ox)
                col = C + t * Cc
                pat_ref[:, i0:i1, j0:j1, col:col + Cc] = \
                    pat_ref[:, i0 + oy:i1 + oy, j0 + ox:j1 + ox, 0:Cc]

            # NOTE: the leading-dim collapse is tile-preserving when W % 8 == 0;
            # audit the Mosaic dump for copies at odd W (late FasterNet stages).
            patches = pat_ref[...].reshape(rows, Kpad)         # (rows, Kpad) bf16

            # fused partial-conv3 + 1x1 conv (BN folded) -> ReLU -> 1x1 conv
            # (layer_scale folded into w2).  Single MXU matmul with K = Kpad.
            h = jnp.dot(patches, wf_ref[d],
                        preferred_element_type=jnp.float32)    # (rows, Hid) f32
            h = jnp.maximum(h + b1_ref[d], 0.0).astype(jnp.bfloat16)
            mlp = jnp.dot(h, w2_ref[d],
                          preferred_element_type=jnp.float32)  # (rows, C) f32

            # residual add in f32 on the VMEM-resident carry.
            act_ref[...] = act_ref[...] + mlp.reshape(bt, H, W, C)

        o_ref[...] = act_ref[...].astype(o_ref.dtype)

    return kernel


# ----------------------------------------------------------------------------
# Parameter folding (done once, outside the kernel).
# ----------------------------------------------------------------------------
def fold_stage_params(raw_blocks, n_div, eps=1e-5):
    """Fold conv3 / BN / layer_scale into per-block (wf, b1, w2) and stack."""
    C, Hid = raw_blocks[0][1].shape
    Cc = C // n_div
    K = C + 8 * Cc
    Kpad = -(-K // 128) * 128          # slab width padded to a 128 multiple

    wfs, b1s, w2s = [], [], []
    for (w3, w1, g, b, m, v, w2, ls) in raw_blocks:
        scale = g / jnp.sqrt(v + eps)
        w1f = (w1 * scale[None, :]).astype(jnp.float32)       # BN scale folded
        b1 = (b - m * scale)[None, :].astype(jnp.float32)     # (1, Hid)

        # 3x3 conv OIHW -> (ky, kx, Cin, Cout), composed with the first 1x1.
        w3t = jnp.transpose(w3, (2, 3, 1, 0)).astype(jnp.float32)
        center = jnp.einsum("io,oh->ih", w3t[1, 1], w1f[:Cc])  # center tap
        full_c = jnp.concatenate([center, w1f[Cc:]], axis=0)   # rows [0:C]
        offs = [jnp.einsum("io,oh->ih", w3t[dy, dx], w1f[:Cc])
                for (dy, dx) in _OFF_TAPS]                      # rows [C:K]
        wf = jnp.concatenate([full_c] + offs, axis=0)           # (K, Hid)
        wf = jnp.pad(wf, ((0, Kpad - K), (0, 0)))                # zero pad rows

        wfs.append(wf)
        b1s.append(b1)
        w2s.append((w2 * ls[None, :]).astype(jnp.float32))       # ls folded

    return dict(
        wf=jnp.stack(wfs).astype(jnp.bfloat16),    # (depth, Kpad, Hid)
        b1=jnp.stack(b1s).astype(jnp.float32),     # (depth, 1, Hid)
        w2=jnp.stack(w2s).astype(jnp.bfloat16),    # (depth, Hid, C)
        Cc=Cc, K=K, Kpad=Kpad, Hid=Hid,
    )


# ----------------------------------------------------------------------------
# Generation-aware tile choice and VMEM budgeting.
# ----------------------------------------------------------------------------
_VMEM_BUDGET = {"v7x": 44 << 20, "v6e": 100 << 20, "v5e": 100 << 20}


def _tpu_generation():
    try:
        kind = jax.devices()[0].device_kind.lower()
    except Exception:
        return "other"
    if "v7" in kind or "7x" in kind:
        return "v7x"
    if "v6" in kind:
        return "v6e"
    if "v5e" in kind or "v5 lite" in kind or "v5lite" in kind:
        return "v5e"
    return "other"


def _pad_up(a, b):
    return -(-a // b) * b


def _buf_bytes(shape, dtype_bytes):
    """Rough VMEM footprint: last dim -> 128 lanes, 2nd-last -> 8 sublanes."""
    s = list(shape)
    if len(s) >= 1:
        s[-1] = _pad_up(s[-1], 128)
    if len(s) >= 2:
        s[-2] = _pad_up(s[-2], 8)
    n = 1
    for d in s:
        n *= d
    return n * dtype_bytes


def _vmem_estimate(bt, H, W, C, Hid, Kpad, depth):
    io = (2 * _buf_bytes((bt, H, W, C), 2)        # bf16 input block, x2 buffered
          + 2 * _buf_bytes((bt, H, W, C), 4))     # f32 output block, x2 buffered
    weights = 2 * (_buf_bytes((depth, Kpad, Hid), 2)
                   + _buf_bytes((depth, 1, Hid), 4)
                   + _buf_bytes((depth, Hid, C), 2))
    scratch = (_buf_bytes((bt, H, W, C), 4)       # f32 residual carry
               + _buf_bytes((bt, H, W, Kpad), 2)) # bf16 im2col slab
    return io + weights + scratch


def _pick_batch_tile(N, H, W, C, Hid, Kpad, depth, gen, budget):
    divisors = [d for d in range(1, N + 1) if N % d == 0]
    fits = [d for d in divisors
            if _vmem_estimate(d, H, W, C, Hid, Kpad, depth) <= budget]
    if not fits:
        fits = [1]
    if gen == "v7x":
        # Keep both TensorCores busy: prefer an even number of >=2 grid steps.
        even = [d for d in fits if (N // d) >= 2 and (N // d) % 2 == 0]
        if even:
            return max(even)
        multi = [d for d in fits if (N // d) >= 2]
        if multi:
            return max(multi)
    # Single-TC chips (v5e/v6e): the single biggest tile that fits wins.
    return max(fits)


# ----------------------------------------------------------------------------
# Stage wrapper: one pallas_call for the whole BasicStage.
# ----------------------------------------------------------------------------
def basic_stage_pallas(x_nchw, params):
    # NCHW -> NHWC once for the whole stage; all blocks chain inside the kernel.
    x = jnp.transpose(x_nchw, (0, 2, 3, 1)).astype(jnp.bfloat16)
    N, H, W, C = x.shape
    wf, b1, w2 = params["wf"], params["b1"], params["w2"]
    depth, Kpad, Hid = wf.shape
    Cc, K = params["Cc"], params["K"]

    gen = _tpu_generation()
    budget = _VMEM_BUDGET.get(gen, 44 << 20)
    bt = _pick_batch_tile(N, H, W, C, Hid, Kpad, depth, gen, budget)

    est = _vmem_estimate(bt, H, W, C, Hid, Kpad, depth)
    vmem_limit = None
    if est > (30 << 20):   # only override the default scoped limit when needed
        cap = (112 << 20) if gen in ("v5e", "v6e") else (56 << 20)
        vmem_limit = min(max(est * 5 // 4, 32 << 20), cap)

    kernel = make_stage_kernel(depth, H, W, C, Cc, K, Kpad)

    out = pl.pallas_call(
        kernel,
        out_shape=jax.ShapeDtypeStruct((N, H, W, C), jnp.float32),
        grid_spec=pltpu.PrefetchScalarGridSpec(
            num_scalar_prefetch=0,
            grid=(N // bt,),
            in_specs=[
                pl.BlockSpec((bt, H, W, C), lambda n: (n, 0, 0, 0)),
                pl.BlockSpec((depth, Kpad, Hid), lambda n: (0, 0, 0)),
                pl.BlockSpec((depth, 1, Hid), lambda n: (0, 0, 0)),
                pl.BlockSpec((depth, Hid, C), lambda n: (0, 0, 0)),
            ],
            out_specs=pl.BlockSpec((bt, H, W, C), lambda n: (n, 0, 0, 0)),
            scratch_shapes=[
                pltpu.VMEM((bt, H, W, C), jnp.float32),      # f32 residual carry
                pltpu.VMEM((bt, H, W, Kpad), jnp.bfloat16),  # im2col slab
            ],
        ),
        compiler_params=pltpu.CompilerParams(
            dimension_semantics=("parallel",),
            vmem_limit_bytes=vmem_limit),
    )(x, wf, b1, w2)

    return jnp.transpose(out, (0, 3, 1, 2))


# ----------------------------------------------------------------------------
# Plain-JAX reference mirroring the PyTorch forward (NCHW, f32).
# ----------------------------------------------------------------------------
def basic_stage_reference(x_nchw, raw_blocks, n_div, eps=1e-5):
    x = x_nchw.astype(jnp.float32)
    for (w3, w1, g, b, m, v, w2, ls) in raw_blocks:
        C = x.shape[1]
        Cc = C // n_div
        conv = lax.conv_general_dilated(
            x[:, :Cc], w3.astype(jnp.float32), (1, 1), ((1, 1), (1, 1)),
            dimension_numbers=("NCHW", "OIHW", "NCHW"))
        y = jnp.concatenate([conv, x[:, Cc:]], axis=1)
        h = jnp.einsum("nchw,cd->ndhw", y, w1)                     # 1x1 conv
        scale = g / jnp.sqrt(v + eps)
        h = h * scale[None, :, None, None] + (b - m * scale)[None, :, None, None]
        h = jnp.maximum(h, 0.0)
        out = jnp.einsum("ndhw,dc->nchw", h, w2)                   # 1x1 conv
        x = x + ls[None, :, None, None] * out
    return x


if __name__ == "__main__":
    # Small shapes consistent with BasicStage(dim=16, depth=2, n_div=4, mlp_ratio=2)
    N, dim, H, W = 2, 16, 8, 8
    depth = 2
    n_div = 4
    mlp_ratio = 2
    layer_scale_init_value = 0.0   # BasicStage default -> plain residual forward
    Cc = dim // n_div
    hidden = int(dim * mlp_ratio)

    key = jax.random.PRNGKey(0)
    kx, key = jax.random.split(key)
    x = jax.random.normal(kx, (N, dim, H, W), jnp.float32)                 # NCHW

    raw_blocks = []
    for _ in range(depth):
        ks = jax.random.split(key, 8)
        key = ks[0]
        w3 = 0.1 * jax.random.normal(ks[1], (Cc, Cc, 3, 3), jnp.float32)   # Conv2d(Cc,Cc,3)
        w1 = 0.1 * jax.random.normal(ks[2], (dim, hidden), jnp.float32)    # Conv2d(dim,hid,1)
        w2 = 0.1 * jax.random.normal(ks[3], (hidden, dim), jnp.float32)    # Conv2d(hid,dim,1)
        g = 1.0 + 0.1 * jax.random.normal(ks[4], (hidden,), jnp.float32)
        b = 0.1 * jax.random.normal(ks[5], (hidden,), jnp.float32)
        m = 0.1 * jax.random.normal(ks[6], (hidden,), jnp.float32)
        v = jnp.abs(jax.random.normal(ks[7], (hidden,), jnp.float32)) + 0.5
        if layer_scale_init_value > 0:
            ls = layer_scale_init_value * jnp.ones((dim,), jnp.float32)
        else:
            ls = jnp.ones((dim,), jnp.float32)   # identity scale == plain forward
        raw_blocks.append((w3, w1, g, b, m, v, w2, ls))

    params = fold_stage_params(raw_blocks, n_div)

    out = basic_stage_pallas(x, params)
    out = jax.block_until_ready(out)

    ref = basic_stage_reference(x, raw_blocks, n_div)

    assert out.shape == (N, dim, H, W)
    err = float(jnp.max(jnp.abs(out - ref)))
    # bf16 MXU operands (f32 accumulation / f32 residual carry) vs f32 reference.
    assert jnp.allclose(out, ref, rtol=5e-2, atol=5e-2), f"max abs err = {err}"
    print("KERNEL_OK")
</pallas_src>

<mosaic_0001>
module attributes {stable_mosaic.version = 11 : i64} {
  func.func @kernel(%arg0: i32, %arg1: memref<2x8x8x16xbf16, #tpu.memory_space<vmem>>, %arg2: memref<2x128x32xbf16, #tpu.memory_space<vmem>>, %arg3: memref<2x1x32xf32, #tpu.memory_space<vmem>>, %arg4: memref<2x32x16xbf16, #tpu.memory_space<vmem>>, %arg5: memref<2x8x8x16xf32, #tpu.memory_space<vmem>>, %arg6: memref<2x8x8x16xf32, #tpu.memory_space<vmem>>, %arg7: memref<2x8x8x128xbf16, #tpu.memory_space<vmem>>) attributes {dimension_semantics = [#tpu.dimension_semantics<parallel>], iteration_bounds = array<i64: 1>, scalar_prefetch = 0 : i64, scratch_operands = 2 : i64, tpu.core_type = #tpu.core_type<tc>, window_params = [{transform_indices = @transform_0, window_bounds = array<i64: 2, 8, 8, 16>}, {pipeline_mode = #tpu.pipeline_mode<synchronous>, transform_indices = @transform_1, window_bounds = array<i64: 2, 128, 32>}, {pipeline_mode = #tpu.pipeline_mode<synchronous>, transform_indices = @transform_2, window_bounds = array<i64: 2, 1, 32>}, {pipeline_mode = #tpu.pipeline_mode<synchronous>, transform_indices = @transform_3, window_bounds = array<i64: 2, 32, 16>}, {transform_indices = @transform_4, window_bounds = array<i64: 2, 8, 8, 16>}]} {
    %c0 = arith.constant 0 : index
    %c0_0 = arith.constant 0 : index
    %c0_1 = arith.constant 0 : index
    %c0_2 = arith.constant 0 : index
    %0 = vector.load %arg1[%c0, %c0_0, %c0_1, %c0_2] : memref<2x8x8x16xbf16, #tpu.memory_space<vmem>>, vector<2x8x8x16xbf16>
    %1 = arith.extf %0 : vector<2x8x8x16xbf16> to vector<2x8x8x16xf32>
    %c0_3 = arith.constant 0 : index
    %c0_4 = arith.constant 0 : index
    %c0_5 = arith.constant 0 : index
    %c0_6 = arith.constant 0 : index
    %2 = vector.load %arg6[%c0_3, %c0_4, %c0_5, %c0_6] : memref<2x8x8x16xf32, #tpu.memory_space<vmem>>, vector<2x8x8x16xf32>
    tpu.vector_store %arg6[%c0_3, %c0_4, %c0_5, %c0_6], %1 {strides = array<i32>} : memref<2x8x8x16xf32, #tpu.memory_space<vmem>>, vector<2x8x8x16xf32>,
    %cst = arith.constant 0.000000e+00 : bf16
    %3 = vector.broadcast %cst : bf16 to vector<2x8x8x80xbf16>
    %c0_7 = arith.constant 0 : index
    %c0_8 = arith.constant 0 : index
    %c0_9 = arith.constant 0 : index
    %c48 = arith.constant 48 : index
    %4 = vector.load %arg7[%c0_7, %c0_8, %c0_9, %c48] : memref<2x8x8x128xbf16, #tpu.memory_space<vmem>>, vector<2x8x8x80xbf16>
    tpu.vector_store %arg7[%c0_7, %c0_8, %c0_9, %c48], %3 {strides = array<i32>} : memref<2x8x8x128xbf16, #tpu.memory_space<vmem>>, vector<2x8x8x80xbf16>,
    %cst_10 = arith.constant 0.000000e+00 : bf16
    %5 = vector.broadcast %cst_10 : bf16 to vector<2x1x8x4xbf16>
    %c0_11 = arith.constant 0 : index
    %c0_12 = arith.constant 0 : index
    %c0_13 = arith.constant 0 : index
    %c16 = arith.constant 16 : index
    %6 = vector.load %arg7[%c0_11, %c0_12, %c0_13, %c16] : memref<2x8x8x128xbf16, #tpu.memory_space<vmem>>, vector<2x1x8x4xbf16>
    tpu.vector_store %arg7[%c0_11, %c0_12, %c0_13, %c16], %5 {strides = array<i32>} : memref<2x8x8x128xbf16, #tpu.memory_space<vmem>>, vector<2x1x8x4xbf16>,
    %cst_14 = arith.constant 0.000000e+00 : bf16
    %7 = vector.broadcast %cst_14 : bf16 to vector<2x8x1x4xbf16>
    %c0_15 = arith.constant 0 : index
    %c0_16 = arith.constant 0 : index
    %c0_17 = arith.constant 0 : index
    %c16_18 = arith.constant 16 : index
    %8 = vector.load %arg7[%c0_15, %c0_16, %c0_17, %c16_18] : memref<2x8x8x128xbf16, #tpu.memory_space<vmem>>, vector<2x8x1x4xbf16>
    tpu.vector_store %arg7[%c0_15, %c0_16, %c0_17, %c16_18], %7 {strides = array<i32>} : memref<2x8x8x128xbf16, #tpu.memory_space<vmem>>, vector<2x8x1x4xbf16>,
    %cst_19 = arith.constant 0.000000e+00 : bf16
    %9 = vector.broadcast %cst_19 : bf16 to vector<2x1x8x4xbf16>
    %c0_20 = arith.constant 0 : index
    %c0_21 = arith.constant 0 : index
    %c0_22 = arith.constant 0 : index
    %c20 = arith.constant 20 : index
    %10 = vector.load %arg7[%c0_20, %c0_21, %c0_22, %c20] : memref<2x8x8x128xbf16, #tpu.memory_space<vmem>>, vector<2x1x8x4xbf16>
    tpu.vector_store %arg7[%c0_20, %c0_21, %c0_22, %c20], %9 {strides = array<i32>} : memref<2x8x8x128xbf16, #tpu.memory_space<vmem>>, vector<2x1x8x4xbf16>,
    %cst_23 = arith.constant 0.000000e+00 : bf16
    %11 = vector.broadcast %cst_23 : bf16 to vector<2x1x8x4xbf16>
    %c0_24 = arith.constant 0 : index
    %c0_25 = arith.constant 0 : index
    %c0_26 = arith.constant 0 : index
    %c24 = arith.constant 24 : index
    %12 = vector.load %arg7[%c0_24, %c0_25, %c0_26, %c24] : memref<2x8x8x128xbf16, #tpu.memory_space<vmem>>, vector<2x1x8x4xbf16>
    tpu.vector_store %arg7[%c0_24, %c0_25, %c0_26, %c24], %11 {strides = array<i32>} : memref<2x8x8x128xbf16, #tpu.memory_space<vmem>>, vector<2x1x8x4xbf16>,
    %cst_27 = arith.constant 0.000000e+00 : bf16
    %13 = vector.broadcast %cst_27 : bf16 to vector<2x8x1x4xbf16>
    %c0_28 = arith.constant 0 : index
    %c0_29 = arith.constant 0 : index
    %c7 = arith.constant 7 : index
    %c24_30 = arith.constant 24 : index
    %14 = vector.load %arg7[%c0_28, %c0_29, %c7, %c24_30] : memref<2x8x8x128xbf16, #tpu.memory_space<vmem>>, vector<2x8x1x4xbf16>
    tpu.vector_store %arg7[%c0_28, %c0_29, %c7, %c24_30], %13 {strides = array<i32>} : memref<2x8x8x128xbf16, #tpu.memory_space<vmem>>, vector<2x8x1x4xbf16>,
    %cst_31 = arith.constant 0.000000e+00 : bf16
    %15 = vector.broadcast %cst_31 : bf16 to vector<2x8x1x4xbf16>
    %c0_32 = arith.constant 0 : index
    %c0_33 = arith.constant 0 : index
    %c0_34 = arith.constant 0 : index
    %c28 = arith.constant 28 : index
    %16 = vector.load %arg7[%c0_32, %c0_33, %c0_34, %c28] : memref<2x8x8x128xbf16, #tpu.memory_space<vmem>>, vector<2x8x1x4xbf16>
    tpu.vector_store %arg7[%c0_32, %c0_33, %c0_34, %c28], %15 {strides = array<i32>} : memref<2x8x8x128xbf16, #tpu.memory_space<vmem>>, vector<2x8x1x4xbf16>,
    %cst_35 = arith.constant 0.000000e+00 : bf16
    %17 = vector.broadcast %cst_35 : bf16 to vector<2x8x1x4xbf16>
    %c0_36 = arith.constant 0 : index
    %c0_37 = arith.constant 0 : index
    %c7_38 = arith.constant 7 : index
    %c32 = arith.constant 32 : index
    %18 = vector.load %arg7[%c0_36, %c0_37, %c7_38, %c32] : memref<2x8x8x128xbf16, #tpu.memory_space<vmem>>, vector<2x8x1x4xbf16>
    tpu.vector_store %arg7[%c0_36, %c0_37, %c7_38, %c32], %17 {strides = array<i32>} : memref<2x8x8x128xbf16, #tpu.memory_space<vmem>>, vector<2x8x1x4xbf16>,
    %cst_39 = arith.constant 0.000000e+00 : bf16
    %19 = vector.broadcast %cst_39 : bf16 to vector<2x1x8x4xbf16>
    %c0_40 = arith.constant 0 : index
    %c7_41 = arith.constant 7 : index
    %c0_42 = arith.constant 0 : index
    %c36 = arith.constant 36 : index
    %20 = vector.load %arg7[%c0_40, %c7_41, %c0_42, %c36] : memref<2x8x8x128xbf16, #tpu.memory_space<vmem>>, vector<2x1x8x4xbf16>
    tpu.vector_store %arg7[%c0_40, %c7_41, %c0_42, %c36], %19 {strides = array<i32>} : memref<2x8x8x128xbf16, #tpu.memory_space<vmem>>, vector<2x1x8x4xbf16>,
    %cst_43 = arith.constant 0.000000e+00 : bf16
    %21 = vector.broadcast %cst_43 : bf16 to vector<2x8x1x4xbf16>
    %c0_44 = arith.constant 0 : index
    %c0_45 = arith.constant 0 : index
    %c0_46 = arith.constant 0 : index
    %c36_47 = arith.constant 36 : index
    %22 = vector.load %arg7[%c0_44, %c0_45, %c0_46, %c36_47] : memref<2x8x8x128xbf16, #tpu.memory_space<vmem>>, vector<2x8x1x4xbf16>
    tpu.vector_store %arg7[%c0_44, %c0_45, %c0_46, %c36_47], %21 {strides = array<i32>} : memref<2x8x8x128xbf16, #tpu.memory_space<vmem>>, vector<2x8x1x4xbf16>,
    %cst_48 = arith.constant 0.000000e+00 : bf16
    %23 = vector.broadcast %cst_48 : bf16 to vector<2x1x8x4xbf16>
    %c0_49 = arith.constant 0 : index
    %c7_50 = arith.constant 7 : index
    %c0_51 = arith.constant 0 : index
    %c40 = arith.constant 40 : index
    %24 = vector.load %arg7[%c0_49, %c7_50, %c0_51, %c40] : memref<2x8x8x128xbf16, #tpu.memory_space<vmem>>, vector<2x1x8x4xbf16>
    tpu.vector_store %arg7[%c0_49, %c7_50, %c0_51, %c40], %23 {strides = array<i32>} : memref<2x8x8x128xbf16, #tpu.memory_space<vmem>>, vector<2x1x8x4xbf16>,
    %cst_52 = arith.constant 0.000000e+00 : bf16
    %25 = vector.broadcast %cst_52 : bf16 to vector<2x1x8x4xbf16>
    %c0_53 = arith.constant 0 : index
    %c7_54 = arith.constant 7 : index
    %c0_55 = arith.constant 0 : index
    %c44 = arith.constant 44 : index
    %26 = vector.load %arg7[%c0_53, %c7_54, %c0_55, %c44] : memref<2x8x8x128xbf16, #tpu.memory_space<vmem>>, vector<2x1x8x4xbf16>
    tpu.vector_store %arg7[%c0_53, %c7_54, %c0_55, %c44], %25 {strides = array<i32>} : memref<2x8x8x128xbf16, #tpu.memory_space<vmem>>, vector<2x1x8x4xbf16>,
    %cst_56 = arith.constant 0.000000e+00 : bf16
    %27 = vector.broadcast %cst_56 : bf16 to vector<2x8x1x4xbf16>
    %c0_57 = arith.constant 0 : index
    %c0_58 = arith.constant 0 : index
    %c7_59 = arith.constant 7 : index
    %c44_60 = arith.constant 44 : index
    %28 = vector.load %arg7[%c0_57, %c0_58, %c7_59, %c44_60] : memref<2x8x8x128xbf16, #tpu.memory_space<vmem>>, vector<2x8x1x4xbf16>
    tpu.vector_store %arg7[%c0_57, %c0_58, %c7_59, %c44_60], %27 {strides = array<i32>} : memref<2x8x8x128xbf16, #tpu.memory_space<vmem>>, vector<2x8x1x4xbf16>,
    %c0_61 = arith.constant 0 : index
    %c0_62 = arith.constant 0 : index
    %c0_63 = arith.constant 0 : index
    %c0_64 = arith.constant 0 : index
    %29 = vector.load %arg6[%c0_61, %c0_62, %c0_63, %c0_64] : memref<2x8x8x16xf32, #tpu.memory_space<vmem>>, vector<2x8x8x16xf32>
    %30 = arith.truncf %29 : vector<2x8x8x16xf32> to vector<2x8x8x16xbf16>
    %c0_65 = arith.constant 0 : index
    %c0_66 = arith.constant 0 : index
    %c0_67 = arith.constant 0 : index
    %c0_68 = arith.constant 0 : index
    %31 = vector.load %arg7[%c0_65, %c0_66, %c0_67, %c0_68] : memref<2x8x8x128xbf16, #tpu.memory_space<vmem>>, vector<2x8x8x16xbf16>
    tpu.vector_store %arg7[%c0_65, %c0_66, %c0_67, %c0_68], %30 {strides = array<i32>} : memref<2x8x8x128xbf16, #tpu.memory_space<vmem>>, vector<2x8x8x16xbf16>,
    %c0_69 = arith.constant 0 : index
    %c0_70 = arith.constant 0 : index
    %c0_71 = arith.constant 0 : index
    %c0_72 = arith.constant 0 : index
    %32 = vector.load %arg7[%c0_69, %c0_70, %c0_71, %c0_72] : memref<2x8x8x128xbf16, #tpu.memory_space<vmem>>, vector<2x7x7x4xbf16>
    %c0_73 = arith.constant 0 : index
    %c1 = arith.constant 1 : index
    %c1_74 = arith.constant 1 : index
    %c16_75 = arith.constant 16 : index
    %33 = vector.load %arg7[%c0_73, %c1, %c1_74, %c16_75] : memref<2x8x8x128xbf16, #tpu.memory_space<vmem>>, vector<2x7x7x4xbf16>
    tpu.vector_store %arg7[%c0_73, %c1, %c1_74, %c16_75], %32 {strides = array<i32>} : memref<2x8x8x128xbf16, #tpu.memory_space<vmem>>, vector<2x7x7x4xbf16>,
    %c0_76 = arith.constant 0 : index
    %c0_77 = arith.constant 0 : index
    %c0_78 = arith.constant 0 : index
    %c0_79 = arith.constant 0 : index
    %34 = vector.load %arg7[%c0_76, %c0_77, %c0_78, %c0_79] : memref<2x8x8x128xbf16, #tpu.memory_space<vmem>>, vector<2x7x8x4xbf16>
    %c0_80 = arith.constant 0 : index
    %c1_81 = arith.constant 1 : index
    %c0_82 = arith.constant 0 : index
    %c20_83 = arith.constant 20 : index
    %35 = vector.load %arg7[%c0_80, %c1_81, %c0_82, %c20_83] : memref<2x8x8x128xbf16, #tpu.memory_space<vmem>>, vector<2x7x8x4xbf16>
    tpu.vector_store %arg7[%c0_80, %c1_81, %c0_82, %c20_83], %34 {strides = array<i32>} : memref<2x8x8x128xbf16, #tpu.memory_space<vmem>>, vector<2x7x8x4xbf16>,
    %c0_84 = arith.constant 0 : index
    %c0_85 = arith.constant 0 : index
    %c1_86 = arith.constant 1 : index
    %c0_87 = arith.constant 0 : index
    %36 = vector.load %arg7[%c0_84, %c0_85, %c1_86, %c0_87] : memref<2x8x8x128xbf16, #tpu.memory_space<vmem>>, vector<2x7x7x4xbf16>
    %c0_88 = arith.constant 0 : index
    %c1_89 = arith.constant 1 : index
    %c0_90 = arith.constant 0 : index
    %c24_91 = arith.constant 24 : index
    %37 = vector.load %arg7[%c0_88, %c1_89, %c0_90, %c24_91] : memref<2x8x8x128xbf16, #tpu.memory_space<vmem>>, vector<2x7x7x4xbf16>
    tpu.vector_store %arg7[%c0_88, %c1_89, %c0_90, %c24_91], %36 {strides = array<i32>} : memref<2x8x8x128xbf16, #tpu.memory_space<vmem>>, vector<2x7x7x4xbf16>,
    %c0_92 = arith.constant 0 : index
    %c0_93 = arith.constant 0 : index
    %c0_94 = arith.constant 0 : index
    %c0_95 = arith.constant 0 : index
    %38 = vector.load %arg7[%c0_92, %c0_93, %c0_94, %c0_95] : memref<2x8x8x128xbf16, #tpu.memory_space<vmem>>, vector<2x8x7x4xbf16>
    %c0_96 = arith.constant 0 : index
    %c0_97 = arith.constant 0 : index
    %c1_98 = arith.constant 1 : index
    %c28_99 = arith.constant 28 : index
    %39 = vector.load %arg7[%c0_96, %c0_97, %c1_98, %c28_99] : memref<2x8x8x128xbf16, #tpu.memory_space<vmem>>, vector<2x8x7x4xbf16>
    tpu.vector_store %arg7[%c0_96, %c0_97, %c1_98, %c28_99], %38 {strides = array<i32>} : memref<2x8x8x128xbf16, #tpu.memory_space<vmem>>, vector<2x8x7x4xbf16>,
    %c0_100 = arith.constant 0 : index
    %c0_101 = arith.constant 0 : index
    %c1_102 = arith.constant 1 : index
    %c0_103 = arith.constant 0 : index
    %40 = vector.load %arg7[%c0_100, %c0_101, %c1_102, %c0_103] : memref<2x8x8x128xbf16, #tpu.memory_space<vmem>>, vector<2x8x7x4xbf16>
    %c0_104 = arith.constant 0 : index
    %c0_105 = arith.constant 0 : index
    %c0_106 = arith.constant 0 : index
    %c32_107 = arith.constant 32 : index
    %41 = vector.load %arg7[%c0_104, %c0_105, %c0_106, %c32_107] : memref<2x8x8x128xbf16, #tpu.memory_space<vmem>>, vector<2x8x7x4xbf16>
    tpu.vector_store %arg7[%c0_104, %c0_105, %c0_106, %c32_107], %40 {strides = array<i32>} : memref<2x8x8x128xbf16, #tpu.memory_space<vmem>>, vector<2x8x7x4xbf16>,
    %c0_108 = arith.constant 0 : index
    %c1_109 = arith.constant 1 : index
    %c0_110 = arith.constant 0 : index
    %c0_111 = arith.constant 0 : index
    %42 = vector.load %arg7[%c0_108, %c1_109, %c0_110, %c0_111] : memref<2x8x8x128xbf16, #tpu.memory_space<vmem>>, vector<2x7x7x4xbf16>
    %c0_112 = arith.constant 0 : index
    %c0_113 = arith.constant 0 : index
    %c1_114 = arith.constant 1 : index
    %c36_115 = arith.constant 36 : index
    %43 = vector.load %arg7[%c0_112, %c0_113, %c1_114, %c36_115] : memref<2x8x8x128xbf16, #tpu.memory_space<vmem>>, vector<2x7x7x4xbf16>
    tpu.vector_store %arg7[%c0_112, %c0_113, %c1_114, %c36_115], %42 {strides = array<i32>} : memref<2x8x8x128xbf16, #tpu.memory_space<vmem>>, vector<2x7x7x4xbf16>,
    %c0_116 = arith.constant 0 : index
    %c1_117 = arith.constant 1 : index
    %c0_118 = arith.constant 0 : index
    %c0_119 = arith.constant 0 : index
    %44 = vector.load %arg7[%c0_116, %c1_117, %c0_118, %c0_119] : memref<2x8x8x128xbf16, #tpu.memory_space<vmem>>, vector<2x7x8x4xbf16>
    %c0_120 = arith.constant 0 : index
    %c0_121 = arith.constant 0 : index
    %c0_122 = arith.constant 0 : index
    %c40_123 = arith.constant 40 : index
    %45 = vector.load %arg7[%c0_120, %c0_121, %c0_122, %c40_123] : memref<2x8x8x128xbf16, #tpu.memory_space<vmem>>, vector<2x7x8x4xbf16>
    tpu.vector_store %arg7[%c0_120, %c0_121, %c0_122, %c40_123], %44 {strides = array<i32>} : memref<2x8x8x128xbf16, #tpu.memory_space<vmem>>, vector<2x7x8x4xbf16>,
    %c0_124 = arith.constant 0 : index
    %c1_125 = arith.constant 1 : index
    %c1_126 = arith.constant 1 : index
    %c0_127 = arith.constant 0 : index
    %46 = vector.load %arg7[%c0_124, %c1_125, %c1_126, %c0_127] : memref<2x8x8x128xbf16, #tpu.memory_space<vmem>>, vector<2x7x7x4xbf16>
    %c0_128 = arith.constant 0 : index
    %c0_129 = arith.constant 0 : index
    %c0_130 = arith.constant 0 : index
    %c44_131 = arith.constant 44 : index
    %47 = vector.load %arg7[%c0_128, %c0_129, %c0_130, %c44_131] : memref<2x8x8x128xbf16, #tpu.memory_space<vmem>>, vector<2x7x7x4xbf16>
    tpu.vector_store %arg7[%c0_128, %c0_129, %c0_130, %c44_131], %46 {strides = array<i32>} : memref<2x8x8x128xbf16, #tpu.memory_space<vmem>>, vector<2x7x7x4xbf16>,
    %c0_132 = arith.constant 0 : index
    %c0_133 = arith.constant 0 : index
    %c0_134 = arith.constant 0 : index
    %c0_135 = arith.constant 0 : index
    %48 = vector.load %arg7[%c0_132, %c0_133, %c0_134, %c0_135] : memref<2x8x8x128xbf16, #tpu.memory_space<vmem>>, vector<2x8x8x128xbf16>
    %49 = vector.shape_cast %48 : vector<2x8x8x128xbf16> to vector<128x128xbf16>
    %c0_136 = arith.constant 0 : index
    %c0_137 = arith.constant 0 : index
    %c0_138 = arith.constant 0 : index
    %50 = vector.load %arg2[%c0_136, %c0_137, %c0_138] : memref<2x128x32xbf16, #tpu.memory_space<vmem>>, vector<1x128x32xbf16>
    %51 = vector.shape_cast %50 : vector<1x128x32xbf16> to vector<128x32xbf16>
    %cst_139 = arith.constant dense<0.000000e+00> : vector<128x32xf32>
    %52 = tpu.matmul %49, %51, %cst_139 {dimension_numbers = #tpu.dot_dimension_numbers<[1], [0], [0], [1], [0, 0, 1, 1], [], []>} : vector<128x128xbf16>, vector<128x32xbf16>, vector<128x32xf32> -> vector<128x32xf32>
    %c0_140 = arith.constant 0 : index
    %c0_141 = arith.constant 0 : index
    %c0_142 = arith.constant 0 : index
    %53 = vector.load %arg3[%c0_140, %c0_141, %c0_142] : memref<2x1x32xf32, #tpu.memory_space<vmem>>, vector<1x1x32xf32>
    %54 = vector.shape_cast %53 : vector<1x1x32xf32> to vector<1x32xf32>
    %55 = vector.broadcast %54 : vector<1x32xf32> to vector<128x32xf32>
    %56 = arith.addf %52, %55 : vector<128x32xf32>
    %cst_143 = arith.constant 0.000000e+00 : f32
    %57 = vector.broadcast %cst_143 : f32 to vector<128x32xf32>
    %58 = arith.maximumf %56, %57 : vector<128x32xf32>
    %59 = arith.truncf %58 : vector<128x32xf32> to vector<128x32xbf16>
    %c0_144 = arith.constant 0 : index
    %c0_145 = arith.constant 0 : index
    %c0_146 = arith.constant 0 : index
    %60 = vector.load %arg4[%c0_144, %c0_145, %c0_146] : memref<2x32x16xbf16, #tpu.memory_space<vmem>>, vector<1x32x16xbf16>
    %61 = vector.shape_cast %60 : vector<1x32x16xbf16> to vector<32x16xbf16>
    %cst_147 = arith.constant dense<0.000000e+00> : vector<128x16xf32>
    %62 = tpu.matmul %59, %61, %cst_147 {dimension_numbers = #tpu.dot_dimension_numbers<[1], [0], [0], [1], [0, 0, 1, 1], [], []>} : vector<128x32xbf16>, vector<32x16xbf16>, vector<128x16xf32> -> vector<128x16xf32>
    %c0_148 = arith.constant 0 : index
    %c0_149 = arith.constant 0 : index
    %c0_150 = arith.constant 0 : index
    %c0_151 = arith.constant 0 : index
    %63 = vector.load %arg6[%c0_148, %c0_149, %c0_150, %c0_151] : memref<2x8x8x16xf32, #tpu.memory_space<vmem>>, vector<2x8x8x16xf32>
    %64 = vector.shape_cast %62 : vector<128x16xf32> to vector<2x8x8x16xf32>
    %65 = arith.addf %63, %64 : vector<2x8x8x16xf32>
    %c0_152 = arith.constant 0 : index
    %c0_153 = arith.constant 0 : index
    %c0_154 = arith.constant 0 : index
    %c0_155 = arith.constant 0 : index
    %66 = vector.load %arg6[%c0_152, %c0_153, %c0_154, %c0_155] : memref<2x8x8x16xf32, #tpu.memory_space<vmem>>, vector<2x8x8x16xf32>
    tpu.vector_store %arg6[%c0_152, %c0_153, %c0_154, %c0_155], %65 {strides = array<i32>} : memref<2x8x8x16xf32, #tpu.memory_space<vmem>>, vector<2x8x8x16xf32>,
    %c0_156 = arith.constant 0 : index
    %c0_157 = arith.constant 0 : index
    %c0_158 = arith.constant 0 : index
    %c0_159 = arith.constant 0 : index
    %67 = vector.load %arg6[%c0_156, %c0_157, %c0_158, %c0_159] : memref<2x8x8x16xf32, #tpu.memory_space<vmem>>, vector<2x8x8x16xf32>
    %68 = arith.truncf %67 : vector<2x8x8x16xf32> to vector<2x8x8x16xbf16>
    %c0_160 = arith.constant 0 : index
    %c0_161 = arith.constant 0 : index
    %c0_162 = arith.constant 0 : index
    %c0_163 = arith.constant 0 : index
    %69 = vector.load %arg7[%c0_160, %c0_161, %c0_162, %c0_163] : memref<2x8x8x128xbf16, #tpu.memory_space<vmem>>, vector<2x8x8x16xbf16>
    tpu.vector_store %arg7[%c0_160, %c0_161, %c0_162, %c0_163], %68 {strides = array<i32>} : memref<2x8x8x128xbf16, #tpu.memory_space<vmem>>, vector<2x8x8x16xbf16>,
    %c0_164 = arith.constant 0 : index
    %c0_165 = arith.constant 0 : index
    %c0_166 = arith.constant 0 : index
    %c0_167 = arith.constant 0 : index
    %70 = vector.load %arg7[%c0_164, %c0_165, %c0_166, %c0_167] : memref<2x8x8x128xbf16, #tpu.memory_space<vmem>>, vector<2x7x7x4xbf16>
    %c0_168 = arith.constant 0 : index
    %c1_169 = arith.constant 1 : index
    %c1_170 = arith.constant 1 : index
    %c16_171 = arith.constant 16 : index
    %71 = vector.load %arg7[%c0_168, %c1_169, %c1_170, %c16_171] : memref<2x8x8x128xbf16, #tpu.memory_space<vmem>>, vector<2x7x7x4xbf16>
    tpu.vector_store %arg7[%c0_168, %c1_169, %c1_170, %c16_171], %70 {strides = array<i32>} : memref<2x8x8x128xbf16, #tpu.memory_space<vmem>>, vector<2x7x7x4xbf16>,
    %c0_172 = arith.constant 0 : index
    %c0_173 = arith.constant 0 : index
    %c0_174 = arith.constant 0 : index
    %c0_175 = arith.constant 0 : index
    %72 = vector.load %arg7[%c0_172, %c0_173, %c0_174, %c0_175] : memref<2x8x8x128xbf16, #tpu.memory_space<vmem>>, vector<2x7x8x4xbf16>
    %c0_176 = arith.constant 0 : index
    %c1_177 = arith.constant 1 : index
    %c0_178 = arith.constant 0 : index
    %c20_179 = arith.constant 20 : index
    %73 = vector.load %arg7[%c0_176, %c1_177, %c0_178, %c20_179] : memref<2x8x8x128xbf16, #tpu.memory_space<vmem>>, vector<2x7x8x4xbf16>
    tpu.vector_store %arg7[%c0_176, %c1_177, %c0_178, %c20_179], %72 {strides = array<i32>} : memref<2x8x8x128xbf16, #tpu.memory_space<vmem>>, vector<2x7x8x4xbf16>,
    %c0_180 = arith.constant 0 : index
    %c0_181 = arith.constant 0 : index
    %c1_182 = arith.constant 1 : index
    %c0_183 = arith.constant 0 : index
    %74 = vector.load %arg7[%c0_180, %c0_181, %c1_182, %c0_183] : memref<2x8x8x128xbf16, #tpu.memory_space<vmem>>, vector<2x7x7x4xbf16>
    %c0_184 = arith.constant 0 : index
    %c1_185 = arith.constant 1 : index
    %c0_186 = arith.constant 0 : index
    %c24_187 = arith.constant 24 : index
    %75 = vector.load %arg7[%c0_184, %c1_185, %c0_186, %c24_187] : memref<2x8x8x128xbf16, #tpu.memory_space<vmem>>, vector<2x7x7x4xbf16>
    tpu.vector_store %arg7[%c0_184, %c1_185, %c0_186, %c24_187], %74 {strides = array<i32>} : memref<2x8x8x128xbf16, #tpu.memory_space<vmem>>, vector<2x7x7x4xbf16>,
    %c0_188 = arith.constant 0 : index
    %c0_189 = arith.constant 0 : index
    %c0_190 = arith.constant 0 : index
    %c0_191 = arith.constant 0 : index
    %76 = vector.load %arg7[%c0_188, %c0_189, %c0_190, %c0_191] : memref<2x8x8x128xbf16, #tpu.memory_space<vmem>>, vector<2x8x7x4xbf16>
    %c0_192 = arith.constant 0 : index
    %c0_193 = arith.constant 0 : index
    %c1_194 = arith.constant 1 : index
    %c28_195 = arith.constant 28 : index
    %77 = vector.load %arg7[%c0_192, %c0_193, %c1_194, %c28_195] : memref<2x8x8x128xbf16, #tpu.memory_space<vmem>>, vector<2x8x7x4xbf16>
    tpu.vector_store %arg7[%c0_192, %c0_193, %c1_194, %c28_195], %76 {strides = array<i32>} : memref<2x8x8x128xbf16, #tpu.memory_space<vmem>>, vector<2x8x7x4xbf16>,
    %c0_196 = arith.constant 0 : index
    %c0_197 = arith.constant 0 : index
    %c1_198 = arith.constant 1 : index
    %c0_199 = arith.constant 0 : index
    %78 = vector.load %arg7[%c0_196, %c0_197, %c1_198, %c0_199] : memref<2x8x8x128xbf16, #tpu.memory_space<vmem>>, vector<2x8x7x4xbf16>
    %c0_200 = arith.constant 0 : index
    %c0_201 = arith.constant 0 : index
    %c0_202 = arith.constant 0 : index
    %c32_203 = arith.constant 32 : index
    %79 = vector.load %arg7[%c0_200, %c0_201, %c0_202, %c32_203] : memref<2x8x8x128xbf16, #tpu.memory_space<vmem>>, vector<2x8x7x4xbf16>
    tpu.vector_store %arg7[%c0_200, %c0_201, %c0_202, %c32_203], %78 {strides = array<i32>} : memref<2x8x8x128xbf16, #tpu.memory_space<vmem>>, vector<2x8x7x4xbf16>,
    %c0_204 = arith.constant 0 : index
    %c1_205 = arith.constant 1 : index
    %c0_206 = arith.constant 0 : index
    %c0_207 = arith.constant 0 : index
    %80 = vector.load %arg7[%c0_204, %c1_205, %c0_206, %c0_207] : memref<2x8x8x128xbf16, #tpu.memory_space<vmem>>, vector<2x7x7x4xbf16>
    %c0_208 = arith.constant 0 : index
    %c0_209 = arith.constant 0 : index
    %c1_210 = arith.constant 1 : index
    %c36_211 = arith.constant 36 : index
    %81 = vector.load %arg7[%c0_208, %c0_209, %c1_210, %c36_211] : memref<2x8x8x128xbf16, #tpu.memory_space<vmem>>, vector<2x7x7x4xbf16>
    tpu.vector_store %arg7[%c0_208, %c0_209, %c1_210, %c36_211], %80 {strides = array<i32>} : memref<2x8x8x128xbf16, #tpu.memory_space<vmem>>, vector<2x7x7x4xbf16>,
    %c0_212 = arith.constant 0 : index
    %c1_213 = arith.constant 1 : index
    %c0_214 = arith.constant 0 : index
    %c0_215 = arith.constant 0 : index
    %82 = vector.load %arg7[%c0_212, %c1_213, %c0_214, %c0_215] : memref<2x8x8x128xbf16, #tpu.memory_space<vmem>>, vector<2x7x8x4xbf16>
    %c0_216 = arith.constant 0 : index
    %c0_217 = arith.constant 0 : index
    %c0_218 = arith.constant 0 : index
    %c40_219 = arith.constant 40 : index
    %83 = vector.load %arg7[%c0_216, %c0_217, %c0_218, %c40_219] : memref<2x8x8x128xbf16, #tpu.memory_space<vmem>>, vector<2x7x8x4xbf16>
    tpu.vector_store %arg7[%c0_216, %c0_217, %c0_218, %c40_219], %82 {strides = array<i32>} : memref<2x8x8x128xbf16, #tpu.memory_space<vmem>>, vector<2x7x8x4xbf16>,
    %c0_220 = arith.constant 0 : index
    %c1_221 = arith.constant 1 : index
    %c1_222 = arith.constant 1 : index
    %c0_223 = arith.constant 0 : index
    %84 = vector.load %arg7[%c0_220, %c1_221, %c1_222, %c0_223] : memref<2x8x8x128xbf16, #tpu.memory_space<vmem>>, vector<2x7x7x4xbf16>
    %c0_224 = arith.constant 0 : index
    %c0_225 = arith.constant 0 : index
    %c0_226 = arith.constant 0 : index
    %c44_227 = arith.constant 44 : index
    %85 = vector.load %arg7[%c0_224, %c0_225, %c0_226, %c44_227] : memref<2x8x8x128xbf16, #tpu.memory_space<vmem>>, vector<2x7x7x4xbf16>
    tpu.vector_store %arg7[%c0_224, %c0_225, %c0_226, %c44_227], %84 {strides = array<i32>} : memref<2x8x8x128xbf16, #tpu.memory_space<vmem>>, vector<2x7x7x4xbf16>,
    %c0_228 = arith.constant 0 : index
    %c0_229 = arith.constant 0 : index
    %c0_230 = arith.constant 0 : index
    %c0_231 = arith.constant 0 : index
    %86 = vector.load %arg7[%c0_228, %c0_229, %c0_230, %c0_231] : memref<2x8x8x128xbf16, #tpu.memory_space<vmem>>, vector<2x8x8x128xbf16>
    %87 = vector.shape_cast %86 : vector<2x8x8x128xbf16> to vector<128x128xbf16>
    %c1_232 = arith.constant 1 : index
    %c0_233 = arith.constant 0 : index
    %c0_234 = arith.constant 0 : index
    %88 = vector.load %arg2[%c1_232, %c0_233, %c0_234] : memref<2x128x32xbf16, #tpu.memory_space<vmem>>, vector<1x128x32xbf16>
    %89 = vector.shape_cast %88 : vector<1x128x32xbf16> to vector<128x32xbf16>
    %cst_235 = arith.constant dense<0.000000e+00> : vector<128x32xf32>
    %90 = tpu.matmul %87, %89, %cst_235 {dimension_numbers = #tpu.dot_dimension_numbers<[1], [0], [0], [1], [0, 0, 1, 1], [], []>} : vector<128x128xbf16>, vector<128x32xbf16>, vector<128x32xf32> -> vector<128x32xf32>
    %c1_236 = arith.constant 1 : index
    %c0_237 = arith.constant 0 : index
    %c0_238 = arith.constant 0 : index
    %91 = vector.load %arg3[%c1_236, %c0_237, %c0_238] : memref<2x1x32xf32, #tpu.memory_space<vmem>>, vector<1x1x32xf32>
    %92 = vector.shape_cast %91 : vector<1x1x32xf32> to vector<1x32xf32>
    %93 = vector.broadcast %92 : vector<1x32xf32> to vector<128x32xf32>
    %94 = arith.addf %90, %93 : vector<128x32xf32>
    %cst_239 = arith.constant 0.000000e+00 : f32
    %95 = vector.broadcast %cst_239 : f32 to vector<128x32xf32>
    %96 = arith.maximumf %94, %95 : vector<128x32xf32>
    %97 = arith.truncf %96 : vector<128x32xf32> to vector<128x32xbf16>
    %c1_240 = arith.constant 1 : index
    %c0_241 = arith.constant 0 : index
    %c0_242 = arith.constant 0 : index
    %98 = vector.load %arg4[%c1_240, %c0_241, %c0_242] : memref<2x32x16xbf16, #tpu.memory_space<vmem>>, vector<1x32x16xbf16>
    %99 = vector.shape_cast %98 : vector<1x32x16xbf16> to vector<32x16xbf16>
    %cst_243 = arith.constant dense<0.000000e+00> : vector<128x16xf32>
    %100 = tpu.matmul %97, %99, %cst_243 {dimension_numbers = #tpu.dot_dimension_numbers<[1], [0], [0], [1], [0, 0, 1, 1], [], []>} : vector<128x32xbf16>, vector<32x16xbf16>, vector<128x16xf32> -> vector<128x16xf32>
    %c0_244 = arith.constant 0 : index
    %c0_245 = arith.constant 0 : index
    %c0_246 = arith.constant 0 : index
    %c0_247 = arith.constant 0 : index
    %101 = vector.load %arg6[%c0_244, %c0_245, %c0_246, %c0_247] : memref<2x8x8x16xf32, #tpu.memory_space<vmem>>, vector<2x8x8x16xf32>
    %102 = vector.shape_cast %100 : vector<128x16xf32> to vector<2x8x8x16xf32>
    %103 = arith.addf %101, %102 : vector<2x8x8x16xf32>
    %c0_248 = arith.constant 0 : index
    %c0_249 = arith.constant 0 : index
    %c0_250 = arith.constant 0 : index
    %c0_251 = arith.constant 0 : index
    %104 = vector.load %arg6[%c0_248, %c0_249, %c0_250, %c0_251] : memref<2x8x8x16xf32, #tpu.memory_space<vmem>>, vector<2x8x8x16xf32>
    tpu.vector_store %arg6[%c0_248, %c0_249, %c0_250, %c0_251], %103 {strides = array<i32>} : memref<2x8x8x16xf32, #tpu.memory_space<vmem>>, vector<2x8x8x16xf32>,
    %c0_252 = arith.constant 0 : index
    %c0_253 = arith.constant 0 : index
    %c0_254 = arith.constant 0 : index
    %c0_255 = arith.constant 0 : index
    %105 = vector.load %arg6[%c0_252, %c0_253, %c0_254, %c0_255] : memref<2x8x8x16xf32, #tpu.memory_space<vmem>>, vector<2x8x8x16xf32>
    %c0_256 = arith.constant 0 : index
    %c0_257 = arith.constant 0 : index
    %c0_258 = arith.constant 0 : index
    %c0_259 = arith.constant 0 : index
    %106 = vector.load %arg5[%c0_256, %c0_257, %c0_258, %c0_259] : memref<2x8x8x16xf32, #tpu.memory_space<vmem>>, vector<2x8x8x16xf32>
    tpu.vector_store %arg5[%c0_256, %c0_257, %c0_258, %c0_259], %105 {strides = array<i32>} : memref<2x8x8x16xf32, #tpu.memory_space<vmem>>, vector<2x8x8x16xf32>,
    return
  }
  func.func @transform_0(%arg0: i32) -> (i32, i32, i32, i32) {
    %c0_i32 = arith.constant 0 : i32
    %c0_i32_0 = arith.constant 0 : i32
    %c0_i32_1 = arith.constant 0 : i32
    %c0_i32_2 = arith.constant 0 : i32
    return %arg0, %c0_i32, %c0_i32_0, %c0_i32_1 : i32, i32, i32, i32
  }
  func.func @transform_1(%arg0: i32) -> (i32, i32, i32) {
    %c0_i32 = arith.constant 0 : i32
    %c0_i32_0 = arith.constant 0 : i32
    %c0_i32_1 = arith.constant 0 : i32
    %c0_i32_2 = arith.constant 0 : i32
    return %c0_i32, %c0_i32_0, %c0_i32_1 : i32, i32, i32
  }
  func.func @transform_2(%arg0: i32) -> (i32, i32, i32) {
    %c0_i32 = arith.constant 0 : i32
    %c0_i32_0 = arith.constant 0 : i32
    %c0_i32_1 = arith.constant 0 : i32
    %c0_i32_2 = arith.constant 0 : i32
    return %c0_i32, %c0_i32_0, %c0_i32_1 : i32, i32, i32
  }
  func.func @transform_3(%arg0: i32) -> (i32, i32, i32) {
    %c0_i32 = arith.constant 0 : i32
    %c0_i32_0 = arith.constant 0 : i32
    %c0_i32_1 = arith.constant 0 : i32
    %c0_i32_2 = arith.constant 0 : i32
    return %c0_i32, %c0_i32_0, %c0_i32_1 : i32, i32, i32
  }
  func.func @transform_4(%arg0: i32) -> (i32, i32, i32, i32) {
    %c0_i32 = arith.constant 0 : i32
    %c0_i32_0 = arith.constant 0 : i32
    %c0_i32_1 = arith.constant 0 : i32
    %c0_i32_2 = arith.constant 0 : i32
    return %arg0, %c0_i32, %c0_i32_0, %c0_i32_1 : i32, i32, i32, i32
  }
}

</mosaic_0001>

<llo_original>
// kernel: tpu_custom_call.1
$region0: #{tpu_custom_call.1}
  #allocation0 [shape = 'u32[]', space=smem, size = 0x4, offset = 0x4, fixed_abs, tag = 'smem constant byte address 0x4 - core index']
  #allocation1 [shape = 'u32[144,128]{1,0:T(1,128)}', space=vmem, size = 0x12000, scoped, tag = 'internal scratch']
  #allocation2 [shape = 'f32[2,8,8,16]{3,2,1,0:T(8,128)}', space=vmem, size = 0x10000, scoped, tag = 'scratch operand']
  #allocation3 [shape = 'bf16[2,8,8,128]{3,2,1,0:T(8,128)(2,1)}', space=vmem, size = 0x8000, scoped, tag = 'scratch operand']
  %s0 = inlined_call_operand.vmem [shape: bf16[2,8,8,16], index: 0, kind: input, shape index: {}]
  %s1 = inlined_call_operand.vmem [shape: bf16[2,128,32], index: 1, kind: input, shape index: {}]
  %s2 = inlined_call_operand.vmem [shape: f32[2,1,32], index: 2, kind: input, shape index: {}]
  %s3 = inlined_call_operand.vmem [shape: bf16[2,32,16], index: 3, kind: input, shape index: {}]
  %s4 = inlined_call_operand.hbm [shape: f32[2,8,8,16], index: 4, kind: output, shape index: {}]
  %s5 = sld [smem:[#allocation0]]
  $region26: #{tpu_custom_call.1} parent=0
    _
  %s7 = ssub.s32 1, %s5
  %s8 = scalar_select 0, %s7, %s5
  $region1: #{tpu_custom_call.1} parent=0
    #allocation4 [shape = 'u8[65536]{0}', space=vmem, size = 0x10000, scoped, tag = 'output window, operand 0, single buffered']
    #allocation5 [shape = 's32[1]{0}', space=sflag, size = 0x4, scoped, tag = 'scoped memory for tpu_custom_call.1']
    %9 = vsyncpa [#allocation5], 0
    // Predicated region
    $region2: #{tpu_custom_call.1} parent=1 // pred_check
      _
    $region3: #{tpu_custom_call.1} parent=1 // pred_check_branch
      %11 = sbr.rel (0) target = $region5
    $region4: #{tpu_custom_call.1} parent=1 // pred_region
      _
    $region5: #{tpu_custom_call.1} parent=1 // pred_fallthru
      _
    // Predicated region
    $region6: #{tpu_custom_call.1} parent=1 // pred_check
      _
    $region7: #{tpu_custom_call.1} parent=1 // pred_check_branch
      %13 = sbr.rel (0) target = $region9
    $region8: #{tpu_custom_call.1} parent=1 // pred_region
      _
    $region9: #{tpu_custom_call.1} parent=1 // pred_fallthru
      _
    // Predicated region
    $region10: #{tpu_custom_call.1} parent=1 // pred_check
      _
    $region11: #{tpu_custom_call.1} parent=1 // pred_check_branch
      %15 = sbr.rel (0) target = $region13
    $region12: #{tpu_custom_call.1} parent=1 // pred_region
      _
    $region13: #{tpu_custom_call.1} parent=1 // pred_fallthru
      _
    // Predicated region
    $region14: #{tpu_custom_call.1} parent=1 // pred_check
      _
    $region15: #{tpu_custom_call.1} parent=1 // pred_check_branch
      %17 = sbr.rel (0) target = $region17
    $region16: #{tpu_custom_call.1} parent=1 // pred_region
      _
    $region17: #{tpu_custom_call.1} parent=1 // pred_fallthru
      _
    %v19 = vld [vmem:[%s0] sm:$0xf]
    %v20 = vld [vmem:[%s0 + $0x4] sm:$0xf]
    %v21 = vld [vmem:[%s0 + $0x8] sm:$0xf]
    %v22 = vld [vmem:[%s0 + $0xc] sm:$0xf]
    %v23 = vld [vmem:[%s0 + $0x10] sm:$0xf]
    %v24 = vld [vmem:[%s0 + $0x14] sm:$0xf]
    %v25 = vld [vmem:[%s0 + $0x18] sm:$0xf]
    %v26 = vld [vmem:[%s0 + $0x1c] sm:$0xf]
    %v27 = vld [vmem:[%s0 + $0x20] sm:$0xf]
    %v28 = vld [vmem:[%s0 + $0x24] sm:$0xf]
    %v29 = vld [vmem:[%s0 + $0x28] sm:$0xf]
    %v30 = vld [vmem:[%s0 + $0x2c] sm:$0xf]
    %v31 = vld [vmem:[%s0 + $0x30] sm:$0xf]
    %v32 = vld [vmem:[%s0 + $0x34] sm:$0xf]
    %v33 = vld [vmem:[%s0 + $0x38] sm:$0xf]
    %v34 = vld [vmem:[%s0 + $0x3c] sm:$0xf]
    %v35 = vunpack.c.l.bf16 %v19
    %v36 = vunpack.c.l.bf16 %v20
    %v37 = vunpack.c.l.bf16 %v21
    %v38 = vunpack.c.l.bf16 %v22
    %v39 = vunpack.c.l.bf16 %v23
    %v40 = vunpack.c.l.bf16 %v24
    %v41 = vunpack.c.l.bf16 %v25
    %v42 = vunpack.c.l.bf16 %v26
    %v43 = vunpack.c.l.bf16 %v27
    %v44 = vunpack.c.l.bf16 %v28
    %v45 = vunpack.c.l.bf16 %v29
    %v46 = vunpack.c.l.bf16 %v30
    %v47 = vunpack.c.l.bf16 %v31
    %v48 = vunpack.c.l.bf16 %v32
    %v49 = vunpack.c.l.bf16 %v33
    %v50 = vunpack.c.l.bf16 %v34
    %vm51 = vcmask 130048
    %52 = vst.msk [vmem:[#allocation2] sm:$0xff] %vm51, %v35
    %53 = vst.msk [vmem:[#allocation2 + $0x8] sm:$0xff] %vm51, %v36
    %54 = vst.msk [vmem:[#allocation2 + $0x10] sm:$0xff] %vm51, %v37
    %55 = vst.msk [vmem:[#allocation2 + $0x18] sm:$0xff] %vm51, %v38
    %56 = vst.msk [vmem:[#allocation2 + $0x20] sm:$0xff] %vm51, %v39
    %57 = vst.msk [vmem:[#allocation2 + $0x28] sm:$0xff] %vm51, %v40
    %58 = vst.msk [vmem:[#allocation2 + $0x30] sm:$0xff] %vm51, %v41
    %59 = vst.msk [vmem:[#allocation2 + $0x38] sm:$0xff] %vm51, %v42
    %60 = vst.msk [vmem:[#allocation2 + $0x40] sm:$0xff] %vm51, %v43
    %61 = vst.msk [vmem:[#allocation2 + $0x48] sm:$0xff] %vm51, %v44
    %62 = vst.msk [vmem:[#allocation2 + $0x50] sm:$0xff] %vm51, %v45
    %63 = vst.msk [vmem:[#allocation2 + $0x58] sm:$0xff] %vm51, %v46
    %64 = vst.msk [vmem:[#allocation2 + $0x60] sm:$0xff] %vm51, %v47
    %65 = vst.msk [vmem:[#allocation2 + $0x68] sm:$0xff] %vm51, %v48
    %66 = vst.msk [vmem:[#allocation2 + $0x70] sm:$0xff] %vm51, %v49
    %67 = vst.msk [vmem:[#allocation2 + $0x78] sm:$0xff] %vm51, %v50
    %vm68 = vcmask 1043840
    %69 = vst.msk [vmem:[#allocation3] sm:$0xf] %vm68, 0
    %70 = vst.msk [vmem:[#allocation3 + $0x4] sm:$0xf] %vm68, 0
    %71 = vst.msk [vmem:[#allocation3 + $0x8] sm:$0xf] %vm68, 0
    %72 = vst.msk [vmem:[#allocation3 + $0xc] sm:$0xf] %vm68, 0
    %73 = vst.msk [vmem:[#allocation3 + $0x10] sm:$0xf] %vm68, 0
    %74 = vst.msk [vmem:[#allocation3 + $0x14] sm:$0xf] %vm68, 0
    %75 = vst.msk [vmem:[#allocation3 + $0x18] sm:$0xf] %vm68, 0
    %76 = vst.msk [vmem:[#allocation3 + $0x1c] sm:$0xf] %vm68, 0
    %77 = vst.msk [vmem:[#allocation3 + $0x20] sm:$0xf] %vm68, 0
    %78 = vst.msk [vmem:[#allocation3 + $0x24] sm:$0xf] %vm68, 0
    %79 = vst.msk [vmem:[#allocation3 + $0x28] sm:$0xf] %vm68, 0
    %80 = vst.msk [vmem:[#allocation3 + $0x2c] sm:$0xf] %vm68, 0
    %81 = vst.msk [vmem:[#allocation3 + $0x30] sm:$0xf] %vm68, 0
    %82 = vst.msk [vmem:[#allocation3 + $0x34] sm:$0xf] %vm68, 0
    %83 = vst.msk [vmem:[#allocation3 + $0x38] sm:$0xf] %vm68, 0
    %84 = vst.msk [vmem:[#allocation3 + $0x3c] sm:$0xf] %vm68, 0
    %vm85 = vcmask 158848
    %86 = vst.msk [vmem:[#allocation3] sm:$0xf] %vm85, 0
    %87 = vst.msk [vmem:[#allocation3 + $0x20] sm:$0xf] %vm85, 0
    %vm88 = vcmask 155776
    %vm89 = vsmask.f32 256
    %vm90 = vmand %vm88, %vm89
    %v91 = vld [vmem:[#allocation3] sm:$0x1]
    %v92 = vsel %vm90, 0, %v91
    %93 = vst [vmem:[#allocation3] sm:$0x1] %v92
    %v94 = vld [vmem:[#allocation3 + $0x4] sm:$0x1]
    %v95 = vsel %vm90, 0, %v94
    %96 = vst [vmem:[#allocation3 + $0x4] sm:$0x1] %v95
    %v97 = vld [vmem:[#allocation3 + $0x8] sm:$0x1]
    %v98 = vsel %vm90, 0, %v97
    %99 = vst [vmem:[#allocation3 + $0x8] sm:$0x1] %v98
    %v100 = vld [vmem:[#allocation3 + $0xc] sm:$0x1]
    %v101 = vsel %vm90, 0, %v100
    %102 = vst [vmem:[#allocation3 + $0xc] sm:$0x1] %v101
    %v103 = vld [vmem:[#allocation3 + $0x10] sm:$0x1]
    %v104 = vsel %vm90, 0, %v103
    %105 = vst [vmem:[#allocation3 + $0x10] sm:$0x1] %v104
    %v106 = vld [vmem:[#allocation3 + $0x14] sm:$0x1]
    %v107 = vsel %vm90, 0, %v106
    %108 = vst [vmem:[#allocation3 + $0x14] sm:$0x1] %v107
    %v109 = vld [vmem:[#allocation3 + $0x18] sm:$0x1]
    %v110 = vsel %vm90, 0, %v109
    %111 = vst [vmem:[#allocation3 + $0x18] sm:$0x1] %v110
    %v112 = vld [vmem:[#allocation3 + $0x1c] sm:$0x1]
    %v113 = vsel %vm90, 0, %v112
    %114 = vst [vmem:[#allocation3 + $0x1c] sm:$0x1] %v113
    %v115 = vld [vmem:[#allocation3 + $0x20] sm:$0x1]
    %v116 = vsel %vm90, 0, %v115
    %117 = vst [vmem:[#allocation3 + $0x20] sm:$0x1] %v116
    %v118 = vld [vmem:[#allocation3 + $0x24] sm:$0x1]
    %v119 = vsel %vm90, 0, %v118
    %120 = vst [vmem:[#allocation3 + $0x24] sm:$0x1] %v119
    %v121 = vld [vmem:[#allocation3 + $0x28] sm:$0x1]
    %v122 = vsel %vm90, 0, %v121
    %123 = vst [vmem:[#allocation3 + $0x28] sm:$0x1] %v122
    %v124 = vld [vmem:[#allocation3 + $0x2c] sm:$0x1]
    %v125 = vsel %vm90, 0, %v124
    %126 = vst [vmem:[#allocation3 + $0x2c] sm:$0x1] %v125
    %v127 = vld [vmem:[#allocation3 + $0x30] sm:$0x1]
    %v128 = vsel %vm90, 0, %v127
    %129 = vst [vmem:[#allocation3 + $0x30] sm:$0x1] %v128
    %v130 = vld [vmem:[#allocation3 + $0x34] sm:$0x1]
    %v131 = vsel %vm90, 0, %v130
    %132 = vst [vmem:[#allocation3 + $0x34] sm:$0x1] %v131
    %v133 = vld [vmem:[#allocation3 + $0x38] sm:$0x1]
    %v134 = vsel %vm90, 0, %v133
    %135 = vst [vmem:[#allocation3 + $0x38] sm:$0x1] %v134
    %v136 = vld [vmem:[#allocation3 + $0x3c] sm:$0x1]
    %v137 = vsel %vm90, 0, %v136
    %138 = vst [vmem:[#allocation3 + $0x3c] sm:$0x1] %v137
    %vm139 = vcmask 191648
    %140 = vst.msk [vmem:[#allocation3] sm:$0xf] %vm139, 0
    %141 = vst.msk [vmem:[#allocation3 + $0x20] sm:$0xf] %vm139, 0
    %vm142 = vcmask 224448
    %143 = vst.msk [vmem:[#allocation3] sm:$0xf] %vm142, 0
    %144 = vst.msk [vmem:[#allocation3 + $0x20] sm:$0xf] %vm142, 0
    %vm145 = vcmask 224451
    %vm146 = vsmask.f32 7950
    %vm147 = vmand %vm145, %vm146
    %v148 = vld [vmem:[#allocation3] sm:$0x8]
    %v149 = vsel %vm147, 0, %v148
    %150 = vst [vmem:[#allocation3] sm:$0x8] %v149
    %v151 = vld [vmem:[#allocation3 + $0x4] sm:$0x8]
    %v152 = vsel %vm147, 0, %v151
    %153 = vst [vmem:[#allocation3 + $0x4] sm:$0x8] %v152
    %v154 = vld [vmem:[#allocation3 + $0x8] sm:$0x8]
    %v155 = vsel %vm147, 0, %v154
    %156 = vst [vmem:[#allocation3 + $0x8] sm:$0x8] %v155
    %v157 = vld [vmem:[#allocation3 + $0xc] sm:$0x8]
    %v158 = vsel %vm147, 0, %v157
    %159 = vst [vmem:[#allocation3 + $0xc] sm:$0x8] %v158
    %v160 = vld [vmem:[#allocation3 + $0x10] sm:$0x8]
    %v161 = vsel %vm147, 0, %v160
    %162 = vst [vmem:[#allocation3 + $0x10] sm:$0x8] %v161
    %v163 = vld [vmem:[#allocation3 + $0x14] sm:$0x8]
    %v164 = vsel %vm147, 0, %v163
    %165 = vst [vmem:[#allocation3 + $0x14] sm:$0x8] %v164
    %v166 = vld [vmem:[#allocation3 + $0x18] sm:$0x8]
    %v167 = vsel %vm147, 0, %v166
    %168 = vst [vmem:[#allocation3 + $0x18] sm:$0x8] %v167
    %v169 = vld [vmem:[#allocation3 + $0x1c] sm:$0x8]
    %v170 = vsel %vm147, 0, %v169
    %171 = vst [vmem:[#allocation3 + $0x1c] sm:$0x8] %v170
    %v172 = vld [vmem:[#allocation3 + $0x20] sm:$0x8]
    %v173 = vsel %vm147, 0, %v172
    %174 = vst [vmem:[#allocation3 + $0x20] sm:$0x8] %v173
    %v175 = vld [vmem:[#allocation3 + $0x24] sm:$0x8]
    %v176 = vsel %vm147, 0, %v175
    %177 = vst [vmem:[#allocation3 + $0x24] sm:$0x8] %v176
    %v178 = vld [vmem:[#allocation3 + $0x28] sm:$0x8]
    %v179 = vsel %vm147, 0, %v178
    %180 = vst [vmem:[#allocation3 + $0x28] sm:$0x8] %v179
    %v181 = vld [vmem:[#allocation3 + $0x2c] sm:$0x8]
    %v182 = vsel %vm147, 0, %v181
    %183 = vst [vmem:[#allocation3 + $0x2c] sm:$0x8] %v182
    %v184 = vld [vmem:[#allocation3 + $0x30] sm:$0x8]
    %v185 = vsel %vm147, 0, %v184
    %186 = vst [vmem:[#allocation3 + $0x30] sm:$0x8] %v185
    %v187 = vld [vmem:[#allocation3 + $0x34] sm:$0x8]
    %v188 = vsel %vm147, 0, %v187
    %189 = vst [vmem:[#allocation3 + $0x34] sm:$0x8] %v188
    %v190 = vld [vmem:[#allocation3 + $0x38] sm:$0x8]
    %v191 = vsel %vm147, 0, %v190
    %192 = vst [vmem:[#allocation3 + $0x38] sm:$0x8] %v191
    %v193 = vld [vmem:[#allocation3 + $0x3c] sm:$0x8]
    %v194 = vsel %vm147, 0, %v193
    %195 = vst [vmem:[#allocation3 + $0x3c] sm:$0x8] %v194
    %vm196 = vcmask 254176
    %vm197 = vmand %vm196, %vm89
    %v198 = vld [vmem:[#allocation3] sm:$0x1]
    %v199 = vsel %vm197, 0, %v198
    %200 = vst [vmem:[#allocation3] sm:$0x1] %v199
    %v201 = vld [vmem:[#allocation3 + $0x4] sm:$0x1]
    %v202 = vsel %vm197, 0, %v201
    %203 = vst [vmem:[#allocation3 + $0x4] sm:$0x1] %v202
    %v204 = vld [vmem:[#allocation3 + $0x8] sm:$0x1]
    %v205 = vsel %vm197, 0, %v204
    %206 = vst [vmem:[#allocation3 + $0x8] sm:$0x1] %v205
    %v207 = vld [vmem:[#allocation3 + $0xc] sm:$0x1]
    %v208 = vsel %vm197, 0, %v207
    %209 = vst [vmem:[#allocation3 + $0xc] sm:$0x1] %v208
    %v210 = vld [vmem:[#allocation3 + $0x10] sm:$0x1]
    %v211 = vsel %vm197, 0, %v210
    %212 = vst [vmem:[#allocation3 + $0x10] sm:$0x1] %v211
    %v213 = vld [vmem:[#allocation3 + $0x14] sm:$0x1]
    %v214 = vsel %vm197, 0, %v213
    %215 = vst [vmem:[#allocation3 + $0x14] sm:$0x1] %v214
    %v216 = vld [vmem:[#allocation3 + $0x18] sm:$0x1]
    %v217 = vsel %vm197, 0, %v216
    %218 = vst [vmem:[#allocation3 + $0x18] sm:$0x1] %v217
    %v219 = vld [vmem:[#allocation3 + $0x1c] sm:$0x1]
    %v220 = vsel %vm197, 0, %v219
    %221 = vst [vmem:[#allocation3 + $0x1c] sm:$0x1] %v220
    %v222 = vld [vmem:[#allocation3 + $0x20] sm:$0x1]
    %v223 = vsel %vm197, 0, %v222
    %224 = vst [vmem:[#allocation3 + $0x20] sm:$0x1] %v223
    %v225 = vld [vmem:[#allocation3 + $0x24] sm:$0x1]
    %v226 = vsel %vm197, 0, %v225
    %227 = vst [vmem:[#allocation3 + $0x24] sm:$0x1] %v226
    %v228 = vld [vmem:[#allocation3 + $0x28] sm:$0x1]
    %v229 = vsel %vm197, 0, %v228
    %230 = vst [vmem:[#allocation3 + $0x28] sm:$0x1] %v229
    %v231 = vld [vmem:[#allocation3 + $0x2c] sm:$0x1]
    %v232 = vsel %vm197, 0, %v231
    %233 = vst [vmem:[#allocation3 + $0x2c] sm:$0x1] %v232
    %v234 = vld [vmem:[#allocation3 + $0x30] sm:$0x1]
    %v235 = vsel %vm197, 0, %v234
    %236 = vst [vmem:[#allocation3 + $0x30] sm:$0x1] %v235
    %v237 = vld [vmem:[#allocation3 + $0x34] sm:$0x1]
    %v238 = vsel %vm197, 0, %v237
    %239 = vst [vmem:[#allocation3 + $0x34] sm:$0x1] %v238
    %v240 = vld [vmem:[#allocation3 + $0x38] sm:$0x1]
    %v241 = vsel %vm197, 0, %v240
    %242 = vst [vmem:[#allocation3 + $0x38] sm:$0x1] %v241
    %v243 = vld [vmem:[#allocation3 + $0x3c] sm:$0x1]
    %v244 = vsel %vm197, 0, %v243
    %245 = vst [vmem:[#allocation3 + $0x3c] sm:$0x1] %v244
    %vm246 = vcmask 290051
    %vm247 = vmand %vm246, %vm146
    %v248 = vld [vmem:[#allocation3] sm:$0x8]
    %v249 = vsel %vm247, 0, %v248
    %250 = vst [vmem:[#allocation3] sm:$0x8] %v249
    %v251 = vld [vmem:[#allocation3 + $0x4] sm:$0x8]
    %v252 = vsel %vm247, 0, %v251
    %253 = vst [vmem:[#allocation3 + $0x4] sm:$0x8] %v252
    %v254 = vld [vmem:[#allocation3 + $0x8] sm:$0x8]
    %v255 = vsel %vm247, 0, %v254
    %256 = vst [vmem:[#allocation3 + $0x8] sm:$0x8] %v255
    %v257 = vld [vmem:[#allocation3 + $0xc] sm:$0x8]
    %v258 = vsel %vm247, 0, %v257
    %259 = vst [vmem:[#allocation3 + $0xc] sm:$0x8] %v258
    %v260 = vld [vmem:[#allocation3 + $0x10] sm:$0x8]
    %v261 = vsel %vm247, 0, %v260
    %262 = vst [vmem:[#allocation3 + $0x10] sm:$0x8] %v261
    %v263 = vld [vmem:[#allocation3 + $0x14] sm:$0x8]
    %v264 = vsel %vm247, 0, %v263
    %265 = vst [vmem:[#allocation3 + $0x14] sm:$0x8] %v264
    %v266 = vld [vmem:[#allocation3 + $0x18] sm:$0x8]
    %v267 = vsel %vm247, 0, %v266
    %268 = vst [vmem:[#allocation3 + $0x18] sm:$0x8] %v267
    %v269 = vld [vmem:[#allocation3 + $0x1c] sm:$0x8]
    %v270 = vsel %vm247, 0, %v269
    %271 = vst [vmem:[#allocation3 + $0x1c] sm:$0x8] %v270
    %v272 = vld [vmem:[#allocation3 + $0x20] sm:$0x8]
    %v273 = vsel %vm247, 0, %v272
    %274 = vst [vmem:[#allocation3 + $0x20] sm:$0x8] %v273
    %v275 = vld [vmem:[#allocation3 + $0x24] sm:$0x8]
    %v276 = vsel %vm247, 0, %v275
    %277 = vst [vmem:[#allocation3 + $0x24] sm:$0x8] %v276
    %v278 = vld [vmem:[#allocation3 + $0x28] sm:$0x8]
    %v279 = vsel %vm247, 0, %v278
    %280 = vst [vmem:[#allocation3 + $0x28] sm:$0x8] %v279
    %v281 = vld [vmem:[#allocation3 + $0x2c] sm:$0x8]
    %v282 = vsel %vm247, 0, %v281
    %283 = vst [vmem:[#allocation3 + $0x2c] sm:$0x8] %v282
    %v284 = vld [vmem:[#allocation3 + $0x30] sm:$0x8]
    %v285 = vsel %vm247, 0, %v284
    %286 = vst [vmem:[#allocation3 + $0x30] sm:$0x8] %v285
    %v287 = vld [vmem:[#allocation3 + $0x34] sm:$0x8]
    %v288 = vsel %vm247, 0, %v287
    %289 = vst [vmem:[#allocation3 + $0x34] sm:$0x8] %v288
    %v290 = vld [vmem:[#allocation3 + $0x38] sm:$0x8]
    %v291 = vsel %vm247, 0, %v290
    %292 = vst [vmem:[#allocation3 + $0x38] sm:$0x8] %v291
    %v293 = vld [vmem:[#allocation3 + $0x3c] sm:$0x8]
    %v294 = vsel %vm247, 0, %v293
    %295 = vst [vmem:[#allocation3 + $0x3c] sm:$0x8] %v294
    %s296 = scalar_lea.vmem [#allocation3], 28
    %vm297 = vcmask 322848
    %298 = vst.msk [vmem:[%s296] sm:$0xf] %vm297, 0
    %299 = vst.msk [vmem:[%s296 + $0x20] sm:$0xf] %vm297, 0
    %vm300 = vcmask 319776
    %vm301 = vmand %vm300, %vm89
    %v302 = vld [vmem:[#allocation3] sm:$0x1]
    %v303 = vsel %vm301, 0, %v302
    %304 = vst [vmem:[#allocation3] sm:$0x1] %v303
    %v305 = vld [vmem:[#allocation3 + $0x4] sm:$0x1]
    %v306 = vsel %vm301, 0, %v305
    %307 = vst [vmem:[#allocation3 + $0x4] sm:$0x1] %v306
    %v308 = vld [vmem:[#allocation3 + $0x8] sm:$0x1]
    %v309 = vsel %vm301, 0, %v308
    %310 = vst [vmem:[#allocation3 + $0x8] sm:$0x1] %v309
    %v311 = vld [vmem:[#allocation3 + $0xc] sm:$0x1]
    %v312 = vsel %vm301, 0, %v311
    %313 = vst [vmem:[#allocation3 + $0xc] sm:$0x1] %v312
    %v314 = vld [vmem:[#allocation3 + $0x10] sm:$0x1]
    %v315 = vsel %vm301, 0, %v314
    %316 = vst [vmem:[#allocation3 + $0x10] sm:$0x1] %v315
    %v317 = vld [vmem:[#allocation3 + $0x14] sm:$0x1]
    %v318 = vsel %vm301, 0, %v317
    %319 = vst [vmem:[#allocation3 + $0x14] sm:$0x1] %v318
    %v320 = vld [vmem:[#allocation3 + $0x18] sm:$0x1]
    %v321 = vsel %vm301, 0, %v320
    %322 = vst [vmem:[#allocation3 + $0x18] sm:$0x1] %v321
    %v323 = vld [vmem:[#allocation3 + $0x1c] sm:$0x1]
    %v324 = vsel %vm301, 0, %v323
    %325 = vst [vmem:[#allocation3 + $0x1c] sm:$0x1] %v324
    %v326 = vld [vmem:[#allocation3 + $0x20] sm:$0x1]
    %v327 = vsel %vm301, 0, %v326
    %328 = vst [vmem:[#allocation3 + $0x20] sm:$0x1] %v327
    %v329 = vld [vmem:[#allocation3 + $0x24] sm:$0x1]
    %v330 = vsel %vm301, 0, %v329
    %331 = vst [vmem:[#allocation3 + $0x24] sm:$0x1] %v330
    %v332 = vld [vmem:[#allocation3 + $0x28] sm:$0x1]
    %v333 = vsel %vm301, 0, %v332
    %334 = vst [vmem:[#allocation3 + $0x28] sm:$0x1] %v333
    %v335 = vld [vmem:[#allocation3 + $0x2c] sm:$0x1]
    %v336 = vsel %vm301, 0, %v335
    %337 = vst [vmem:[#allocation3 + $0x2c] sm:$0x1] %v336
    %v338 = vld [vmem:[#allocation3 + $0x30] sm:$0x1]
    %v339 = vsel %vm301, 0, %v338
    %340 = vst [vmem:[#allocation3 + $0x30] sm:$0x1] %v339
    %v341 = vld [vmem:[#allocation3 + $0x34] sm:$0x1]
    %v342 = vsel %vm301, 0, %v341
    %343 = vst [vmem:[#allocation3 + $0x34] sm:$0x1] %v342
    %v344 = vld [vmem:[#allocation3 + $0x38] sm:$0x1]
    %v345 = vsel %vm301, 0, %v344
    %346 = vst [vmem:[#allocation3 + $0x38] sm:$0x1] %v345
    %v347 = vld [vmem:[#allocation3 + $0x3c] sm:$0x1]
    %v348 = vsel %vm301, 0, %v347
    %349 = vst [vmem:[#allocation3 + $0x3c] sm:$0x1] %v348
    %vm350 = vcmask 355648
    %351 = vst.msk [vmem:[%s296] sm:$0xf] %vm350, 0
    %352 = vst.msk [vmem:[%s296 + $0x20] sm:$0xf] %vm350, 0
    %vm353 = vcmask 388448
    %354 = vst.msk [vmem:[%s296] sm:$0xf] %vm353, 0
    %355 = vst.msk [vmem:[%s296 + $0x20] sm:$0xf] %vm353, 0
    %vm356 = vcmask 388451
    %vm357 = vmand %vm356, %vm146
    %v358 = vld [vmem:[#allocation3] sm:$0x8]
    %v359 = vsel %vm357, 0, %v358
    %360 = vst [vmem:[#allocation3] sm:$0x8] %v359
    %v361 = vld [vmem:[#allocation3 + $0x4] sm:$0x8]
    %v362 = vsel %vm357, 0, %v361
    %363 = vst [vmem:[#allocation3 + $0x4] sm:$0x8] %v362
    %v364 = vld [vmem:[#allocation3 + $0x8] sm:$0x8]
    %v365 = vsel %vm357, 0, %v364
    %366 = vst [vmem:[#allocation3 + $0x8] sm:$0x8] %v365
    %v367 = vld [vmem:[#allocation3 + $0xc] sm:$0x8]
    %v368 = vsel %vm357, 0, %v367
    %369 = vst [vmem:[#allocation3 + $0xc] sm:$0x8] %v368
    %v370 = vld [vmem:[#allocation3 + $0x10] sm:$0x8]
    %v371 = vsel %vm357, 0, %v370
    %372 = vst [vmem:[#allocation3 + $0x10] sm:$0x8] %v371
    %v373 = vld [vmem:[#allocation3 + $0x14] sm:$0x8]
    %v374 = vsel %vm357, 0, %v373
    %375 = vst [vmem:[#allocation3 + $0x14] sm:$0x8] %v374
    %v376 = vld [vmem:[#allocation3 + $0x18] sm:$0x8]
    %v377 = vsel %vm357, 0, %v376
    %378 = vst [vmem:[#allocation3 + $0x18] sm:$0x8] %v377
    %v379 = vld [vmem:[#allocation3 + $0x1c] sm:$0x8]
    %v380 = vsel %vm357, 0, %v379
    %381 = vst [vmem:[#allocation3 + $0x1c] sm:$0x8] %v380
    %v382 = vld [vmem:[#allocation3 + $0x20] sm:$0x8]
    %v383 = vsel %vm357, 0, %v382
    %384 = vst [vmem:[#allocation3 + $0x20] sm:$0x8] %v383
    %v385 = vld [vmem:[#allocation3 + $0x24] sm:$0x8]
    %v386 = vsel %vm357, 0, %v385
    %387 = vst [vmem:[#allocation3 + $0x24] sm:$0x8] %v386
    %v388 = vld [vmem:[#allocation3 + $0x28] sm:$0x8]
    %v389 = vsel %vm357, 0, %v388
    %390 = vst [vmem:[#allocation3 + $0x28] sm:$0x8] %v389
    %v391 = vld [vmem:[#allocation3 + $0x2c] sm:$0x8]
    %v392 = vsel %vm357, 0, %v391
    %393 = vst [vmem:[#allocation3 + $0x2c] sm:$0x8] %v392
    %v394 = vld [vmem:[#allocation3 + $0x30] sm:$0x8]
    %v395 = vsel %vm357, 0, %v394
    %396 = vst [vmem:[#allocation3 + $0x30] sm:$0x8] %v395
    %v397 = vld [vmem:[#allocation3 + $0x34] sm:$0x8]
    %v398 = vsel %vm357, 0, %v397
    %399 = vst [vmem:[#allocation3 + $0x34] sm:$0x8] %v398
    %v400 = vld [vmem:[#allocation3 + $0x38] sm:$0x8]
    %v401 = vsel %vm357, 0, %v400
    %402 = vst [vmem:[#allocation3 + $0x38] sm:$0x8] %v401
    %v403 = vld [vmem:[#allocation3 + $0x3c] sm:$0x8]
    %v404 = vsel %vm357, 0, %v403
    %405 = vst [vmem:[#allocation3 + $0x3c] sm:$0x8] %v404
    %v406 = vld [vmem:[#allocation2] sm:$0xff]
    %v407 = vld [vmem:[#allocation2 + $0x8] sm:$0xff]
    %v408 = vld [vmem:[#allocation2 + $0x10] sm:$0xff]
    %v409 = vld [vmem:[#allocation2 + $0x18] sm:$0xff]
    %v410 = vld [vmem:[#allocation2 + $0x20] sm:$0xff]
    %v411 = vld [vmem:[#allocation2 + $0x28] sm:$0xff]
    %v412 = vld [vmem:[#allocation2 + $0x30] sm:$0xff]
    %v413 = vld [vmem:[#allocation2 + $0x38] sm:$0xff]
    %v414 = vld [vmem:[#allocation2 + $0x40] sm:$0xff]
    %v415 = vld [vmem:[#allocation2 + $0x48] sm:$0xff]
    %v416 = vld [vmem:[#allocation2 + $0x50] sm:$0xff]
    %v417 = vld [vmem:[#allocation2 + $0x58] sm:$0xff]
    %v418 = vld [vmem:[#allocation2 + $0x60] sm:$0xff]
    %v419 = vld [vmem:[#allocation2 + $0x68] sm:$0xff]
    %v420 = vld [vmem:[#allocation2 + $0x70] sm:$0xff]
    %v421 = vld [vmem:[#allocation2 + $0x78] sm:$0xff]
    %v422 = vpack.c.bf16 %v406, %v406
    %v423 = vpack.c.bf16 %v407, %v407
    %v424 = vpack.c.bf16 %v408, %v408
    %v425 = vpack.c.bf16 %v409, %v409
    %v426 = vpack.c.bf16 %v410, %v410
    %v427 = vpack.c.bf16 %v411, %v411
    %v428 = vpack.c.bf16 %v412, %v412
    %v429 = vpack.c.bf16 %v413, %v413
    %v430 = vpack.c.bf16 %v414, %v414
    %v431 = vpack.c.bf16 %v415, %v415
    %v432 = vpack.c.bf16 %v416, %v416
    %v433 = vpack.c.bf16 %v417, %v417
    %v434 = vpack.c.bf16 %v418, %v418
    %v435 = vpack.c.bf16 %v419, %v419
    %v436 = vpack.c.bf16 %v420, %v420
    %v437 = vpack.c.bf16 %v421, %v421
    %vm438 = vcmask 125952
    %439 = vst.msk [vmem:[#allocation3] sm:$0xf] %vm438, %v422
    %440 = vst.msk [vmem:[#allocation3 + $0x4] sm:$0xf] %vm438, %v423
    %441 = vst.msk [vmem:[#allocation3 + $0x8] sm:$0xf] %vm438, %v424
    %442 = vst.msk [vmem:[#allocation3 + $0xc] sm:$0xf] %vm438, %v425
    %443 = vst.msk [vmem:[#allocation3 + $0x10] sm:$0xf] %vm438, %v426
    %444 = vst.msk [vmem:[#allocation3 + $0x14] sm:$0xf] %vm438, %v427
    %445 = vst.msk [vmem:[#allocation3 + $0x18] sm:$0xf] %vm438, %v428
    %446 = vst.msk [vmem:[#allocation3 + $0x1c] sm:$0xf] %vm438, %v429
    %447 = vst.msk [vmem:[#allocation3 + $0x20] sm:$0xf] %vm438, %v430
    %448 = vst.msk [vmem:[#allocation3 + $0x24] sm:$0xf] %vm438, %v431
    %449 = vst.msk [vmem:[#allocation3 + $0x28] sm:$0xf] %vm438, %v432
    %450 = vst.msk [vmem:[#allocation3 + $0x2c] sm:$0xf] %vm438, %v433
    %451 = vst.msk [vmem:[#allocation3 + $0x30] sm:$0xf] %vm438, %v434
    %452 = vst.msk [vmem:[#allocation3 + $0x34] sm:$0xf] %vm438, %v435
    %453 = vst.msk [vmem:[#allocation3 + $0x38] sm:$0xf] %vm438, %v436
    %454 = vst.msk [vmem:[#allocation3 + $0x3c] sm:$0xf] %vm438, %v437
    %v455 = vld [vmem:[#allocation3] sm:$0xf]
    %v456 = vld [vmem:[#allocation3 + $0x4] sm:$0xf]
    %v457 = vld [vmem:[#allocation3 + $0x8] sm:$0xf]
    %v458 = vld [vmem:[#allocation3 + $0xc] sm:$0xf]
    %v459 = vld [vmem:[#allocation3 + $0x10] sm:$0xf]
    %v460 = vld [vmem:[#allocation3 + $0x14] sm:$0xf]
    %v461 = vld [vmem:[#allocation3 + $0x18] sm:$0xf]
    %v462 = vld [vmem:[#allocation3 + $0x20] sm:$0xf]
    %v463 = vld [vmem:[#allocation3 + $0x24] sm:$0xf]
    %v464 = vld [vmem:[#allocation3 + $0x28] sm:$0xf]
    %v465 = vld [vmem:[#allocation3 + $0x2c] sm:$0xf]
    %v466 = vld [vmem:[#allocation3 + $0x30] sm:$0xf]
    %v467 = vld [vmem:[#allocation3 + $0x34] sm:$0xf]
    %v468 = vld [vmem:[#allocation3 + $0x38] sm:$0xf]
    %v470 = vshrl.u32 %v455, 16
    %v472 = vrot.slane %v470, 7
    %v473 = vshll.u32 %v455, 16
    %v475 = vor.u32 %v472, %v473
    %v477 = vshrl.u32 %v456, 16
    %v479 = vrot.slane %v477, 7
    %v480 = vshll.u32 %v456, 16
    %v482 = vor.u32 %v479, %v480
    %v484 = vshrl.u32 %v457, 16
    %v486 = vrot.slane %v484, 7
    %v487 = vshll.u32 %v457, 16
    %v489 = vor.u32 %v486, %v487
    %v491 = vshrl.u32 %v458, 16
    %v493 = vrot.slane %v491, 7
    %v494 = vshll.u32 %v458, 16
    %v496 = vor.u32 %v493, %v494
    %v498 = vshrl.u32 %v459, 16
    %v500 = vrot.slane %v498, 7
    %v501 = vshll.u32 %v459, 16
    %v503 = vor.u32 %v500, %v501
    %v505 = vshrl.u32 %v460, 16
    %v507 = vrot.slane %v505, 7
    %v508 = vshll.u32 %v460, 16
    %v510 = vor.u32 %v507, %v508
    %v512 = vshrl.u32 %v461, 16
    %v514 = vrot.slane %v512, 7
    %v515 = vshll.u32 %v461, 16
    %v517 = vor.u32 %v514, %v515
    %v519 = vshrl.u32 %v462, 16
    %v521 = vrot.slane %v519, 7
    %v522 = vshll.u32 %v462, 16
    %v524 = vor.u32 %v521, %v522
    %v526 = vshrl.u32 %v463, 16
    %v528 = vrot.slane %v526, 7
    %v529 = vshll.u32 %v463, 16
    %v531 = vor.u32 %v528, %v529
    %v533 = vshrl.u32 %v464, 16
    %v535 = vrot.slane %v533, 7
    %v536 = vshll.u32 %v464, 16
    %v538 = vor.u32 %v535, %v536
    %v540 = vshrl.u32 %v465, 16
    %v542 = vrot.slane %v540, 7
    %v543 = vshll.u32 %v465, 16
    %v545 = vor.u32 %v542, %v543
    %v547 = vshrl.u32 %v466, 16
    %v549 = vrot.slane %v547, 7
    %v550 = vshll.u32 %v466, 16
    %v552 = vor.u32 %v549, %v550
    %v554 = vshrl.u32 %v467, 16
    %v556 = vrot.slane %v554, 7
    %v557 = vshll.u32 %v467, 16
    %v559 = vor.u32 %v556, %v557
    %v561 = vshrl.u32 %v468, 16
    %v563 = vrot.slane %v561, 7
    %v564 = vshll.u32 %v468, 16
    %v566 = vor.u32 %v563, %v564
    %567 = vrot.lane.b32.xlu0 %v475, 16
    %v568 = vpop.permute.xlu0 %567
    %569 = vrot.lane.b32.xlu0 %v482, 16
    %v570 = vpop.permute.xlu0 %569
    %571 = vrot.lane.b32.xlu0 %v489, 16
    %v572 = vpop.permute.xlu0 %571
    %573 = vrot.lane.b32.xlu0 %v496, 16
    %v574 = vpop.permute.xlu0 %573
    %575 = vrot.lane.b32.xlu0 %v503, 16
    %v576 = vpop.permute.xlu0 %575
    %577 = vrot.lane.b32.xlu0 %v510, 16
    %v578 = vpop.permute.xlu0 %577
    %579 = vrot.lane.b32.xlu0 %v517, 16
    %v580 = vpop.permute.xlu0 %579
    %581 = vrot.lane.b32.xlu0 %v524, 16
    %v582 = vpop.permute.xlu0 %581
    %583 = vrot.lane.b32.xlu0 %v531, 16
    %v584 = vpop.permute.xlu0 %583
    %585 = vrot.lane.b32.xlu0 %v538, 16
    %v586 = vpop.permute.xlu0 %585
    %587 = vrot.lane.b32.xlu0 %v545, 16
    %v588 = vpop.permute.xlu0 %587
    %589 = vrot.lane.b32.xlu0 %v552, 16
    %v590 = vpop.permute.xlu0 %589
    %591 = vrot.lane.b32.xlu0 %v559, 16
    %v592 = vpop.permute.xlu0 %591
    %593 = vrot.lane.b32.xlu0 %v566, 16
    %v594 = vpop.permute.xlu0 %593
    %s609 = scalar_lea.vmem [#allocation3], 4
    %vm610 = vcmask 158848
    %vm611 = vsmask.f32 7938
    %vm612 = vmand %vm610, %vm611
    %v613 = vld [vmem:[%s609] sm:$0xf]
    %v614 = vsel %vm612, %v568, %v613
    %615 = vst [vmem:[%s609] sm:$0xf] %v614
    %v616 = vld [vmem:[%s609 + $0x4] sm:$0xf]
    %v617 = vsel %vm612, %v570, %v616
    %618 = vst [vmem:[%s609 + $0x4] sm:$0xf] %v617
    %v619 = vld [vmem:[%s609 + $0x8] sm:$0xf]
    %v620 = vsel %vm612, %v572, %v619
    %621 = vst [vmem:[%s609 + $0x8] sm:$0xf] %v620
    %v622 = vld [vmem:[%s609 + $0xc] sm:$0xf]
    %v623 = vsel %vm612, %v574, %v622
    %624 = vst [vmem:[%s609 + $0xc] sm:$0xf] %v623
    %v625 = vld [vmem:[%s609 + $0x10] sm:$0xf]
    %v626 = vsel %vm612, %v576, %v625
    %627 = vst [vmem:[%s609 + $0x10] sm:$0xf] %v626
    %v628 = vld [vmem:[%s609 + $0x14] sm:$0xf]
    %v629 = vsel %vm612, %v578, %v628
    %630 = vst [vmem:[%s609 + $0x14] sm:$0xf] %v629
    %v631 = vld [vmem:[%s609 + $0x18] sm:$0xf]
    %v632 = vsel %vm612, %v580, %v631
    %633 = vst [vmem:[%s609 + $0x18] sm:$0xf] %v632
    %v634 = vld [vmem:[%s609 + $0x20] sm:$0xf]
    %v635 = vsel %vm612, %v582, %v634
    %636 = vst [vmem:[%s609 + $0x20] sm:$0xf] %v635
    %v637 = vld [vmem:[%s609 + $0x24] sm:$0xf]
    %v638 = vsel %vm612, %v584, %v637
    %639 = vst [vmem:[%s609 + $0x24] sm:$0xf] %v638
    %v640 = vld [vmem:[%s609 + $0x28] sm:$0xf]
    %v641 = vsel %vm612, %v586, %v640
    %642 = vst [vmem:[%s609 + $0x28] sm:$0xf] %v641
    %v643 = vld [vmem:[%s609 + $0x2c] sm:$0xf]
    %v644 = vsel %vm612, %v588, %v643
    %645 = vst [vmem:[%s609 + $0x2c] sm:$0xf] %v644
    %v646 = vld [vmem:[%s609 + $0x30] sm:$0xf]
    %v647 = vsel %vm612, %v590, %v646
    %648 = vst [vmem:[%s609 + $0x30] sm:$0xf] %v647
    %v649 = vld [vmem:[%s609 + $0x34] sm:$0xf]
    %v650 = vsel %vm612, %v592, %v649
    %651 = vst [vmem:[%s609 + $0x34] sm:$0xf] %v650
    %v652 = vld [vmem:[%s609 + $0x38] sm:$0xf]
    %v653 = vsel %vm612, %v594, %v652
    %654 = vst [vmem:[%s609 + $0x38] sm:$0xf] %v653
    %v655 = vld [vmem:[#allocation3] sm:$0xf]
    %v656 = vld [vmem:[#allocation3 + $0x4] sm:$0xf]
    %v657 = vld [vmem:[#allocation3 + $0x8] sm:$0xf]
    %v658 = vld [vmem:[#allocation3 + $0xc] sm:$0xf]
    %v659 = vld [vmem:[#allocation3 + $0x10] sm:$0xf]
    %v660 = vld [vmem:[#allocation3 + $0x14] sm:$0xf]
    %v661 = vld [vmem:[#allocation3 + $0x18] sm:$0xf]
    %v662 = vld [vmem:[#allocation3 + $0x20] sm:$0xf]
    %v663 = vld [vmem:[#allocation3 + $0x24] sm:$0xf]
    %v664 = vld [vmem:[#allocation3 + $0x28] sm:$0xf]
    %v665 = vld [vmem:[#allocation3 + $0x2c] sm:$0xf]
    %v666 = vld [vmem:[#allocation3 + $0x30] sm:$0xf]
    %v667 = vld [vmem:[#allocation3 + $0x34] sm:$0xf]
    %v668 = vld [vmem:[#allocation3 + $0x38] sm:$0xf]
    %683 = vrot.lane.b32.xlu0 %v655, 20
    %v684 = vpop.permute.xlu0 %683
    %685 = vrot.lane.b32.xlu0 %v656, 20
    %v686 = vpop.permute.xlu0 %685
    %687 = vrot.lane.b32.xlu0 %v657, 20
    %v688 = vpop.permute.xlu0 %687
    %689 = vrot.lane.b32.xlu0 %v658, 20
    %v690 = vpop.permute.xlu0 %689
    %691 = vrot.lane.b32.xlu0 %v659, 20
    %v692 = vpop.permute.xlu0 %691
    %693 = vrot.lane.b32.xlu0 %v660, 20
    %v694 = vpop.permute.xlu0 %693
    %695 = vrot.lane.b32.xlu0 %v661, 20
    %v696 = vpop.permute.xlu0 %695
    %697 = vrot.lane.b32.xlu0 %v662, 20
    %v698 = vpop.permute.xlu0 %697
    %699 = vrot.lane.b32.xlu0 %v663, 20
    %v700 = vpop.permute.xlu0 %699
    %701 = vrot.lane.b32.xlu0 %v664, 20
    %v702 = vpop.permute.xlu0 %701
    %703 = vrot.lane.b32.xlu0 %v665, 20
    %v704 = vpop.permute.xlu0 %703
    %705 = vrot.lane.b32.xlu0 %v666, 20
    %v706 = vpop.permute.xlu0 %705
    %707 = vrot.lane.b32.xlu0 %v667, 20
    %v708 = vpop.permute.xlu0 %707
    %709 = vrot.lane.b32.xlu0 %v668, 20
    %v710 = vpop.permute.xlu0 %709
    %725 = vst.msk [vmem:[%s609] sm:$0xf] %vm139, %v684
    %726 = vst.msk [vmem:[%s609 + $0x4] sm:$0xf] %vm139, %v686
    %727 = vst.msk [vmem:[%s609 + $0x8] sm:$0xf] %vm139, %v688
    %728 = vst.msk [vmem:[%s609 + $0xc] sm:$0xf] %vm139, %v690
    %729 = vst.msk [vmem:[%s609 + $0x10] sm:$0xf] %vm139, %v692
    %730 = vst.msk [vmem:[%s609 + $0x14] sm:$0xf] %vm139, %v694
    %731 = vst.msk [vmem:[%s609 + $0x18] sm:$0xf] %vm139, %v696
    %732 = vst.msk [vmem:[%s609 + $0x20] sm:$0xf] %vm139, %v698
    %733 = vst.msk [vmem:[%s609 + $0x24] sm:$0xf] %vm139, %v700
    %734 = vst.msk [vmem:[%s609 + $0x28] sm:$0xf] %vm139, %v702
    %735 = vst.msk [vmem:[%s609 + $0x2c] sm:$0xf] %vm139, %v704
    %736 = vst.msk [vmem:[%s609 + $0x30] sm:$0xf] %vm139, %v706
    %737 = vst.msk [vmem:[%s609 + $0x34] sm:$0xf] %vm139, %v708
    %738 = vst.msk [vmem:[%s609 + $0x38] sm:$0xf] %vm139, %v710
    %v739 = vld [vmem:[#allocation3] sm:$0xf]
    %v740 = vld [vmem:[#allocation3 + $0x4] sm:$0xf]
    %v741 = vld [vmem:[#allocation3 + $0x8] sm:$0xf]
    %v742 = vld [vmem:[#allocation3 + $0xc] sm:$0xf]
    %v743 = vld [vmem:[#allocation3 + $0x10] sm:$0xf]
    %v744 = vld [vmem:[#allocation3 + $0x14] sm:$0xf]
    %v745 = vld [vmem:[#allocation3 + $0x18] sm:$0xf]
    %v746 = vld [vmem:[#allocation3 + $0x20] sm:$0xf]
    %v747 = vld [vmem:[#allocation3 + $0x24] sm:$0xf]
    %v748 = vld [vmem:[#allocation3 + $0x28] sm:$0xf]
    %v749 = vld [vmem:[#allocation3 + $0x2c] sm:$0xf]
    %v750 = vld [vmem:[#allocation3 + $0x30] sm:$0xf]
    %v751 = vld [vmem:[#allocation3 + $0x34] sm:$0xf]
    %v752 = vld [vmem:[#allocation3 + $0x38] sm:$0xf]
    %v754 = vshrl.u32 %v739, 16
    %v756 = vrot.slane %v754, 4
    %v757 = vshll.u32 %v739, 16
    %v759 = vrot.slane %v757, 5
    %v760 = vor.u32 %v756, %v759
    %v761 = vrot.slane %v760, 4
    %v763 = vshrl.u32 %v740, 16
    %v765 = vrot.slane %v763, 4
    %v766 = vshll.u32 %v740, 16
    %v768 = vrot.slane %v766, 5
    %v769 = vor.u32 %v765, %v768
    %v770 = vrot.slane %v769, 4
    %v772 = vshrl.u32 %v741, 16
    %v774 = vrot.slane %v772, 4
    %v775 = vshll.u32 %v741, 16
    %v777 = vrot.slane %v775, 5
    %v778 = vor.u32 %v774, %v777
    %v779 = vrot.slane %v778, 4
    %v781 = vshrl.u32 %v742, 16
    %v783 = vrot.slane %v781, 4
    %v784 = vshll.u32 %v742, 16
    %v786 = vrot.slane %v784, 5
    %v787 = vor.u32 %v783, %v786
    %v788 = vrot.slane %v787, 4
    %v790 = vshrl.u32 %v743, 16
    %v792 = vrot.slane %v790, 4
    %v793 = vshll.u32 %v743, 16
    %v795 = vrot.slane %v793, 5
    %v796 = vor.u32 %v792, %v795
    %v797 = vrot.slane %v796, 4
    %v799 = vshrl.u32 %v744, 16
    %v801 = vrot.slane %v799, 4
    %v802 = vshll.u32 %v744, 16
    %v804 = vrot.slane %v802, 5
    %v805 = vor.u32 %v801, %v804
    %v806 = vrot.slane %v805, 4
    %v808 = vshrl.u32 %v745, 16
    %v810 = vrot.slane %v808, 4
    %v811 = vshll.u32 %v745, 16
    %v813 = vrot.slane %v811, 5
    %v814 = vor.u32 %v810, %v813
    %v815 = vrot.slane %v814, 4
    %v817 = vshrl.u32 %v746, 16
    %v819 = vrot.slane %v817, 4
    %v820 = vshll.u32 %v746, 16
    %v822 = vrot.slane %v820, 5
    %v823 = vor.u32 %v819, %v822
    %v824 = vrot.slane %v823, 4
    %v826 = vshrl.u32 %v747, 16
    %v828 = vrot.slane %v826, 4
    %v829 = vshll.u32 %v747, 16
    %v831 = vrot.slane %v829, 5
    %v832 = vor.u32 %v828, %v831
    %v833 = vrot.slane %v832, 4
    %v835 = vshrl.u32 %v748, 16
    %v837 = vrot.slane %v835, 4
    %v838 = vshll.u32 %v748, 16
    %v840 = vrot.slane %v838, 5
    %v841 = vor.u32 %v837, %v840
    %v842 = vrot.slane %v841, 4
    %v844 = vshrl.u32 %v749, 16
    %v846 = vrot.slane %v844, 4
    %v847 = vshll.u32 %v749, 16
    %v849 = vrot.slane %v847, 5
    %v850 = vor.u32 %v846, %v849
    %v851 = vrot.slane %v850, 4
    %v853 = vshrl.u32 %v750, 16
    %v855 = vrot.slane %v853, 4
    %v856 = vshll.u32 %v750, 16
    %v858 = vrot.slane %v856, 5
    %v859 = vor.u32 %v855, %v858
    %v860 = vrot.slane %v859, 4
    %v862 = vshrl.u32 %v751, 16
    %v864 = vrot.slane %v862, 4
    %v865 = vshll.u32 %v751, 16
    %v867 = vrot.slane %v865, 5
    %v868 = vor.u32 %v864, %v867
    %v869 = vrot.slane %v868, 4
    %v871 = vshrl.u32 %v752, 16
    %v873 = vrot.slane %v871, 4
    %v874 = vshll.u32 %v752, 16
    %v876 = vrot.slane %v874, 5
    %v877 = vor.u32 %v873, %v876
    %v878 = vrot.slane %v877, 4
    %879 = vrot.lane.b32.xlu0 %v761, 24
    %v880 = vpop.permute.xlu0 %879
    %881 = vrot.lane.b32.xlu0 %v770, 24
    %v882 = vpop.permute.xlu0 %881
    %883 = vrot.lane.b32.xlu0 %v779, 24
    %v884 = vpop.permute.xlu0 %883
    %885 = vrot.lane.b32.xlu0 %v788, 24
    %v886 = vpop.permute.xlu0 %885
    %887 = vrot.lane.b32.xlu0 %v797, 24
    %v888 = vpop.permute.xlu0 %887
    %889 = vrot.lane.b32.xlu0 %v806, 24
    %v890 = vpop.permute.xlu0 %889
    %891 = vrot.lane.b32.xlu0 %v815, 24
    %v892 = vpop.permute.xlu0 %891
    %893 = vrot.lane.b32.xlu0 %v824, 24
    %v894 = vpop.permute.xlu0 %893
    %895 = vrot.lane.b32.xlu0 %v833, 24
    %v896 = vpop.permute.xlu0 %895
    %897 = vrot.lane.b32.xlu0 %v842, 24
    %v898 = vpop.permute.xlu0 %897
    %899 = vrot.lane.b32.xlu0 %v851, 24
    %v900 = vpop.permute.xlu0 %899
    %901 = vrot.lane.b32.xlu0 %v860, 24
    %v902 = vpop.permute.xlu0 %901
    %903 = vrot.lane.b32.xlu0 %v869, 24
    %v904 = vpop.permute.xlu0 %903
    %905 = vrot.lane.b32.xlu0 %v878, 24
    %v906 = vpop.permute.xlu0 %905
    %vm921 = vcmask 224448
    %vm922 = vsmask.f32 3328
    %vm923 = vmand %vm921, %vm922
    %v924 = vld [vmem:[%s609] sm:$0xf]
    %v925 = vsel %vm923, %v880, %v924
    %926 = vst [vmem:[%s609] sm:$0xf] %v925
    %v927 = vld [vmem:[%s609 + $0x4] sm:$0xf]
    %v928 = vsel %vm923, %v882, %v927
    %929 = vst [vmem:[%s609 + $0x4] sm:$0xf] %v928
    %v930 = vld [vmem:[%s609 + $0x8] sm:$0xf]
    %v931 = vsel %vm923, %v884, %v930
    %932 = vst [vmem:[%s609 + $0x8] sm:$0xf] %v931
    %v933 = vld [vmem:[%s609 + $0xc] sm:$0xf]
    %v934 = vsel %vm923, %v886, %v933
    %935 = vst [vmem:[%s609 + $0xc] sm:$0xf] %v934
    %v936 = vld [vmem:[%s609 + $0x10] sm:$0xf]
    %v937 = vsel %vm923, %v888, %v936
    %938 = vst [vmem:[%s609 + $0x10] sm:$0xf] %v937
    %v939 = vld [vmem:[%s609 + $0x14] sm:$0xf]
    %v940 = vsel %vm923, %v890, %v939
    %941 = vst [vmem:[%s609 + $0x14] sm:$0xf] %v940
    %v942 = vld [vmem:[%s609 + $0x18] sm:$0xf]
    %v943 = vsel %vm923, %v892, %v942
    %944 = vst [vmem:[%s609 + $0x18] sm:$0xf] %v943
    %v945 = vld [vmem:[%s609 + $0x20] sm:$0xf]
    %v946 = vsel %vm923, %v894, %v945
    %947 = vst [vmem:[%s609 + $0x20] sm:$0xf] %v946
    %v948 = vld [vmem:[%s609 + $0x24] sm:$0xf]
    %v949 = vsel %vm923, %v896, %v948
    %950 = vst [vmem:[%s609 + $0x24] sm:$0xf] %v949
    %v951 = vld [vmem:[%s609 + $0x28] sm:$0xf]
    %v952 = vsel %vm923, %v898, %v951
    %953 = vst [vmem:[%s609 + $0x28] sm:$0xf] %v952
    %v954 = vld [vmem:[%s609 + $0x2c] sm:$0xf]
    %v955 = vsel %vm923, %v900, %v954
    %956 = vst [vmem:[%s609 + $0x2c] sm:$0xf] %v955
    %v957 = vld [vmem:[%s609 + $0x30] sm:$0xf]
    %v958 = vsel %vm923, %v902, %v957
    %959 = vst [vmem:[%s609 + $0x30] sm:$0xf] %v958
    %v960 = vld [vmem:[%s609 + $0x34] sm:$0xf]
    %v961 = vsel %vm923, %v904, %v960
    %962 = vst [vmem:[%s609 + $0x34] sm:$0xf] %v961
    %v963 = vld [vmem:[%s609 + $0x38] sm:$0xf]
    %v964 = vsel %vm923, %v906, %v963
    %965 = vst [vmem:[%s609 + $0x38] sm:$0xf] %v964
    %v966 = vld [vmem:[#allocation3] sm:$0xf]
    %v967 = vld [vmem:[#allocation3 + $0x4] sm:$0xf]
    %v968 = vld [vmem:[#allocation3 + $0x8] sm:$0xf]
    %v969 = vld [vmem:[#allocation3 + $0xc] sm:$0xf]
    %v970 = vld [vmem:[#allocation3 + $0x10] sm:$0xf]
    %v971 = vld [vmem:[#allocation3 + $0x14] sm:$0xf]
    %v972 = vld [vmem:[#allocation3 + $0x18] sm:$0xf]
    %v973 = vld [vmem:[#allocation3 + $0x1c] sm:$0xf]
    %v974 = vld [vmem:[#allocation3 + $0x20] sm:$0xf]
    %v975 = vld [vmem:[#allocation3 + $0x24] sm:$0xf]
    %v976 = vld [vmem:[#allocation3 + $0x28] sm:$0xf]
    %v977 = vld [vmem:[#allocation3 + $0x2c] sm:$0xf]
    %v978 = vld [vmem:[#allocation3 + $0x30] sm:$0xf]
    %v979 = vld [vmem:[#allocation3 + $0x34] sm:$0xf]
    %v980 = vld [vmem:[#allocation3 + $0x38] sm:$0xf]
    %v981 = vld [vmem:[#allocation3 + $0x3c] sm:$0xf]
    %v983 = vshrl.u32 %v966, 16
    %v985 = vrot.slane %v983, 7
    %v986 = vshll.u32 %v966, 16
    %v988 = vor.u32 %v985, %v986
    %v990 = vshrl.u32 %v967, 16
    %v992 = vrot.slane %v990, 7
    %v993 = vshll.u32 %v967, 16
    %v995 = vor.u32 %v992, %v993
    %v997 = vshrl.u32 %v968, 16
    %v999 = vrot.slane %v997, 7
    %v1000 = vshll.u32 %v968, 16
    %v1002 = vor.u32 %v999, %v1000
    %v1004 = vshrl.u32 %v969, 16
    %v1006 = vrot.slane %v1004, 7
    %v1007 = vshll.u32 %v969, 16
    %v1009 = vor.u32 %v1006, %v1007
    %v1011 = vshrl.u32 %v970, 16
    %v1013 = vrot.slane %v1011, 7
    %v1014 = vshll.u32 %v970, 16
    %v1016 = vor.u32 %v1013, %v1014
    %v1018 = vshrl.u32 %v971, 16
    %v1020 = vrot.slane %v1018, 7
    %v1021 = vshll.u32 %v971, 16
    %v1023 = vor.u32 %v1020, %v1021
    %v1025 = vshrl.u32 %v972, 16
    %v1027 = vrot.slane %v1025, 7
    %v1028 = vshll.u32 %v972, 16
    %v1030 = vor.u32 %v1027, %v1028
    %v1032 = vshrl.u32 %v973, 16
    %v1034 = vrot.slane %v1032, 7
    %v1035 = vshll.u32 %v973, 16
    %v1037 = vor.u32 %v1034, %v1035
    %v1039 = vshrl.u32 %v974, 16
    %v1041 = vrot.slane %v1039, 7
    %v1042 = vshll.u32 %v974, 16
    %v1044 = vor.u32 %v1041, %v1042
    %v1046 = vshrl.u32 %v975, 16
    %v1048 = vrot.slane %v1046, 7
    %v1049 = vshll.u32 %v975, 16
    %v1051 = vor.u32 %v1048, %v1049
    %v1053 = vshrl.u32 %v976, 16
    %v1055 = vrot.slane %v1053, 7
    %v1056 = vshll.u32 %v976, 16
    %v1058 = vor.u32 %v1055, %v1056
    %v1060 = vshrl.u32 %v977, 16
    %v1062 = vrot.slane %v1060, 7
    %v1063 = vshll.u32 %v977, 16
    %v1065 = vor.u32 %v1062, %v1063
    %v1067 = vshrl.u32 %v978, 16
    %v1069 = vrot.slane %v1067, 7
    %v1070 = vshll.u32 %v978, 16
    %v1072 = vor.u32 %v1069, %v1070
    %v1074 = vshrl.u32 %v979, 16
    %v1076 = vrot.slane %v1074, 7
    %v1077 = vshll.u32 %v979, 16
    %v1079 = vor.u32 %v1076, %v1077
    %v1081 = vshrl.u32 %v980, 16
    %v1083 = vrot.slane %v1081, 7
    %v1084 = vshll.u32 %v980, 16
    %v1086 = vor.u32 %v1083, %v1084
    %v1088 = vshrl.u32 %v981, 16
    %v1090 = vrot.slane %v1088, 7
    %v1091 = vshll.u32 %v981, 16
    %v1093 = vor.u32 %v1090, %v1091
    %1094 = vrot.lane.b32.xlu0 %v988, 28
    %v1095 = vpop.permute.xlu0 %1094
    %1096 = vrot.lane.b32.xlu0 %v995, 28
    %v1097 = vpop.permute.xlu0 %1096
    %1098 = vrot.lane.b32.xlu0 %v1002, 28
    %v1099 = vpop.permute.xlu0 %1098
    %1100 = vrot.lane.b32.xlu0 %v1009, 28
    %v1101 = vpop.permute.xlu0 %1100
    %1102 = vrot.lane.b32.xlu0 %v1016, 28
    %v1103 = vpop.permute.xlu0 %1102
    %1104 = vrot.lane.b32.xlu0 %v1023, 28
    %v1105 = vpop.permute.xlu0 %1104
    %1106 = vrot.lane.b32.xlu0 %v1030, 28
    %v1107 = vpop.permute.xlu0 %1106
    %1108 = vrot.lane.b32.xlu0 %v1037, 28
    %v1109 = vpop.permute.xlu0 %1108
    %1110 = vrot.lane.b32.xlu0 %v1044, 28
    %v1111 = vpop.permute.xlu0 %1110
    %1112 = vrot.lane.b32.xlu0 %v1051, 28
    %v1113 = vpop.permute.xlu0 %1112
    %1114 = vrot.lane.b32.xlu0 %v1058, 28
    %v1115 = vpop.permute.xlu0 %1114
    %1116 = vrot.lane.b32.xlu0 %v1065, 28
    %v1117 = vpop.permute.xlu0 %1116
    %1118 = vrot.lane.b32.xlu0 %v1072, 28
    %v1119 = vpop.permute.xlu0 %1118
    %1120 = vrot.lane.b32.xlu0 %v1079, 28
    %v1121 = vpop.permute.xlu0 %1120
    %1122 = vrot.lane.b32.xlu0 %v1086, 28
    %v1123 = vpop.permute.xlu0 %1122
    %1124 = vrot.lane.b32.xlu0 %v1093, 28
    %v1125 = vpop.permute.xlu0 %1124
    %vm1142 = vcmask 257248
    %vm1143 = vmand %vm1142, %vm611
    %v1144 = vsel %vm1143, %v1095, %v966
    %1145 = vst [vmem:[#allocation3] sm:$0xf] %v1144
    %v1146 = vld [vmem:[#allocation3 + $0x4] sm:$0xf]
    %v1147 = vsel %vm1143, %v1097, %v1146
    %1148 = vst [vmem:[#allocation3 + $0x4] sm:$0xf] %v1147
    %v1149 = vld [vmem:[#allocation3 + $0x8] sm:$0xf]
    %v1150 = vsel %vm1143, %v1099, %v1149
    %1151 = vst [vmem:[#allocation3 + $0x8] sm:$0xf] %v1150
    %v1152 = vld [vmem:[#allocation3 + $0xc] sm:$0xf]
    %v1153 = vsel %vm1143, %v1101, %v1152
    %1154 = vst [vmem:[#allocation3 + $0xc] sm:$0xf] %v1153
    %v1155 = vld [vmem:[#allocation3 + $0x10] sm:$0xf]
    %v1156 = vsel %vm1143, %v1103, %v1155
    %1157 = vst [vmem:[#allocation3 + $0x10] sm:$0xf] %v1156
    %v1158 = vld [vmem:[#allocation3 + $0x14] sm:$0xf]
    %v1159 = vsel %vm1143, %v1105, %v1158
    %1160 = vst [vmem:[#allocation3 + $0x14] sm:$0xf] %v1159
    %v1161 = vld [vmem:[#allocation3 + $0x18] sm:$0xf]
    %v1162 = vsel %vm1143, %v1107, %v1161
    %1163 = vst [vmem:[#allocation3 + $0x18] sm:$0xf] %v1162
    %v1164 = vld [vmem:[#allocation3 + $0x1c] sm:$0xf]
    %v1165 = vsel %vm1143, %v1109, %v1164
    %1166 = vst [vmem:[#allocation3 + $0x1c] sm:$0xf] %v1165
    %v1167 = vld [vmem:[#allocation3 + $0x20] sm:$0xf]
    %v1168 = vsel %vm1143, %v1111, %v1167
    %1169 = vst [vmem:[#allocation3 + $0x20] sm:$0xf] %v1168
    %v1170 = vld [vmem:[#allocation3 + $0x24] sm:$0xf]
    %v1171 = vsel %vm1143, %v1113, %v1170
    %1172 = vst [vmem:[#allocation3 + $0x24] sm:$0xf] %v1171
    %v1173 = vld [vmem:[#allocation3 + $0x28] sm:$0xf]
    %v1174 = vsel %vm1143, %v1115, %v1173
    %1175 = vst [vmem:[#allocation3 + $0x28] sm:$0xf] %v1174
    %v1176 = vld [vmem:[#allocation3 + $0x2c] sm:$0xf]
    %v1177 = vsel %vm1143, %v1117, %v1176
    %1178 = vst [vmem:[#allocation3 + $0x2c] sm:$0xf] %v1177
    %v1179 = vld [vmem:[#allocation3 + $0x30] sm:$0xf]
    %v1180 = vsel %vm1143, %v1119, %v1179
    %1181 = vst [vmem:[#allocation3 + $0x30] sm:$0xf] %v1180
    %v1182 = vld [vmem:[#allocation3 + $0x34] sm:$0xf]
    %v1183 = vsel %vm1143, %v1121, %v1182
    %1184 = vst [vmem:[#allocation3 + $0x34] sm:$0xf] %v1183
    %v1185 = vld [vmem:[#allocation3 + $0x38] sm:$0xf]
    %v1186 = vsel %vm1143, %v1123, %v1185
    %1187 = vst [vmem:[#allocation3 + $0x38] sm:$0xf] %v1186
    %v1188 = vld [vmem:[#allocation3 + $0x3c] sm:$0xf]
    %v1189 = vsel %vm1143, %v1125, %v1188
    %1190 = vst [vmem:[#allocation3 + $0x3c] sm:$0xf] %v1189
    %v1191 = vld [vmem:[#allocation3] sm:$0xf]
    %v1192 = vld [vmem:[#allocation3 + $0x4] sm:$0xf]
    %v1193 = vld [vmem:[#allocation3 + $0x8] sm:$0xf]
    %v1194 = vld [vmem:[#allocation3 + $0xc] sm:$0xf]
    %v1195 = vld [vmem:[#allocation3 + $0x10] sm:$0xf]
    %v1196 = vld [vmem:[#allocation3 + $0x14] sm:$0xf]
    %v1197 = vld [vmem:[#allocation3 + $0x18] sm:$0xf]
    %v1198 = vld [vmem:[#allocation3 + $0x1c] sm:$0xf]
    %v1199 = vld [vmem:[#allocation3 + $0x20] sm:$0xf]
    %v1200 = vld [vmem:[#allocation3 + $0x24] sm:$0xf]
    %v1201 = vld [vmem:[#allocation3 + $0x28] sm:$0xf]
    %v1202 = vld [vmem:[#allocation3 + $0x2c] sm:$0xf]
    %v1203 = vld [vmem:[#allocation3 + $0x30] sm:$0xf]
    %v1204 = vld [vmem:[#allocation3 + $0x34] sm:$0xf]
    %v1205 = vld [vmem:[#allocation3 + $0x38] sm:$0xf]
    %v1206 = vld [vmem:[#allocation3 + $0x3c] sm:$0xf]
    %v1208 = vshrl.u32 %v1191, 16
    %v1210 = vrot.slane %v1208, 4
    %v1211 = vshll.u32 %v1191, 16
    %v1213 = vrot.slane %v1211, 5
    %v1214 = vor.u32 %v1210, %v1213
    %v1215 = vrot.slane %v1214, 4
    %v1217 = vshrl.u32 %v1192, 16
    %v1219 = vrot.slane %v1217, 4
    %v1220 = vshll.u32 %v1192, 16
    %v1222 = vrot.slane %v1220, 5
    %v1223 = vor.u32 %v1219, %v1222
    %v1224 = vrot.slane %v1223, 4
    %v1226 = vshrl.u32 %v1193, 16
    %v1228 = vrot.slane %v1226, 4
    %v1229 = vshll.u32 %v1193, 16
    %v1231 = vrot.slane %v1229, 5
    %v1232 = vor.u32 %v1228, %v1231
    %v1233 = vrot.slane %v1232, 4
    %v1235 = vshrl.u32 %v1194, 16
    %v1237 = vrot.slane %v1235, 4
    %v1238 = vshll.u32 %v1194, 16
    %v1240 = vrot.slane %v1238, 5
    %v1241 = vor.u32 %v1237, %v1240
    %v1242 = vrot.slane %v1241, 4
    %v1244 = vshrl.u32 %v1195, 16
    %v1246 = vrot.slane %v1244, 4
    %v1247 = vshll.u32 %v1195, 16
    %v1249 = vrot.slane %v1247, 5
    %v1250 = vor.u32 %v1246, %v1249
    %v1251 = vrot.slane %v1250, 4
    %v1253 = vshrl.u32 %v1196, 16
    %v1255 = vrot.slane %v1253, 4
    %v1256 = vshll.u32 %v1196, 16
    %v1258 = vrot.slane %v1256, 5
    %v1259 = vor.u32 %v1255, %v1258
    %v1260 = vrot.slane %v1259, 4
    %v1262 = vshrl.u32 %v1197, 16
    %v1264 = vrot.slane %v1262, 4
    %v1265 = vshll.u32 %v1197, 16
    %v1267 = vrot.slane %v1265, 5
    %v1268 = vor.u32 %v1264, %v1267
    %v1269 = vrot.slane %v1268, 4
    %v1271 = vshrl.u32 %v1198, 16
    %v1273 = vrot.slane %v1271, 4
    %v1274 = vshll.u32 %v1198, 16
    %v1276 = vrot.slane %v1274, 5
    %v1277 = vor.u32 %v1273, %v1276
    %v1278 = vrot.slane %v1277, 4
    %v1280 = vshrl.u32 %v1199, 16
    %v1282 = vrot.slane %v1280, 4
    %v1283 = vshll.u32 %v1199, 16
    %v1285 = vrot.slane %v1283, 5
    %v1286 = vor.u32 %v1282, %v1285
    %v1287 = vrot.slane %v1286, 4
    %v1289 = vshrl.u32 %v1200, 16
    %v1291 = vrot.slane %v1289, 4
    %v1292 = vshll.u32 %v1200, 16
    %v1294 = vrot.slane %v1292, 5
    %v1295 = vor.u32 %v1291, %v1294
    %v1296 = vrot.slane %v1295, 4
    %v1298 = vshrl.u32 %v1201, 16
    %v1300 = vrot.slane %v1298, 4
    %v1301 = vshll.u32 %v1201, 16
    %v1303 = vrot.slane %v1301, 5
    %v1304 = vor.u32 %v1300, %v1303
    %v1305 = vrot.slane %v1304, 4
    %v1307 = vshrl.u32 %v1202, 16
    %v1309 = vrot.slane %v1307, 4
    %v1310 = vshll.u32 %v1202, 16
    %v1312 = vrot.slane %v1310, 5
    %v1313 = vor.u32 %v1309, %v1312
    %v1314 = vrot.slane %v1313, 4
    %v1316 = vshrl.u32 %v1203, 16
    %v1318 = vrot.slane %v1316, 4
    %v1319 = vshll.u32 %v1203, 16
    %v1321 = vrot.slane %v1319, 5
    %v1322 = vor.u32 %v1318, %v1321
    %v1323 = vrot.slane %v1322, 4
    %v1325 = vshrl.u32 %v1204, 16
    %v1327 = vrot.slane %v1325, 4
    %v1328 = vshll.u32 %v1204, 16
    %v1330 = vrot.slane %v1328, 5
    %v1331 = vor.u32 %v1327, %v1330
    %v1332 = vrot.slane %v1331, 4
    %v1334 = vshrl.u32 %v1205, 16
    %v1336 = vrot.slane %v1334, 4
    %v1337 = vshll.u32 %v1205, 16
    %v1339 = vrot.slane %v1337, 5
    %v1340 = vor.u32 %v1336, %v1339
    %v1341 = vrot.slane %v1340, 4
    %v1343 = vshrl.u32 %v1206, 16
    %v1345 = vrot.slane %v1343, 4
    %v1346 = vshll.u32 %v1206, 16
    %v1348 = vrot.slane %v1346, 5
    %v1349 = vor.u32 %v1345, %v1348
    %v1350 = vrot.slane %v1349, 4
    %1351 = vrot.lane.b32.xlu0 %v1215, 32
    %v1352 = vpop.permute.xlu0 %1351
    %1353 = vrot.lane.b32.xlu0 %v1224, 32
    %v1354 = vpop.permute.xlu0 %1353
    %1355 = vrot.lane.b32.xlu0 %v1233, 32
    %v1356 = vpop.permute.xlu0 %1355
    %1357 = vrot.lane.b32.xlu0 %v1242, 32
    %v1358 = vpop.permute.xlu0 %1357
    %1359 = vrot.lane.b32.xlu0 %v1251, 32
    %v1360 = vpop.permute.xlu0 %1359
    %1361 = vrot.lane.b32.xlu0 %v1260, 32
    %v1362 = vpop.permute.xlu0 %1361
    %1363 = vrot.lane.b32.xlu0 %v1269, 32
    %v1364 = vpop.permute.xlu0 %1363
    %1365 = vrot.lane.b32.xlu0 %v1278, 32
    %v1366 = vpop.permute.xlu0 %1365
    %1367 = vrot.lane.b32.xlu0 %v1287, 32
    %v1368 = vpop.permute.xlu0 %1367
    %1369 = vrot.lane.b32.xlu0 %v1296, 32
    %v1370 = vpop.permute.xlu0 %1369
    %1371 = vrot.lane.b32.xlu0 %v1305, 32
    %v1372 = vpop.permute.xlu0 %1371
    %1373 = vrot.lane.b32.xlu0 %v1314, 32
    %v1374 = vpop.permute.xlu0 %1373
    %1375 = vrot.lane.b32.xlu0 %v1323, 32
    %v1376 = vpop.permute.xlu0 %1375
    %1377 = vrot.lane.b32.xlu0 %v1332, 32
    %v1378 = vpop.permute.xlu0 %1377
    %1379 = vrot.lane.b32.xlu0 %v1341, 32
    %v1380 = vpop.permute.xlu0 %1379
    %1381 = vrot.lane.b32.xlu0 %v1350, 32
    %v1382 = vpop.permute.xlu0 %1381
    %vm1399 = vcmask 290048
    %vm1400 = vmand %vm1399, %vm922
    %v1401 = vsel %vm1400, %v1352, %v1191
    %1402 = vst [vmem:[#allocation3] sm:$0xf] %v1401
    %v1403 = vld [vmem:[#allocation3 + $0x4] sm:$0xf]
    %v1404 = vsel %vm1400, %v1354, %v1403
    %1405 = vst [vmem:[#allocation3 + $0x4] sm:$0xf] %v1404
    %v1406 = vld [vmem:[#allocation3 + $0x8] sm:$0xf]
    %v1407 = vsel %vm1400, %v1356, %v1406
    %1408 = vst [vmem:[#allocation3 + $0x8] sm:$0xf] %v1407
    %v1409 = vld [vmem:[#allocation3 + $0xc] sm:$0xf]
    %v1410 = vsel %vm1400, %v1358, %v1409
    %1411 = vst [vmem:[#allocation3 + $0xc] sm:$0xf] %v1410
    %v1412 = vld [vmem:[#allocation3 + $0x10] sm:$0xf]
    %v1413 = vsel %vm1400, %v1360, %v1412
    %1414 = vst [vmem:[#allocation3 + $0x10] sm:$0xf] %v1413
    %v1415 = vld [vmem:[#allocation3 + $0x14] sm:$0xf]
    %v1416 = vsel %vm1400, %v1362, %v1415
    %1417 = vst [vmem:[#allocation3 + $0x14] sm:$0xf] %v1416
    %v1418 = vld [vmem:[#allocation3 + $0x18] sm:$0xf]
    %v1419 = vsel %vm1400, %v1364, %v1418
    %1420 = vst [vmem:[#allocation3 + $0x18] sm:$0xf] %v1419
    %v1421 = vld [vmem:[#allocation3 + $0x1c] sm:$0xf]
    %v1422 = vsel %vm1400, %v1366, %v1421
    %1423 = vst [vmem:[#allocation3 + $0x1c] sm:$0xf] %v1422
    %v1424 = vld [vmem:[#allocation3 + $0x20] sm:$0xf]
    %v1425 = vsel %vm1400, %v1368, %v1424
    %1426 = vst [vmem:[#allocation3 + $0x20] sm:$0xf] %v1425
    %v1427 = vld [vmem:[#allocation3 + $0x24] sm:$0xf]
    %v1428 = vsel %vm1400, %v1370, %v1427
    %1429 = vst [vmem:[#allocation3 + $0x24] sm:$0xf] %v1428
    %v1430 = vld [vmem:[#allocation3 + $0x28] sm:$0xf]
    %v1431 = vsel %vm1400, %v1372, %v1430
    %1432 = vst [vmem:[#allocation3 + $0x28] sm:$0xf] %v1431
    %v1433 = vld [vmem:[#allocation3 + $0x2c] sm:$0xf]
    %v1434 = vsel %vm1400, %v1374, %v1433
    %1435 = vst [vmem:[#allocation3 + $0x2c] sm:$0xf] %v1434
    %v1436 = vld [vmem:[#allocation3 + $0x30] sm:$0xf]
    %v1437 = vsel %vm1400, %v1376, %v1436
    %1438 = vst [vmem:[#allocation3 + $0x30] sm:$0xf] %v1437
    %v1439 = vld [vmem:[#allocation3 + $0x34] sm:$0xf]
    %v1440 = vsel %vm1400, %v1378, %v1439
    %1441 = vst [vmem:[#allocation3 + $0x34] sm:$0xf] %v1440
    %v1442 = vld [vmem:[#allocation3 + $0x38] sm:$0xf]
    %v1443 = vsel %vm1400, %v1380, %v1442
    %1444 = vst [vmem:[#allocation3 + $0x38] sm:$0xf] %v1443
    %v1445 = vld [vmem:[#allocation3 + $0x3c] sm:$0xf]
    %v1446 = vsel %vm1400, %v1382, %v1445
    %1447 = vst [vmem:[#allocation3 + $0x3c] sm:$0xf] %v1446
    %v1448 = vld [vmem:[%s609] sm:$0xf]
    %v1449 = vld [vmem:[%s609 + $0x4] sm:$0xf]
    %v1450 = vld [vmem:[%s609 + $0x8] sm:$0xf]
    %v1451 = vld [vmem:[%s609 + $0xc] sm:$0xf]
    %v1452 = vld [vmem:[%s609 + $0x10] sm:$0xf]
    %v1453 = vld [vmem:[%s609 + $0x14] sm:$0xf]
    %v1454 = vld [vmem:[%s609 + $0x18] sm:$0xf]
    %v1455 = vld [vmem:[%s609 + $0x20] sm:$0xf]
    %v1456 = vld [vmem:[%s609 + $0x24] sm:$0xf]
    %v1457 = vld [vmem:[%s609 + $0x28] sm:$0xf]
    %v1458 = vld [vmem:[%s609 + $0x2c] sm:$0xf]
    %v1459 = vld [vmem:[%s609 + $0x30] sm:$0xf]
    %v1460 = vld [vmem:[%s609 + $0x34] sm:$0xf]
    %v1461 = vld [vmem:[%s609 + $0x38] sm:$0xf]
    %v1463 = vshrl.u32 %v1448, 16
    %v1465 = vrot.slane %v1463, 7
    %v1466 = vshll.u32 %v1448, 16
    %v1468 = vor.u32 %v1465, %v1466
    %v1470 = vshrl.u32 %v1449, 16
    %v1472 = vrot.slane %v1470, 7
    %v1473 = vshll.u32 %v1449, 16
    %v1475 = vor.u32 %v1472, %v1473
    %v1477 = vshrl.u32 %v1450, 16
    %v1479 = vrot.slane %v1477, 7
    %v1480 = vshll.u32 %v1450, 16
    %v1482 = vor.u32 %v1479, %v1480
    %v1484 = vshrl.u32 %v1451, 16
    %v1486 = vrot.slane %v1484, 7
    %v1487 = vshll.u32 %v1451, 16
    %v1489 = vor.u32 %v1486, %v1487
    %v1491 = vshrl.u32 %v1452, 16
    %v1493 = vrot.slane %v1491, 7
    %v1494 = vshll.u32 %v1452, 16
    %v1496 = vor.u32 %v1493, %v1494
    %v1498 = vshrl.u32 %v1453, 16
    %v1500 = vrot.slane %v1498, 7
    %v1501 = vshll.u32 %v1453, 16
    %v1503 = vor.u32 %v1500, %v1501
    %v1505 = vshrl.u32 %v1454, 16
    %v1507 = vrot.slane %v1505, 7
    %v1508 = vshll.u32 %v1454, 16
    %v1510 = vor.u32 %v1507, %v1508
    %v1512 = vshrl.u32 %v1455, 16
    %v1514 = vrot.slane %v1512, 7
    %v1515 = vshll.u32 %v1455, 16
    %v1517 = vor.u32 %v1514, %v1515
    %v1519 = vshrl.u32 %v1456, 16
    %v1521 = vrot.slane %v1519, 7
    %v1522 = vshll.u32 %v1456, 16
    %v1524 = vor.u32 %v1521, %v1522
    %v1526 = vshrl.u32 %v1457, 16
    %v1528 = vrot.slane %v1526, 7
    %v1529 = vshll.u32 %v1457, 16
    %v1531 = vor.u32 %v1528, %v1529
    %v1533 = vshrl.u32 %v1458, 16
    %v1535 = vrot.slane %v1533, 7
    %v1536 = vshll.u32 %v1458, 16
    %v1538 = vor.u32 %v1535, %v1536
    %v1540 = vshrl.u32 %v1459, 16
    %v1542 = vrot.slane %v1540, 7
    %v1543 = vshll.u32 %v1459, 16
    %v1545 = vor.u32 %v1542, %v1543
    %v1547 = vshrl.u32 %v1460, 16
    %v1549 = vrot.slane %v1547, 7
    %v1550 = vshll.u32 %v1460, 16
    %v1552 = vor.u32 %v1549, %v1550
    %v1554 = vshrl.u32 %v1461, 16
    %v1556 = vrot.slane %v1554, 7
    %v1557 = vshll.u32 %v1461, 16
    %v1559 = vor.u32 %v1556, %v1557
    %1560 = vrot.lane.b32.xlu0 %v1468, 36
    %v1561 = vpop.permute.xlu0 %1560
    %1562 = vrot.lane.b32.xlu0 %v1475, 36
    %v1563 = vpop.permute.xlu0 %1562
    %1564 = vrot.lane.b32.xlu0 %v1482, 36
    %v1565 = vpop.permute.xlu0 %1564
    %1566 = vrot.lane.b32.xlu0 %v1489, 36
    %v1567 = vpop.permute.xlu0 %1566
    %1568 = vrot.lane.b32.xlu0 %v1496, 36
    %v1569 = vpop.permute.xlu0 %1568
    %1570 = vrot.lane.b32.xlu0 %v1503, 36
    %v1571 = vpop.permute.xlu0 %1570
    %1572 = vrot.lane.b32.xlu0 %v1510, 36
    %v1573 = vpop.permute.xlu0 %1572
    %1574 = vrot.lane.b32.xlu0 %v1517, 36
    %v1575 = vpop.permute.xlu0 %1574
    %1576 = vrot.lane.b32.xlu0 %v1524, 36
    %v1577 = vpop.permute.xlu0 %1576
    %1578 = vrot.lane.b32.xlu0 %v1531, 36
    %v1579 = vpop.permute.xlu0 %1578
    %1580 = vrot.lane.b32.xlu0 %v1538, 36
    %v1581 = vpop.permute.xlu0 %1580
    %1582 = vrot.lane.b32.xlu0 %v1545, 36
    %v1583 = vpop.permute.xlu0 %1582
    %1584 = vrot.lane.b32.xlu0 %v1552, 36
    %v1585 = vpop.permute.xlu0 %1584
    %1586 = vrot.lane.b32.xlu0 %v1559, 36
    %v1587 = vpop.permute.xlu0 %1586
    %vm1602 = vcmask 322848
    %vm1603 = vmand %vm1602, %vm611
    %v1604 = vld [vmem:[#allocation3] sm:$0xf]
    %v1605 = vsel %vm1603, %v1561, %v1604
    %1606 = vst [vmem:[#allocation3] sm:$0xf] %v1605
    %v1607 = vld [vmem:[#allocation3 + $0x4] sm:$0xf]
    %v1608 = vsel %vm1603, %v1563, %v1607
    %1609 = vst [vmem:[#allocation3 + $0x4] sm:$0xf] %v1608
    %v1610 = vld [vmem:[#allocation3 + $0x8] sm:$0xf]
    %v1611 = vsel %vm1603, %v1565, %v1610
    %1612 = vst [vmem:[#allocation3 + $0x8] sm:$0xf] %v1611
    %v1613 = vld [vmem:[#allocation3 + $0xc] sm:$0xf]
    %v1614 = vsel %vm1603, %v1567, %v1613
    %1615 = vst [vmem:[#allocation3 + $0xc] sm:$0xf] %v1614
    %v1616 = vld [vmem:[#allocation3 + $0x10] sm:$0xf]
    %v1617 = vsel %vm1603, %v1569, %v1616
    %1618 = vst [vmem:[#allocation3 + $0x10] sm:$0xf] %v1617
    %v1619 = vld [vmem:[#allocation3 + $0x14] sm:$0xf]
    %v1620 = vsel %vm1603, %v1571, %v1619
    %1621 = vst [vmem:[#allocation3 + $0x14] sm:$0xf] %v1620
    %v1622 = vld [vmem:[#allocation3 + $0x18] sm:$0xf]
    %v1623 = vsel %vm1603, %v1573, %v1622
    %1624 = vst [vmem:[#allocation3 + $0x18] sm:$0xf] %v1623
    %v1625 = vld [vmem:[#allocation3 + $0x20] sm:$0xf]
    %v1626 = vsel %vm1603, %v1575, %v1625
    %1627 = vst [vmem:[#allocation3 + $0x20] sm:$0xf] %v1626
    %v1628 = vld [vmem:[#allocation3 + $0x24] sm:$0xf]
    %v1629 = vsel %vm1603, %v1577, %v1628
    %1630 = vst [vmem:[#allocation3 + $0x24] sm:$0xf] %v1629
    %v1631 = vld [vmem:[#allocation3 + $0x28] sm:$0xf]
    %v1632 = vsel %vm1603, %v1579, %v1631
    %1633 = vst [vmem:[#allocation3 + $0x28] sm:$0xf] %v1632
    %v1634 = vld [vmem:[#allocation3 + $0x2c] sm:$0xf]
    %v1635 = vsel %vm1603, %v1581, %v1634
    %1636 = vst [vmem:[#allocation3 + $0x2c] sm:$0xf] %v1635
    %v1637 = vld [vmem:[#allocation3 + $0x30] sm:$0xf]
    %v1638 = vsel %vm1603, %v1583, %v1637
    %1639 = vst [vmem:[#allocation3 + $0x30] sm:$0xf] %v1638
    %v1640 = vld [vmem:[#allocation3 + $0x34] sm:$0xf]
    %v1641 = vsel %vm1603, %v1585, %v1640
    %1642 = vst [vmem:[#allocation3 + $0x34] sm:$0xf] %v1641
    %v1643 = vld [vmem:[#allocation3 + $0x38] sm:$0xf]
    %v1644 = vsel %vm1603, %v1587, %v1643
    %1645 = vst [vmem:[#allocation3 + $0x38] sm:$0xf] %v1644
    %v1646 = vld [vmem:[%s609] sm:$0xf]
    %v1647 = vld [vmem:[%s609 + $0x4] sm:$0xf]
    %v1648 = vld [vmem:[%s609 + $0x8] sm:$0xf]
    %v1649 = vld [vmem:[%s609 + $0xc] sm:$0xf]
    %v1650 = vld [vmem:[%s609 + $0x10] sm:$0xf]
    %v1651 = vld [vmem:[%s609 + $0x14] sm:$0xf]
    %v1652 = vld [vmem:[%s609 + $0x18] sm:$0xf]
    %v1653 = vld [vmem:[%s609 + $0x20] sm:$0xf]
    %v1654 = vld [vmem:[%s609 + $0x24] sm:$0xf]
    %v1655 = vld [vmem:[%s609 + $0x28] sm:$0xf]
    %v1656 = vld [vmem:[%s609 + $0x2c] sm:$0xf]
    %v1657 = vld [vmem:[%s609 + $0x30] sm:$0xf]
    %v1658 = vld [vmem:[%s609 + $0x34] sm:$0xf]
    %v1659 = vld [vmem:[%s609 + $0x38] sm:$0xf]
    %1674 = vrot.lane.b32.xlu0 %v1646, 40
    %v1675 = vpop.permute.xlu0 %1674
    %1676 = vrot.lane.b32.xlu0 %v1647, 40
    %v1677 = vpop.permute.xlu0 %1676
    %1678 = vrot.lane.b32.xlu0 %v1648, 40
    %v1679 = vpop.permute.xlu0 %1678
    %1680 = vrot.lane.b32.xlu0 %v1649, 40
    %v1681 = vpop.permute.xlu0 %1680
    %1682 = vrot.lane.b32.xlu0 %v1650, 40
    %v1683 = vpop.permute.xlu0 %1682
    %1684 = vrot.lane.b32.xlu0 %v1651, 40
    %v1685 = vpop.permute.xlu0 %1684
    %1686 = vrot.lane.b32.xlu0 %v1652, 40
    %v1687 = vpop.permute.xlu0 %1686
    %1688 = vrot.lane.b32.xlu0 %v1653, 40
    %v1689 = vpop.permute.xlu0 %1688
    %1690 = vrot.lane.b32.xlu0 %v1654, 40
    %v1691 = vpop.permute.xlu0 %1690
    %1692 = vrot.lane.b32.xlu0 %v1655, 40
    %v1693 = vpop.permute.xlu0 %1692
    %1694 = vrot.lane.b32.xlu0 %v1656, 40
    %v1695 = vpop.permute.xlu0 %1694
    %1696 = vrot.lane.b32.xlu0 %v1657, 40
    %v1697 = vpop.permute.xlu0 %1696
    %1698 = vrot.lane.b32.xlu0 %v1658, 40
    %v1699 = vpop.permute.xlu0 %1698
    %1700 = vrot.lane.b32.xlu0 %v1659, 40
    %v1701 = vpop.permute.xlu0 %1700
    %1716 = vst.msk [vmem:[#allocation3] sm:$0xf] %vm350, %v1675
    %1717 = vst.msk [vmem:[#allocation3 + $0x4] sm:$0xf] %vm350, %v1677
    %1718 = vst.msk [vmem:[#allocation3 + $0x8] sm:$0xf] %vm350, %v1679
    %1719 = vst.msk [vmem:[#allocation3 + $0xc] sm:$0xf] %vm350, %v1681
    %1720 = vst.msk [vmem:[#allocation3 + $0x10] sm:$0xf] %vm350, %v1683
    %1721 = vst.msk [vmem:[#allocation3 + $0x14] sm:$0xf] %vm350, %v1685
    %1722 = vst.msk [vmem:[#allocation3 + $0x18] sm:$0xf] %vm350, %v1687
    %1723 = vst.msk [vmem:[#allocation3 + $0x20] sm:$0xf] %vm350, %v1689
    %1724 = vst.msk [vmem:[#allocation3 + $0x24] sm:$0xf] %vm350, %v1691
    %1725 = vst.msk [vmem:[#allocation3 + $0x28] sm:$0xf] %vm350, %v1693
    %1726 = vst.msk [vmem:[#allocation3 + $0x2c] sm:$0xf] %vm350, %v1695
    %1727 = vst.msk [vmem:[#allocation3 + $0x30] sm:$0xf] %vm350, %v1697
    %1728 = vst.msk [vmem:[#allocation3 + $0x34] sm:$0xf] %vm350, %v1699
    %1729 = vst.msk [vmem:[#allocation3 + $0x38] sm:$0xf] %vm350, %v1701
    %v1730 = vld [vmem:[%s609] sm:$0xf]
    %v1731 = vld [vmem:[%s609 + $0x4] sm:$0xf]
    %v1732 = vld [vmem:[%s609 + $0x8] sm:$0xf]
    %v1733 = vld [vmem:[%s609 + $0xc] sm:$0xf]
    %v1734 = vld [vmem:[%s609 + $0x10] sm:$0xf]
    %v1735 = vld [vmem:[%s609 + $0x14] sm:$0xf]
    %v1736 = vld [vmem:[%s609 + $0x18] sm:$0xf]
    %v1737 = vld [vmem:[%s609 + $0x20] sm:$0xf]
    %v1738 = vld [vmem:[%s609 + $0x24] sm:$0xf]
    %v1739 = vld [vmem:[%s609 + $0x28] sm:$0xf]
    %v1740 = vld [vmem:[%s609 + $0x2c] sm:$0xf]
    %v1741 = vld [vmem:[%s609 + $0x30] sm:$0xf]
    %v1742 = vld [vmem:[%s609 + $0x34] sm:$0xf]
    %v1743 = vld [vmem:[%s609 + $0x38] sm:$0xf]
    %v1745 = vshrl.u32 %v1730, 16
    %v1747 = vrot.slane %v1745, 4
    %v1748 = vshll.u32 %v1730, 16
    %v1750 = vrot.slane %v1748, 5
    %v1751 = vor.u32 %v1747, %v1750
    %v1752 = vrot.slane %v1751, 4
    %v1754 = vshrl.u32 %v1731, 16
    %v1756 = vrot.slane %v1754, 4
    %v1757 = vshll.u32 %v1731, 16
    %v1759 = vrot.slane %v1757, 5
    %v1760 = vor.u32 %v1756, %v1759
    %v1761 = vrot.slane %v1760, 4
    %v1763 = vshrl.u32 %v1732, 16
    %v1765 = vrot.slane %v1763, 4
    %v1766 = vshll.u32 %v1732, 16
    %v1768 = vrot.slane %v1766, 5
    %v1769 = vor.u32 %v1765, %v1768
    %v1770 = vrot.slane %v1769, 4
    %v1772 = vshrl.u32 %v1733, 16
    %v1774 = vrot.slane %v1772, 4
    %v1775 = vshll.u32 %v1733, 16
    %v1777 = vrot.slane %v1775, 5
    %v1778 = vor.u32 %v1774, %v1777
    %v1779 = vrot.slane %v1778, 4
    %v1781 = vshrl.u32 %v1734, 16
    %v1783 = vrot.slane %v1781, 4
    %v1784 = vshll.u32 %v1734, 16
    %v1786 = vrot.slane %v1784, 5
    %v1787 = vor.u32 %v1783, %v1786
    %v1788 = vrot.slane %v1787, 4
    %v1790 = vshrl.u32 %v1735, 16
    %v1792 = vrot.slane %v1790, 4
    %v1793 = vshll.u32 %v1735, 16
    %v1795 = vrot.slane %v1793, 5
    %v1796 = vor.u32 %v1792, %v1795
    %v1797 = vrot.slane %v1796, 4
    %v1799 = vshrl.u32 %v1736, 16
    %v1801 = vrot.slane %v1799, 4
    %v1802 = vshll.u32 %v1736, 16
    %v1804 = vrot.slane %v1802, 5
    %v1805 = vor.u32 %v1801, %v1804
    %v1806 = vrot.slane %v1805, 4
    %v1808 = vshrl.u32 %v1737, 16
    %v1810 = vrot.slane %v1808, 4
    %v1811 = vshll.u32 %v1737, 16
    %v1813 = vrot.slane %v1811, 5
    %v1814 = vor.u32 %v1810, %v1813
    %v1815 = vrot.slane %v1814, 4
    %v1817 = vshrl.u32 %v1738, 16
    %v1819 = vrot.slane %v1817, 4
    %v1820 = vshll.u32 %v1738, 16
    %v1822 = vrot.slane %v1820, 5
    %v1823 = vor.u32 %v1819, %v1822
    %v1824 = vrot.slane %v1823, 4
    %v1826 = vshrl.u32 %v1739, 16
    %v1828 = vrot.slane %v1826, 4
    %v1829 = vshll.u32 %v1739, 16
    %v1831 = vrot.slane %v1829, 5
    %v1832 = vor.u32 %v1828, %v1831
    %v1833 = vrot.slane %v1832, 4
    %v1835 = vshrl.u32 %v1740, 16
    %v1837 = vrot.slane %v1835, 4
    %v1838 = vshll.u32 %v1740, 16
    %v1840 = vrot.slane %v1838, 5
    %v1841 = vor.u32 %v1837, %v1840
    %v1842 = vrot.slane %v1841, 4
    %v1844 = vshrl.u32 %v1741, 16
    %v1846 = vrot.slane %v1844, 4
    %v1847 = vshll.u32 %v1741, 16
    %v1849 = vrot.slane %v1847, 5
    %v1850 = vor.u32 %v1846, %v1849
    %v1851 = vrot.slane %v1850, 4
    %v1853 = vshrl.u32 %v1742, 16
    %v1855 = vrot.slane %v1853, 4
    %v1856 = vshll.u32 %v1742, 16
    %v1858 = vrot.slane %v1856, 5
    %v1859 = vor.u32 %v1855, %v1858
    %v1860 = vrot.slane %v1859, 4
    %v1862 = vshrl.u32 %v1743, 16
    %v1864 = vrot.slane %v1862, 4
    %v1865 = vshll.u32 %v1743, 16
    %v1867 = vrot.slane %v1865, 5
    %v1868 = vor.u32 %v1864, %v1867
    %v1869 = vrot.slane %v1868, 4
    %1870 = vrot.lane.b32.xlu0 %v1752, 44
    %v1871 = vpop.permute.xlu0 %1870
    %1872 = vrot.lane.b32.xlu0 %v1761, 44
    %v1873 = vpop.permute.xlu0 %1872
    %1874 = vrot.lane.b32.xlu0 %v1770, 44
    %v1875 = vpop.permute.xlu0 %1874
    %1876 = vrot.lane.b32.xlu0 %v1779, 44
    %v1877 = vpop.permute.xlu0 %1876
    %1878 = vrot.lane.b32.xlu0 %v1788, 44
    %v1879 = vpop.permute.xlu0 %1878
    %1880 = vrot.lane.b32.xlu0 %v1797, 44
    %v1881 = vpop.permute.xlu0 %1880
    %1882 = vrot.lane.b32.xlu0 %v1806, 44
    %v1883 = vpop.permute.xlu0 %1882
    %1884 = vrot.lane.b32.xlu0 %v1815, 44
    %v1885 = vpop.permute.xlu0 %1884
    %1886 = vrot.lane.b32.xlu0 %v1824, 44
    %v1887 = vpop.permute.xlu0 %1886
    %1888 = vrot.lane.b32.xlu0 %v1833, 44
    %v1889 = vpop.permute.xlu0 %1888
    %1890 = vrot.lane.b32.xlu0 %v1842, 44
    %v1891 = vpop.permute.xlu0 %1890
    %1892 = vrot.lane.b32.xlu0 %v1851, 44
    %v1893 = vpop.permute.xlu0 %1892
    %1894 = vrot.lane.b32.xlu0 %v1860, 44
    %v1895 = vpop.permute.xlu0 %1894
    %1896 = vrot.lane.b32.xlu0 %v1869, 44
    %v1897 = vpop.permute.xlu0 %1896
    %vm1912 = vcmask 388448
    %vm1913 = vmand %vm1912, %vm922
    %v1914 = vld [vmem:[#allocation3] sm:$0xf]
    %v1915 = vsel %vm1913, %v1871, %v1914
    %1916 = vst [vmem:[#allocation3] sm:$0xf] %v1915
    %v1917 = vld [vmem:[#allocation3 + $0x4] sm:$0xf]
    %v1918 = vsel %vm1913, %v1873, %v1917
    %1919 = vst [vmem:[#allocation3 + $0x4] sm:$0xf] %v1918
    %v1920 = vld [vmem:[#allocation3 + $0x8] sm:$0xf]
    %v1921 = vsel %vm1913, %v1875, %v1920
    %1922 = vst [vmem:[#allocation3 + $0x8] sm:$0xf] %v1921
    %v1923 = vld [vmem:[#allocation3 + $0xc] sm:$0xf]
    %v1924 = vsel %vm1913, %v1877, %v1923
    %1925 = vst [vmem:[#allocation3 + $0xc] sm:$0xf] %v1924
    %v1926 = vld [vmem:[#allocation3 + $0x10] sm:$0xf]
    %v1927 = vsel %vm1913, %v1879, %v1926
    %1928 = vst [vmem:[#allocation3 + $0x10] sm:$0xf] %v1927
    %v1929 = vld [vmem:[#allocation3 + $0x14] sm:$0xf]
    %v1930 = vsel %vm1913, %v1881, %v1929
    %1931 = vst [vmem:[#allocation3 + $0x14] sm:$0xf] %v1930
    %v1932 = vld [vmem:[#allocation3 + $0x18] sm:$0xf]
    %v1933 = vsel %vm1913, %v1883, %v1932
    %1934 = vst [vmem:[#allocation3 + $0x18] sm:$0xf] %v1933
    %v1935 = vld [vmem:[#allocation3 + $0x20] sm:$0xf]
    %v1936 = vsel %vm1913, %v1885, %v1935
    %1937 = vst [vmem:[#allocation3 + $0x20] sm:$0xf] %v1936
    %v1938 = vld [vmem:[#allocation3 + $0x24] sm:$0xf]
    %v1939 = vsel %vm1913, %v1887, %v1938
    %1940 = vst [vmem:[#allocation3 + $0x24] sm:$0xf] %v1939
    %v1941 = vld [vmem:[#allocation3 + $0x28] sm:$0xf]
    %v1942 = vsel %vm1913, %v1889, %v1941
    %1943 = vst [vmem:[#allocation3 + $0x28] sm:$0xf] %v1942
    %v1944 = vld [vmem:[#allocation3 + $0x2c] sm:$0xf]
    %v1945 = vsel %vm1913, %v1891, %v1944
    %1946 = vst [vmem:[#allocation3 + $0x2c] sm:$0xf] %v1945
    %v1947 = vld [vmem:[#allocation3 + $0x30] sm:$0xf]
    %v1948 = vsel %vm1913, %v1893, %v1947
    %1949 = vst [vmem:[#allocation3 + $0x30] sm:$0xf] %v1948
    %v1950 = vld [vmem:[#allocation3 + $0x34] sm:$0xf]
    %v1951 = vsel %vm1913, %v1895, %v1950
    %1952 = vst [vmem:[#allocation3 + $0x34] sm:$0xf] %v1951
    %v1953 = vld [vmem:[#allocation3 + $0x38] sm:$0xf]
    %v1954 = vsel %vm1913, %v1897, %v1953
    %1955 = vst [vmem:[#allocation3 + $0x38] sm:$0xf] %v1954
    %v1956 = vld [vmem:[#allocation3] sm:$0xf]
    %v1957 = vld [vmem:[#allocation3 + $0x4] sm:$0xf]
    %v1958 = vld [vmem:[#allocation3 + $0x8] sm:$0xf]
    %v1959 = vld [vmem:[#allocation3 + $0xc] sm:$0xf]
    %v1960 = vld [vmem:[#allocation3 + $0x10] sm:$0xf]
    %v1961 = vld [vmem:[#allocation3 + $0x14] sm:$0xf]
    %v1962 = vld [vmem:[#allocation3 + $0x18] sm:$0xf]
    %v1963 = vld [vmem:[#allocation3 + $0x1c] sm:$0xf]
    %v1964 = vld [vmem:[#allocation3 + $0x20] sm:$0xf]
    %v1965 = vld [vmem:[#allocation3 + $0x24] sm:$0xf]
    %v1966 = vld [vmem:[#allocation3 + $0x28] sm:$0xf]
    %v1967 = vld [vmem:[#allocation3 + $0x2c] sm:$0xf]
    %v1968 = vld [vmem:[#allocation3 + $0x30] sm:$0xf]
    %v1969 = vld [vmem:[#allocation3 + $0x34] sm:$0xf]
    %v1970 = vld [vmem:[#allocation3 + $0x38] sm:$0xf]
    %v1971 = vld [vmem:[#allocation3 + $0x3c] sm:$0xf]
    %v1972 = vld [vmem:[%s1] sm:$0xf]
    %v1973 = vld [vmem:[%s1 + $0x4] sm:$0xf]
    %v1974 = vld [vmem:[%s1 + $0x8] sm:$0xf]
    %v1975 = vld [vmem:[%s1 + $0xc] sm:$0xf]
    %v1976 = vld [vmem:[%s1 + $0x10] sm:$0xf]
    %v1977 = vld [vmem:[%s1 + $0x14] sm:$0xf]
    %v1978 = vld [vmem:[%s1 + $0x18] sm:$0xf]
    %v1979 = vld [vmem:[%s1 + $0x1c] sm:$0xf]
    %v1980 = vld [vmem:[%s1 + $0x20] sm:$0xf]
    %v1981 = vld [vmem:[%s1 + $0x24] sm:$0xf]
    %v1982 = vld [vmem:[%s1 + $0x28] sm:$0xf]
    %v1983 = vld [vmem:[%s1 + $0x2c] sm:$0xf]
    %v1984 = vld [vmem:[%s1 + $0x30] sm:$0xf]
    %v1985 = vld [vmem:[%s1 + $0x34] sm:$0xf]
    %v1986 = vld [vmem:[%s1 + $0x38] sm:$0xf]
    %v1987 = vld [vmem:[%s1 + $0x3c] sm:$0xf]
    %v1988 = vld [vmem:[%s2] sm:$0x1]
    %v1990 = vlaneseq
    %v1991 = vshrl.u32 %v1990, 7
    %v1992 = vsub.s32 0, %v1991
    %v1993 = vrot.slane %v1988, %v1992
    %v2011 = vunpack.c.l.b16 %v1956
    %v2012 = vunpack.c.l.b16 %v1957
    %v2013 = vunpack.c.l.b16 %v1958
    %v2014 = vunpack.c.l.b16 %v1959
    %v2015 = vunpack.c.l.b16 %v1960
    %v2016 = vunpack.c.l.b16 %v1961
    %v2017 = vunpack.c.l.b16 %v1962
    %v2018 = vunpack.c.l.b16 %v1963
    %v2019 = vunpack.c.l.b16 %v1964
    %v2020 = vunpack.c.l.b16 %v1965
    %v2021 = vunpack.c.l.b16 %v1966
    %v2022 = vunpack.c.l.b16 %v1967
    %v2023 = vunpack.c.l.b16 %v1968
    %v2024 = vunpack.c.l.b16 %v1969
    %v2025 = vunpack.c.l.b16 %v1970
    %v2026 = vunpack.c.l.b16 %v1971
    %v2027 = vpack.c.b16 %v2012, %v2011
    %v2028 = vpack.c.b16 %v2014, %v2013
    %v2029 = vpack.c.b16 %v2016, %v2015
    %v2030 = vpack.c.b16 %v2018, %v2017
    %v2031 = vpack.c.b16 %v2020, %v2019
    %v2032 = vpack.c.b16 %v2022, %v2021
    %v2033 = vpack.c.b16 %v2024, %v2023
    %v2034 = vpack.c.b16 %v2026, %v2025
    %v2059 = vunpack.c.l.b16 %v1972
    %v2060 = vunpack.c.l.b16 %v1973
    %v2061 = vunpack.c.l.b16 %v1974
    %v2062 = vunpack.c.l.b16 %v1975
    %v2063 = vunpack.c.l.b16 %v1976
    %v2064 = vunpack.c.l.b16 %v1977
    %v2065 = vunpack.c.l.b16 %v1978
    %v2066 = vunpack.c.l.b16 %v1979
    %v2067 = vunpack.c.l.b16 %v1980
    %v2068 = vunpack.c.l.b16 %v1981
    %v2069 = vunpack.c.l.b16 %v1982
    %v2070 = vunpack.c.l.b16 %v1983
    %v2071 = vunpack.c.l.b16 %v1984
    %v2072 = vunpack.c.l.b16 %v1985
    %v2073 = vunpack.c.l.b16 %v1986
    %v2074 = vunpack.c.l.b16 %v1987
    %v2075 = vpack.c.b16 %v2060, %v2059
    %v2076 = vpack.c.b16 %v2062, %v2061
    %v2077 = vpack.c.b16 %v2064, %v2063
    %v2078 = vpack.c.b16 %v2066, %v2065
    %v2079 = vpack.c.b16 %v2068, %v2067
    %v2080 = vpack.c.b16 %v2070, %v2069
    %v2081 = vpack.c.b16 %v2072, %v2071
    %v2082 = vpack.c.b16 %v2074, %v2073
    %2091 = vmatprep.subr.bf16.mxu0 0
    %2092 = vmatpush1.bf16.msra.mxu0 %v2075
    %2093 = vmatprep.subr.bf16.mxu0 0
    %2094 = vmatpush1.bf16.msra.mxu0 %v2076
    %2095 = vmatprep.subr.bf16.mxu0 0
    %2096 = vmatpush1.bf16.msra.mxu0 %v2077
    %2097 = vmatprep.subr.bf16.mxu0 0
    %2098 = vmatpush1.bf16.msra.mxu0 %v2078
    %2099 = vmatprep.subr.bf16.mxu0 0
    %2100 = vmatpush1.bf16.msra.mxu0 %v2079
    %2101 = vmatprep.subr.bf16.mxu0 0
    %2102 = vmatpush1.bf16.msra.mxu0 %v2080
    %2103 = vmatprep.subr.bf16.mxu0 0
    %2104 = vmatpush1.bf16.msra.mxu0 %v2081
    %2105 = vmatprep.subr.bf16.mxu0 0
    %2106 = vmatpush1.bf16.msra.mxu0 %v2082
    %2107 = vmatprep.subr.bf16.mxu0 0
    %2108 = vmatpush1.bf16.msra.mxu0 0
    %2109 = vmatprep.subr.bf16.mxu0 0
    %2110 = vmatpush1.bf16.msra.mxu0 0
    %2111 = vmatprep.subr.bf16.mxu0 0
    %2112 = vmatpush1.bf16.msra.mxu0 0
    %2113 = vmatprep.subr.bf16.mxu0 0
    %2114 = vmatpush1.bf16.msra.mxu0 0
    %2115 = vmatprep.subr.bf16.mxu0 0
    %2116 = vmatpush1.bf16.msra.mxu0 0
    %2117 = vmatprep.subr.bf16.mxu0 0
    %2118 = vmatpush1.bf16.msra.mxu0 0
    %2119 = vmatprep.subr.bf16.mxu0 0
    %2120 = vmatpush1.bf16.msra.mxu0 0
    %2121 = vmatprep.subr.bf16.mxu0 0
    %2122 = vmatpush1.bf16.msra.mxu0 0
    %2123 = vmatprep.mubr.bf16.mxu0 0
    %2124 = vmatmul.mubr.bf16.gmra.mrb[0].mxu0 %v2027
    %v2125 = vpop.f32.mrb[0].mxu0
    %v2126 = vadd.f32 %v1993, %v2125
    %v2127 = vpop.f32.mrb[0].mxu0
    %v2128 = vpop.f32.mrb[0].mxu0
    %v2129 = vadd.f32 %v1993, %v2128
    %v2130 = vpop.f32.mrb[0].mxu0
    %2131 = vmatprep.mubr.bf16.mxu0 0
    %2132 = vmatmul.mubr.bf16.gmra.mrb[0].mxu0 %v2028
    %v2133 = vpop.f32.mrb[0].mxu0
    %v2134 = vadd.f32 %v1993, %v2133
    %v2135 = vpop.f32.mrb[0].mxu0
    %v2136 = vpop.f32.mrb[0].mxu0
    %v2137 = vadd.f32 %v1993, %v2136
    %v2138 = vpop.f32.mrb[0].mxu0
    %2139 = vmatprep.mubr.bf16.mxu0 0
    %2140 = vmatmul.mubr.bf16.gmra.mrb[0].mxu0 %v2029
    %v2141 = vpop.f32.mrb[0].mxu0
    %v2142 = vadd.f32 %v1993, %v2141
    %v2143 = vpop.f32.mrb[0].mxu0
    %v2144 = vpop.f32.mrb[0].mxu0
    %v2145 = vadd.f32 %v1993, %v2144
    %v2146 = vpop.f32.mrb[0].mxu0
    %2147 = vmatprep.mubr.bf16.mxu0 0
    %2148 = vmatmul.mubr.bf16.gmra.mrb[0].mxu0 %v2030
    %v2149 = vpop.f32.mrb[0].mxu0
    %v2150 = vadd.f32 %v1993, %v2149
    %v2151 = vpop.f32.mrb[0].mxu0
    %v2152 = vpop.f32.mrb[0].mxu0
    %v2153 = vadd.f32 %v1993, %v2152
    %v2154 = vpop.f32.mrb[0].mxu0
    %2155 = vmatprep.mubr.bf16.mxu0 0
    %2156 = vmatmul.mubr.bf16.gmra.mrb[0].mxu0 %v2031
    %v2157 = vpop.f32.mrb[0].mxu0
    %v2158 = vadd.f32 %v1993, %v2157
    %v2159 = vpop.f32.mrb[0].mxu0
    %v2160 = vpop.f32.mrb[0].mxu0
    %v2161 = vadd.f32 %v1993, %v2160
    %v2162 = vpop.f32.mrb[0].mxu0
    %2163 = vmatprep.mubr.bf16.mxu0 0
    %2164 = vmatmul.mubr.bf16.gmra.mrb[0].mxu0 %v2032
    %v2165 = vpop.f32.mrb[0].mxu0
    %v2166 = vadd.f32 %v1993, %v2165
    %v2167 = vpop.f32.mrb[0].mxu0
    %v2168 = vpop.f32.mrb[0].mxu0
    %v2169 = vadd.f32 %v1993, %v2168
    %v2170 = vpop.f32.mrb[0].mxu0
    %2171 = vmatprep.mubr.bf16.mxu0 0
    %2172 = vmatmul.mubr.bf16.gmra.mrb[0].mxu0 %v2033
    %v2173 = vpop.f32.mrb[0].mxu0
    %v2174 = vadd.f32 %v1993, %v2173
    %v2175 = vpop.f32.mrb[0].mxu0
    %v2176 = vpop.f32.mrb[0].mxu0
    %v2177 = vadd.f32 %v1993, %v2176
    %v2178 = vpop.f32.mrb[0].mxu0
    %2179 = vmatprep.mubr.bf16.mxu0 0
    %2180 = vmatmul.mubr.bf16.gmra.mrb[0].mxu0 %v2034
    %v2181 = vpop.f32.mrb[0].mxu0
    %v2182 = vadd.f32 %v1993, %v2181
    %v2183 = vpop.f32.mrb[0].mxu0
    %v2184 = vpop.f32.mrb[0].mxu0
    %v2185 = vadd.f32 %v1993, %v2184
    %v2186 = vpop.f32.mrb[0].mxu0
    %2187 = vdwg.mxu0
    %v2188 = vmax.f32 %v2126, 0.0
    %v2189 = vmax.f32 %v2129, 0.0
    %v2190 = vmax.f32 %v2134, 0.0
    %v2191 = vmax.f32 %v2137, 0.0
    %v2192 = vmax.f32 %v2142, 0.0
    %v2193 = vmax.f32 %v2145, 0.0
    %v2194 = vmax.f32 %v2150, 0.0
    %v2195 = vmax.f32 %v2153, 0.0
    %v2196 = vmax.f32 %v2158, 0.0
    %v2197 = vmax.f32 %v2161, 0.0
    %v2198 = vmax.f32 %v2166, 0.0
    %v2199 = vmax.f32 %v2169, 0.0
    %v2200 = vmax.f32 %v2174, 0.0
    %v2201 = vmax.f32 %v2177, 0.0
    %v2202 = vmax.f32 %v2182, 0.0
    %v2203 = vmax.f32 %v2185, 0.0
    %v2204 = vpack.c.bf16 %v2189, %v2188
    %v2205 = vpack.c.bf16 %v2191, %v2190
    %v2206 = vpack.c.bf16 %v2193, %v2192
    %v2207 = vpack.c.bf16 %v2195, %v2194
    %v2208 = vpack.c.bf16 %v2197, %v2196
    %v2209 = vpack.c.bf16 %v2199, %v2198
    %v2210 = vpack.c.bf16 %v2201, %v2200
    %v2211 = vpack.c.bf16 %v2203, %v2202
    %v2212 = vld [vmem:[%s3] sm:$0xf]
    %v2213 = vld [vmem:[%s3 + $0x4] sm:$0xf]
    %v2214 = vld [vmem:[%s3 + $0x8] sm:$0xf]
    %v2215 = vld [vmem:[%s3 + $0xc] sm:$0xf]
    %v2220 = vunpack.c.l.b16 %v2212
    %v2221 = vunpack.c.l.b16 %v2213
    %v2222 = vunpack.c.l.b16 %v2214
    %v2223 = vunpack.c.l.b16 %v2215
    %v2224 = vpack.c.b16 %v2221, %v2220
    %v2225 = vpack.c.b16 %v2223, %v2222
    %vm2228 = vcmask 261120
    %v2230 = vsel %vm2228, %v2204, 0
    %v2233 = vsel %vm2228, %v2205, 0
    %v2236 = vsel %vm2228, %v2206, 0
    %v2239 = vsel %vm2228, %v2207, 0
    %v2242 = vsel %vm2228, %v2208, 0
    %v2245 = vsel %vm2228, %v2209, 0
    %v2248 = vsel %vm2228, %v2210, 0
    %v2251 = vsel %vm2228, %v2211, 0
    %2253 = vmatprep.subr.bf16.mxu0 0
    %2254 = vmatpush1.bf16.msra.mxu0 %v2224
    %2255 = vmatprep.subr.bf16.mxu0 0
    %2256 = vmatpush1.bf16.msra.mxu0 %v2225
    %2257 = vmatprep.subr.bf16.mxu0 0
    %2258 = vmatpush1.bf16.msra.mxu0 0
    %2259 = vmatprep.subr.bf16.mxu0 0
    %2260 = vmatpush1.bf16.msra.mxu0 0
    %2261 = vmatprep.subr.bf16.mxu0 0
    %2262 = vmatpush1.bf16.msra.mxu0 0
    %2263 = vmatprep.subr.bf16.mxu0 0
    %2264 = vmatpush1.bf16.msra.mxu0 0
    %2265 = vmatprep.subr.bf16.mxu0 0
    %2266 = vmatpush1.bf16.msra.mxu0 0
    %2267 = vmatprep.subr.bf16.mxu0 0
    %2268 = vmatpush1.bf16.msra.mxu0 0
    %2269 = vmatprep.subr.bf16.mxu0 0
    %2270 = vmatpush1.bf16.msra.mxu0 0
    %2271 = vmatprep.subr.bf16.mxu0 0
    %2272 = vmatpush1.bf16.msra.mxu0 0
    %2273 = vmatprep.subr.bf16.mxu0 0
    %2274 = vmatpush1.bf16.msra.mxu0 0
    %2275 = vmatprep.subr.bf16.mxu0 0
    %2276 = vmatpush1.bf16.msra.mxu0 0
    %2277 = vmatprep.subr.bf16.mxu0 0
    %2278 = vmatpush1.bf16.msra.mxu0 0
    %2279 = vmatprep.subr.bf16.mxu0 0
    %2280 = vmatpush1.bf16.msra.mxu0 0
    %2281 = vmatprep.subr.bf16.mxu0 0
    %2282 = vmatpush1.bf16.msra.mxu0 0
    %2283 = vmatprep.subr.bf16.mxu0 0
    %2284 = vmatpush1.bf16.msra.mxu0 0
    %2285 = vmatprep.mubr.bf16.mxu0 0
    %2286 = vmatmul.mubr.bf16.gmra.mrb[0].mxu0 %v2230
    %v2287 = vpop.f32.mrb[0].mxu0
    %v2288 = vadd.f32 0.0, %v2287
    %v2289 = vpop.f32.mrb[0].mxu0
    %v2290 = vpop.f32.mrb[0].mxu0
    %v2291 = vadd.f32 0.0, %v2290
    %v2292 = vpop.f32.mrb[0].mxu0
    %2293 = vmatprep.mubr.bf16.mxu0 0
    %2294 = vmatmul.mubr.bf16.gmra.mrb[0].mxu0 %v2233
    %v2295 = vpop.f32.mrb[0].mxu0
    %v2296 = vadd.f32 0.0, %v2295
    %v2297 = vpop.f32.mrb[0].mxu0
    %v2298 = vpop.f32.mrb[0].mxu0
    %v2299 = vadd.f32 0.0, %v2298
    %v2300 = vpop.f32.mrb[0].mxu0
    %2301 = vmatprep.mubr.bf16.mxu0 0
    %2302 = vmatmul.mubr.bf16.gmra.mrb[0].mxu0 %v2236
    %v2303 = vpop.f32.mrb[0].mxu0
    %v2304 = vadd.f32 0.0, %v2303
    %v2305 = vpop.f32.mrb[0].mxu0
    %v2306 = vpop.f32.mrb[0].mxu0
    %v2307 = vadd.f32 0.0, %v2306
    %v2308 = vpop.f32.mrb[0].mxu0
    %2309 = vmatprep.mubr.bf16.mxu0 0
    %2310 = vmatmul.mubr.bf16.gmra.mrb[0].mxu0 %v2239
    %v2311 = vpop.f32.mrb[0].mxu0
    %v2312 = vadd.f32 0.0, %v2311
    %v2313 = vpop.f32.mrb[0].mxu0
    %v2314 = vpop.f32.mrb[0].mxu0
    %v2315 = vadd.f32 0.0, %v2314
    %v2316 = vpop.f32.mrb[0].mxu0
    %2317 = vmatprep.mubr.bf16.mxu0 0
    %2318 = vmatmul.mubr.bf16.gmra.mrb[0].mxu0 %v2242
    %v2319 = vpop.f32.mrb[0].mxu0
    %v2320 = vadd.f32 0.0, %v2319
    %v2321 = vpop.f32.mrb[0].mxu0
    %v2322 = vpop.f32.mrb[0].mxu0
    %v2323 = vadd.f32 0.0, %v2322
    %v2324 = vpop.f32.mrb[0].mxu0
    %2325 = vmatprep.mubr.bf16.mxu0 0
    %2326 = vmatmul.mubr.bf16.gmra.mrb[0].mxu0 %v2245
    %v2327 = vpop.f32.mrb[0].mxu0
    %v2328 = vadd.f32 0.0, %v2327
    %v2329 = vpop.f32.mrb[0].mxu0
    %v2330 = vpop.f32.mrb[0].mxu0
    %v2331 = vadd.f32 0.0, %v2330
    %v2332 = vpop.f32.mrb[0].mxu0
    %2333 = vmatprep.mubr.bf16.mxu0 0
    %2334 = vmatmul.mubr.bf16.gmra.mrb[0].mxu0 %v2248
    %v2335 = vpop.f32.mrb[0].mxu0
    %v2336 = vadd.f32 0.0, %v2335
    %v2337 = vpop.f32.mrb[0].mxu0
    %v2338 = vpop.f32.mrb[0].mxu0
    %v2339 = vadd.f32 0.0, %v2338
    %v2340 = vpop.f32.mrb[0].mxu0
    %2341 = vmatprep.mubr.bf16.mxu0 0
    %2342 = vmatmul.mubr.bf16.gmra.mrb[0].mxu0 %v2251
    %v2343 = vpop.f32.mrb[0].mxu0
    %v2344 = vadd.f32 0.0, %v2343
    %v2345 = vpop.f32.mrb[0].mxu0
    %v2346 = vpop.f32.mrb[0].mxu0
    %v2347 = vadd.f32 0.0, %v2346
    %v2348 = vpop.f32.mrb[0].mxu0
    %2349 = vdwg.mxu0
    %v2350 = vld [vmem:[#allocation2] sm:$0xff]
    %v2351 = vld [vmem:[#allocation2 + $0x8] sm:$0xff]
    %v2352 = vld [vmem:[#allocation2 + $0x10] sm:$0xff]
    %v2353 = vld [vmem:[#allocation2 + $0x18] sm:$0xff]
    %v2354 = vld [vmem:[#allocation2 + $0x20] sm:$0xff]
    %v2355 = vld [vmem:[#allocation2 + $0x28] sm:$0xff]
    %v2356 = vld [vmem:[#allocation2 + $0x30] sm:$0xff]
    %v2357 = vld [vmem:[#allocation2 + $0x38] sm:$0xff]
    %v2358 = vld [vmem:[#allocation2 + $0x40] sm:$0xff]
    %v2359 = vld [vmem:[#allocation2 + $0x48] sm:$0xff]
    %v2360 = vld [vmem:[#allocation2 + $0x50] sm:$0xff]
    %v2361 = vld [vmem:[#allocation2 + $0x58] sm:$0xff]
    %v2362 = vld [vmem:[#allocation2 + $0x60] sm:$0xff]
    %v2363 = vld [vmem:[#allocation2 + $0x68] sm:$0xff]
    %v2364 = vld [vmem:[#allocation2 + $0x70] sm:$0xff]
    %v2365 = vld [vmem:[#allocation2 + $0x78] sm:$0xff]
    %v2366 = vadd.f32 %v2350, %v2288
    %v2367 = vadd.f32 %v2351, %v2291
    %v2368 = vadd.f32 %v2352, %v2296
    %v2369 = vadd.f32 %v2353, %v2299
    %v2370 = vadd.f32 %v2354, %v2304
    %v2371 = vadd.f32 %v2355, %v2307
    %v2372 = vadd.f32 %v2356, %v2312
    %v2373 = vadd.f32 %v2357, %v2315
    %v2374 = vadd.f32 %v2358, %v2320
    %v2375 = vadd.f32 %v2359, %v2323
    %v2376 = vadd.f32 %v2360, %v2328
    %v2377 = vadd.f32 %v2361, %v2331
    %v2378 = vadd.f32 %v2362, %v2336
    %v2379 = vadd.f32 %v2363, %v2339
    %v2380 = vadd.f32 %v2364, %v2344
    %v2381 = vadd.f32 %v2365, %v2347
    %2382 = vst.msk [vmem:[#allocation2] sm:$0xff] %vm51, %v2366
    %2383 = vst.msk [vmem:[#allocation2 + $0x8] sm:$0xff] %vm51, %v2367
    %2384 = vst.msk [vmem:[#allocation2 + $0x10] sm:$0xff] %vm51, %v2368
    %2385 = vst.msk [vmem:[#allocation2 + $0x18] sm:$0xff] %vm51, %v2369
    %2386 = vst.msk [vmem:[#allocation2 + $0x20] sm:$0xff] %vm51, %v2370
    %2387 = vst.msk [vmem:[#allocation2 + $0x28] sm:$0xff] %vm51, %v2371
    %2388 = vst.msk [vmem:[#allocation2 + $0x30] sm:$0xff] %vm51, %v2372
    %2389 = vst.msk [vmem:[#allocation2 + $0x38] sm:$0xff] %vm51, %v2373
    %2390 = vst.msk [vmem:[#allocation2 + $0x40] sm:$0xff] %vm51, %v2374
    %2391 = vst.msk [vmem:[#allocation2 + $0x48] sm:$0xff] %vm51, %v2375
    %2392 = vst.msk [vmem:[#allocation2 + $0x50] sm:$0xff] %vm51, %v2376
    %2393 = vst.msk [vmem:[#allocation2 + $0x58] sm:$0xff] %vm51, %v2377
    %2394 = vst.msk [vmem:[#allocation2 + $0x60] sm:$0xff] %vm51, %v2378
    %2395 = vst.msk [vmem:[#allocation2 + $0x68] sm:$0xff] %vm51, %v2379
    %2396 = vst.msk [vmem:[#allocation2 + $0x70] sm:$0xff] %vm51, %v2380
    %2397 = vst.msk [vmem:[#allocation2 + $0x78] sm:$0xff] %vm51, %v2381
    %v2398 = vld [vmem:[#allocation2] sm:$0xff]
    %v2399 = vld [vmem:[#allocation2 + $0x8] sm:$0xff]
    %v2400 = vld [vmem:[#allocation2 + $0x10] sm:$0xff]
    %v2401 = vld [vmem:[#allocation2 + $0x18] sm:$0xff]
    %v2402 = vld [vmem:[#allocation2 + $0x20] sm:$0xff]
    %v2403 = vld [vmem:[#allocation2 + $0x28] sm:$0xff]
    %v2404 = vld [vmem:[#allocation2 + $0x30] sm:$0xff]
    %v2405 = vld [vmem:[#allocation2 + $0x38] sm:$0xff]
    %v2406 = vld [vmem:[#allocation2 + $0x40] sm:$0xff]
    %v2407 = vld [vmem:[#allocation2 + $0x48] sm:$0xff]
    %v2408 = vld [vmem:[#allocation2 + $0x50] sm:$0xff]
    %v2409 = vld [vmem:[#allocation2 + $0x58] sm:$0xff]
    %v2410 = vld [vmem:[#allocation2 + $0x60] sm:$0xff]
    %v2411 = vld [vmem:[#allocation2 + $0x68] sm:$0xff]
    %v2412 = vld [vmem:[#allocation2 + $0x70] sm:$0xff]
    %v2413 = vld [vmem:[#allocation2 + $0x78] sm:$0xff]
    %v2414 = vpack.c.bf16 %v2398, %v2398
    %v2415 = vpack.c.bf16 %v2399, %v2399
    %v2416 = vpack.c.bf16 %v2400, %v2400
    %v2417 = vpack.c.bf16 %v2401, %v2401
    %v2418 = vpack.c.bf16 %v2402, %v2402
    %v2419 = vpack.c.bf16 %v2403, %v2403
    %v2420 = vpack.c.bf16 %v2404, %v2404
    %v2421 = vpack.c.bf16 %v2405, %v2405
    %v2422 = vpack.c.bf16 %v2406, %v2406
    %v2423 = vpack.c.bf16 %v2407, %v2407
    %v2424 = vpack.c.bf16 %v2408, %v2408
    %v2425 = vpack.c.bf16 %v2409, %v2409
    %v2426 = vpack.c.bf16 %v2410, %v2410
    %v2427 = vpack.c.bf16 %v2411, %v2411
    %v2428 = vpack.c.bf16 %v2412, %v2412
    %v2429 = vpack.c.bf16 %v2413, %v2413
    %2430 = vst.msk [vmem:[#allocation3] sm:$0xf] %vm438, %v2414
    %2431 = vst.msk [vmem:[#allocation3 + $0x4] sm:$0xf] %vm438, %v2415
    %2432 = vst.msk [vmem:[#allocation3 + $0x8] sm:$0xf] %vm438, %v2416
    %2433 = vst.msk [vmem:[#allocation3 + $0xc] sm:$0xf] %vm438, %v2417
    %2434 = vst.msk [vmem:[#allocation3 + $0x10] sm:$0xf] %vm438, %v2418
    %2435 = vst.msk [vmem:[#allocation3 + $0x14] sm:$0xf] %vm438, %v2419
    %2436 = vst.msk [vmem:[#allocation3 + $0x18] sm:$0xf] %vm438, %v2420
    %2437 = vst.msk [vmem:[#allocation3 + $0x1c] sm:$0xf] %vm438, %v2421
    %2438 = vst.msk [vmem:[#allocation3 + $0x20] sm:$0xf] %vm438, %v2422
    %2439 = vst.msk [vmem:[#allocation3 + $0x24] sm:$0xf] %vm438, %v2423
    %2440 = vst.msk [vmem:[#allocation3 + $0x28] sm:$0xf] %vm438, %v2424
    %2441 = vst.msk [vmem:[#allocation3 + $0x2c] sm:$0xf] %vm438, %v2425
    %2442 = vst.msk [vmem:[#allocation3 + $0x30] sm:$0xf] %vm438, %v2426
    %2443 = vst.msk [vmem:[#allocation3 + $0x34] sm:$0xf] %vm438, %v2427
    %2444 = vst.msk [vmem:[#allocation3 + $0x38] sm:$0xf] %vm438, %v2428
    %2445 = vst.msk [vmem:[#allocation3 + $0x3c] sm:$0xf] %vm438, %v2429
    %v2446 = vld [vmem:[#allocation3] sm:$0xf]
    %v2447 = vld [vmem:[#allocation3 + $0x4] sm:$0xf]
    %v2448 = vld [vmem:[#allocation3 + $0x8] sm:$0xf]
    %v2449 = vld [vmem:[#allocation3 + $0xc] sm:$0xf]
    %v2450 = vld [vmem:[#allocation3 + $0x10] sm:$0xf]
    %v2451 = vld [vmem:[#allocation3 + $0x14] sm:$0xf]
    %v2452 = vld [vmem:[#allocation3 + $0x18] sm:$0xf]
    %v2453 = vld [vmem:[#allocation3 + $0x20] sm:$0xf]
    %v2454 = vld [vmem:[#allocation3 + $0x24] sm:$0xf]
    %v2455 = vld [vmem:[#allocation3 + $0x28] sm:$0xf]
    %v2456 = vld [vmem:[#allocation3 + $0x2c] sm:$0xf]
    %v2457 = vld [vmem:[#allocation3 + $0x30] sm:$0xf]
    %v2458 = vld [vmem:[#allocation3 + $0x34] sm:$0xf]
    %v2459 = vld [vmem:[#allocation3 + $0x38] sm:$0xf]
    %v2461 = vshrl.u32 %v2446, 16
    %v2463 = vrot.slane %v2461, 7
    %v2464 = vshll.u32 %v2446, 16
    %v2466 = vor.u32 %v2463, %v2464
    %v2468 = vshrl.u32 %v2447, 16
    %v2470 = vrot.slane %v2468, 7
    %v2471 = vshll.u32 %v2447, 16
    %v2473 = vor.u32 %v2470, %v2471
    %v2475 = vshrl.u32 %v2448, 16
    %v2477 = vrot.slane %v2475, 7
    %v2478 = vshll.u32 %v2448, 16
    %v2480 = vor.u32 %v2477, %v2478
    %v2482 = vshrl.u32 %v2449, 16
    %v2484 = vrot.slane %v2482, 7
    %v2485 = vshll.u32 %v2449, 16
    %v2487 = vor.u32 %v2484, %v2485
    %v2489 = vshrl.u32 %v2450, 16
    %v2491 = vrot.slane %v2489, 7
    %v2492 = vshll.u32 %v2450, 16
    %v2494 = vor.u32 %v2491, %v2492
    %v2496 = vshrl.u32 %v2451, 16
    %v2498 = vrot.slane %v2496, 7
    %v2499 = vshll.u32 %v2451, 16
    %v2501 = vor.u32 %v2498, %v2499
    %v2503 = vshrl.u32 %v2452, 16
    %v2505 = vrot.slane %v2503, 7
    %v2506 = vshll.u32 %v2452, 16
    %v2508 = vor.u32 %v2505, %v2506
    %v2510 = vshrl.u32 %v2453, 16
    %v2512 = vrot.slane %v2510, 7
    %v2513 = vshll.u32 %v2453, 16
    %v2515 = vor.u32 %v2512, %v2513
    %v2517 = vshrl.u32 %v2454, 16
    %v2519 = vrot.slane %v2517, 7
    %v2520 = vshll.u32 %v2454, 16
    %v2522 = vor.u32 %v2519, %v2520
    %v2524 = vshrl.u32 %v2455, 16
    %v2526 = vrot.slane %v2524, 7
    %v2527 = vshll.u32 %v2455, 16
    %v2529 = vor.u32 %v2526, %v2527
    %v2531 = vshrl.u32 %v2456, 16
    %v2533 = vrot.slane %v2531, 7
    %v2534 = vshll.u32 %v2456, 16
    %v2536 = vor.u32 %v2533, %v2534
    %v2538 = vshrl.u32 %v2457, 16
    %v2540 = vrot.slane %v2538, 7
    %v2541 = vshll.u32 %v2457, 16
    %v2543 = vor.u32 %v2540, %v2541
    %v2545 = vshrl.u32 %v2458, 16
    %v2547 = vrot.slane %v2545, 7
    %v2548 = vshll.u32 %v2458, 16
    %v2550 = vor.u32 %v2547, %v2548
    %v2552 = vshrl.u32 %v2459, 16
    %v2554 = vrot.slane %v2552, 7
    %v2555 = vshll.u32 %v2459, 16
    %v2557 = vor.u32 %v2554, %v2555
    %2558 = vrot.lane.b32.xlu0 %v2466, 16
    %v2559 = vpop.permute.xlu0 %2558
    %2560 = vrot.lane.b32.xlu0 %v2473, 16
    %v2561 = vpop.permute.xlu0 %2560
    %2562 = vrot.lane.b32.xlu0 %v2480, 16
    %v2563 = vpop.permute.xlu0 %2562
    %2564 = vrot.lane.b32.xlu0 %v2487, 16
    %v2565 = vpop.permute.xlu0 %2564
    %2566 = vrot.lane.b32.xlu0 %v2494, 16
    %v2567 = vpop.permute.xlu0 %2566
    %2568 = vrot.lane.b32.xlu0 %v2501, 16
    %v2569 = vpop.permute.xlu0 %2568
    %2570 = vrot.lane.b32.xlu0 %v2508, 16
    %v2571 = vpop.permute.xlu0 %2570
    %2572 = vrot.lane.b32.xlu0 %v2515, 16
    %v2573 = vpop.permute.xlu0 %2572
    %2574 = vrot.lane.b32.xlu0 %v2522, 16
    %v2575 = vpop.permute.xlu0 %2574
    %2576 = vrot.lane.b32.xlu0 %v2529, 16
    %v2577 = vpop.permute.xlu0 %2576
    %2578 = vrot.lane.b32.xlu0 %v2536, 16
    %v2579 = vpop.permute.xlu0 %2578
    %2580 = vrot.lane.b32.xlu0 %v2543, 16
    %v2581 = vpop.permute.xlu0 %2580
    %2582 = vrot.lane.b32.xlu0 %v2550, 16
    %v2583 = vpop.permute.xlu0 %2582
    %2584 = vrot.lane.b32.xlu0 %v2557, 16
    %v2585 = vpop.permute.xlu0 %2584
    %v2600 = vld [vmem:[%s609] sm:$0xf]
    %v2601 = vsel %vm612, %v2559, %v2600
    %2602 = vst [vmem:[%s609] sm:$0xf] %v2601
    %v2603 = vld [vmem:[%s609 + $0x4] sm:$0xf]
    %v2604 = vsel %vm612, %v2561, %v2603
    %2605 = vst [vmem:[%s609 + $0x4] sm:$0xf] %v2604
    %v2606 = vld [vmem:[%s609 + $0x8] sm:$0xf]
    %v2607 = vsel %vm612, %v2563, %v2606
    %2608 = vst [vmem:[%s609 + $0x8] sm:$0xf] %v2607
    %v2609 = vld [vmem:[%s609 + $0xc] sm:$0xf]
    %v2610 = vsel %vm612, %v2565, %v2609
    %2611 = vst [vmem:[%s609 + $0xc] sm:$0xf] %v2610
    %v2612 = vld [vmem:[%s609 + $0x10] sm:$0xf]
    %v2613 = vsel %vm612, %v2567, %v2612
    %2614 = vst [vmem:[%s609 + $0x10] sm:$0xf] %v2613
    %v2615 = vld [vmem:[%s609 + $0x14] sm:$0xf]
    %v2616 = vsel %vm612, %v2569, %v2615
    %2617 = vst [vmem:[%s609 + $0x14] sm:$0xf] %v2616
    %v2618 = vld [vmem:[%s609 + $0x18] sm:$0xf]
    %v2619 = vsel %vm612, %v2571, %v2618
    %2620 = vst [vmem:[%s609 + $0x18] sm:$0xf] %v2619
    %v2621 = vld [vmem:[%s609 + $0x20] sm:$0xf]
    %v2622 = vsel %vm612, %v2573, %v2621
    %2623 = vst [vmem:[%s609 + $0x20] sm:$0xf] %v2622
    %v2624 = vld [vmem:[%s609 + $0x24] sm:$0xf]
    %v2625 = vsel %vm612, %v2575, %v2624
    %2626 = vst [vmem:[%s609 + $0x24] sm:$0xf] %v2625
    %v2627 = vld [vmem:[%s609 + $0x28] sm:$0xf]
    %v2628 = vsel %vm612, %v2577, %v2627
    %2629 = vst [vmem:[%s609 + $0x28] sm:$0xf] %v2628
    %v2630 = vld [vmem:[%s609 + $0x2c] sm:$0xf]
    %v2631 = vsel %vm612, %v2579, %v2630
    %2632 = vst [vmem:[%s609 + $0x2c] sm:$0xf] %v2631
    %v2633 = vld [vmem:[%s609 + $0x30] sm:$0xf]
    %v2634 = vsel %vm612, %v2581, %v2633
    %2635 = vst [vmem:[%s609 + $0x30] sm:$0xf] %v2634
    %v2636 = vld [vmem:[%s609 + $0x34] sm:$0xf]
    %v2637 = vsel %vm612, %v2583, %v2636
    %2638 = vst [vmem:[%s609 + $0x34] sm:$0xf] %v2637
    %v2639 = vld [vmem:[%s609 + $0x38] sm:$0xf]
    %v2640 = vsel %vm612, %v2585, %v2639
    %2641 = vst [vmem:[%s609 + $0x38] sm:$0xf] %v2640
    %v2642 = vld [vmem:[#allocation3] sm:$0xf]
    %v2643 = vld [vmem:[#allocation3 + $0x4] sm:$0xf]
    %v2644 = vld [vmem:[#allocation3 + $0x8] sm:$0xf]
    %v2645 = vld [vmem:[#allocation3 + $0xc] sm:$0xf]
    %v2646 = vld [vmem:[#allocation3 + $0x10] sm:$0xf]
    %v2647 = vld [vmem:[#allocation3 + $0x14] sm:$0xf]
    %v2648 = vld [vmem:[#allocation3 + $0x18] sm:$0xf]
    %v2649 = vld [vmem:[#allocation3 + $0x20] sm:$0xf]
    %v2650 = vld [vmem:[#allocation3 + $0x24] sm:$0xf]
    %v2651 = vld [vmem:[#allocation3 + $0x28] sm:$0xf]
    %v2652 = vld [vmem:[#allocation3 + $0x2c] sm:$0xf]
    %v2653 = vld [vmem:[#allocation3 + $0x30] sm:$0xf]
    %v2654 = vld [vmem:[#allocation3 + $0x34] sm:$0xf]
    %v2655 = vld [vmem:[#allocation3 + $0x38] sm:$0xf]
    %2670 = vrot.lane.b32.xlu0 %v2642, 20
    %v2671 = vpop.permute.xlu0 %2670
    %2672 = vrot.lane.b32.xlu0 %v2643, 20
    %v2673 = vpop.permute.xlu0 %2672
    %2674 = vrot.lane.b32.xlu0 %v2644, 20
    %v2675 = vpop.permute.xlu0 %2674
    %2676 = vrot.lane.b32.xlu0 %v2645, 20
    %v2677 = vpop.permute.xlu0 %2676
    %2678 = vrot.lane.b32.xlu0 %v2646, 20
    %v2679 = vpop.permute.xlu0 %2678
    %2680 = vrot.lane.b32.xlu0 %v2647, 20
    %v2681 = vpop.permute.xlu0 %2680
    %2682 = vrot.lane.b32.xlu0 %v2648, 20
    %v2683 = vpop.permute.xlu0 %2682
    %2684 = vrot.lane.b32.xlu0 %v2649, 20
    %v2685 = vpop.permute.xlu0 %2684
    %2686 = vrot.lane.b32.xlu0 %v2650, 20
    %v2687 = vpop.permute.xlu0 %2686
    %2688 = vrot.lane.b32.xlu0 %v2651, 20
    %v2689 = vpop.permute.xlu0 %2688
    %2690 = vrot.lane.b32.xlu0 %v2652, 20
    %v2691 = vpop.permute.xlu0 %2690
    %2692 = vrot.lane.b32.xlu0 %v2653, 20
    %v2693 = vpop.permute.xlu0 %2692
    %2694 = vrot.lane.b32.xlu0 %v2654, 20
    %v2695 = vpop.permute.xlu0 %2694
    %2696 = vrot.lane.b32.xlu0 %v2655, 20
    %v2697 = vpop.permute.xlu0 %2696
    %2712 = vst.msk [vmem:[%s609] sm:$0xf] %vm139, %v2671
    %2713 = vst.msk [vmem:[%s609 + $0x4] sm:$0xf] %vm139, %v2673
    %2714 = vst.msk [vmem:[%s609 + $0x8] sm:$0xf] %vm139, %v2675
    %2715 = vst.msk [vmem:[%s609 + $0xc] sm:$0xf] %vm139, %v2677
    %2716 = vst.msk [vmem:[%s609 + $0x10] sm:$0xf] %vm139, %v2679
    %2717 = vst.msk [vmem:[%s609 + $0x14] sm:$0xf] %vm139, %v2681
    %2718 = vst.msk [vmem:[%s609 + $0x18] sm:$0xf] %vm139, %v2683
    %2719 = vst.msk [vmem:[%s609 + $0x20] sm:$0xf] %vm139, %v2685
    %2720 = vst.msk [vmem:[%s609 + $0x24] sm:$0xf] %vm139, %v2687
    %2721 = vst.msk [vmem:[%s609 + $0x28] sm:$0xf] %vm139, %v2689
    %2722 = vst.msk [vmem:[%s609 + $0x2c] sm:$0xf] %vm139, %v2691
    %2723 = vst.msk [vmem:[%s609 + $0x30] sm:$0xf] %vm139, %v2693
    %2724 = vst.msk [vmem:[%s609 + $0x34] sm:$0xf] %vm139, %v2695
    %2725 = vst.msk [vmem:[%s609 + $0x38] sm:$0xf] %vm139, %v2697
    %v2726 = vld [vmem:[#allocation3] sm:$0xf]
    %v2727 = vld [vmem:[#allocation3 + $0x4] sm:$0xf]
    %v2728 = vld [vmem:[#allocation3 + $0x8] sm:$0xf]
    %v2729 = vld [vmem:[#allocation3 + $0xc] sm:$0xf]
    %v2730 = vld [vmem:[#allocation3 + $0x10] sm:$0xf]
    %v2731 = vld [vmem:[#allocation3 + $0x14] sm:$0xf]
    %v2732 = vld [vmem:[#allocation3 + $0x18] sm:$0xf]
    %v2733 = vld [vmem:[#allocation3 + $0x20] sm:$0xf]
    %v2734 = vld [vmem:[#allocation3 + $0x24] sm:$0xf]
    %v2735 = vld [vmem:[#allocation3 + $0x28] sm:$0xf]
    %v2736 = vld [vmem:[#allocation3 + $0x2c] sm:$0xf]
    %v2737 = vld [vmem:[#allocation3 + $0x30] sm:$0xf]
    %v2738 = vld [vmem:[#allocation3 + $0x34] sm:$0xf]
    %v2739 = vld [vmem:[#allocation3 + $0x38] sm:$0xf]
    %v2741 = vshrl.u32 %v2726, 16
    %v2743 = vrot.slane %v2741, 4
    %v2744 = vshll.u32 %v2726, 16
    %v2746 = vrot.slane %v2744, 5
    %v2747 = vor.u32 %v2743, %v2746
    %v2748 = vrot.slane %v2747, 4
    %v2750 = vshrl.u32 %v2727, 16
    %v2752 = vrot.slane %v2750, 4
    %v2753 = vshll.u32 %v2727, 16
    %v2755 = vrot.slane %v2753, 5
    %v2756 = vor.u32 %v2752, %v2755
    %v2757 = vrot.slane %v2756, 4
    %v2759 = vshrl.u32 %v2728, 16
    %v2761 = vrot.slane %v2759, 4
    %v2762 = vshll.u32 %v2728, 16
    %v2764 = vrot.slane %v2762, 5
    %v2765 = vor.u32 %v2761, %v2764
    %v2766 = vrot.slane %v2765, 4
    %v2768 = vshrl.u32 %v2729, 16
    %v2770 = vrot.slane %v2768, 4
    %v2771 = vshll.u32 %v2729, 16
    %v2773 = vrot.slane %v2771, 5
    %v2774 = vor.u32 %v2770, %v2773
    %v2775 = vrot.slane %v2774, 4
    %v2777 = vshrl.u32 %v2730, 16
    %v2779 = vrot.slane %v2777, 4
    %v2780 = vshll.u32 %v2730, 16
    %v2782 = vrot.slane %v2780, 5
    %v2783 = vor.u32 %v2779, %v2782
    %v2784 = vrot.slane %v2783, 4
    %v2786 = vshrl.u32 %v2731, 16
    %v2788 = vrot.slane %v2786, 4
    %v2789 = vshll.u32 %v2731, 16
    %v2791 = vrot.slane %v2789, 5
    %v2792 = vor.u32 %v2788, %v2791
    %v2793 = vrot.slane %v2792, 4
    %v2795 = vshrl.u32 %v2732, 16
    %v2797 = vrot.slane %v2795, 4
    %v2798 = vshll.u32 %v2732, 16
    %v2800 = vrot.slane %v2798, 5
    %v2801 = vor.u32 %v2797, %v2800
    %v2802 = vrot.slane %v2801, 4
    %v2804 = vshrl.u32 %v2733, 16
    %v2806 = vrot.slane %v2804, 4
    %v2807 = vshll.u32 %v2733, 16
    %v2809 = vrot.slane %v2807, 5
    %v2810 = vor.u32 %v2806, %v2809
    %v2811 = vrot.slane %v2810, 4
    %v2813 = vshrl.u32 %v2734, 16
    %v2815 = vrot.slane %v2813, 4
    %v2816 = vshll.u32 %v2734, 16
    %v2818 = vrot.slane %v2816, 5
    %v2819 = vor.u32 %v2815, %v2818
    %v2820 = vrot.slane %v2819, 4
    %v2822 = vshrl.u32 %v2735, 16
    %v2824 = vrot.slane %v2822, 4
    %v2825 = vshll.u32 %v2735, 16
    %v2827 = vrot.slane %v2825, 5
    %v2828 = vor.u32 %v2824, %v2827
    %v2829 = vrot.slane %v2828, 4
    %v2831 = vshrl.u32 %v2736, 16
    %v2833 = vrot.slane %v2831, 4
    %v2834 = vshll.u32 %v2736, 16
    %v2836 = vrot.slane %v2834, 5
    %v2837 = vor.u32 %v2833, %v2836
    %v2838 = vrot.slane %v2837, 4
    %v2840 = vshrl.u32 %v2737, 16
    %v2842 = vrot.slane %v2840, 4
    %v2843 = vshll.u32 %v2737, 16
    %v2845 = vrot.slane %v2843, 5
    %v2846 = vor.u32 %v2842, %v2845
    %v2847 = vrot.slane %v2846, 4
    %v2849 = vshrl.u32 %v2738, 16
    %v2851 = vrot.slane %v2849, 4
    %v2852 = vshll.u32 %v2738, 16
    %v2854 = vrot.slane %v2852, 5
    %v2855 = vor.u32 %v2851, %v2854
    %v2856 = vrot.slane %v2855, 4
    %v2858 = vshrl.u32 %v2739, 16
    %v2860 = vrot.slane %v2858, 4
    %v2861 = vshll.u32 %v2739, 16
    %v2863 = vrot.slane %v2861, 5
    %v2864 = vor.u32 %v2860, %v2863
    %v2865 = vrot.slane %v2864, 4
    %2866 = vrot.lane.b32.xlu0 %v2748, 24
    %v2867 = vpop.permute.xlu0 %2866
    %2868 = vrot.lane.b32.xlu0 %v2757, 24
    %v2869 = vpop.permute.xlu0 %2868
    %2870 = vrot.lane.b32.xlu0 %v2766, 24
    %v2871 = vpop.permute.xlu0 %2870
    %2872 = vrot.lane.b32.xlu0 %v2775, 24
    %v2873 = vpop.permute.xlu0 %2872
    %2874 = vrot.lane.b32.xlu0 %v2784, 24
    %v2875 = vpop.permute.xlu0 %2874
    %2876 = vrot.lane.b32.xlu0 %v2793, 24
    %v2877 = vpop.permute.xlu0 %2876
    %2878 = vrot.lane.b32.xlu0 %v2802, 24
    %v2879 = vpop.permute.xlu0 %2878
    %2880 = vrot.lane.b32.xlu0 %v2811, 24
    %v2881 = vpop.permute.xlu0 %2880
    %2882 = vrot.lane.b32.xlu0 %v2820, 24
    %v2883 = vpop.permute.xlu0 %2882
    %2884 = vrot.lane.b32.xlu0 %v2829, 24
    %v2885 = vpop.permute.xlu0 %2884
    %2886 = vrot.lane.b32.xlu0 %v2838, 24
    %v2887 = vpop.permute.xlu0 %2886
    %2888 = vrot.lane.b32.xlu0 %v2847, 24
    %v2889 = vpop.permute.xlu0 %2888
    %2890 = vrot.lane.b32.xlu0 %v2856, 24
    %v2891 = vpop.permute.xlu0 %2890
    %2892 = vrot.lane.b32.xlu0 %v2865, 24
    %v2893 = vpop.permute.xlu0 %2892
    %v2908 = vld [vmem:[%s609] sm:$0xf]
    %v2909 = vsel %vm923, %v2867, %v2908
    %2910 = vst [vmem:[%s609] sm:$0xf] %v2909
    %v2911 = vld [vmem:[%s609 + $0x4] sm:$0xf]
    %v2912 = vsel %vm923, %v2869, %v2911
    %2913 = vst [vmem:[%s609 + $0x4] sm:$0xf] %v2912
    %v2914 = vld [vmem:[%s609 + $0x8] sm:$0xf]
    %v2915 = vsel %vm923, %v2871, %v2914
    %2916 = vst [vmem:[%s609 + $0x8] sm:$0xf] %v2915
    %v2917 = vld [vmem:[%s609 + $0xc] sm:$0xf]
    %v2918 = vsel %vm923, %v2873, %v2917
    %2919 = vst [vmem:[%s609 + $0xc] sm:$0xf] %v2918
    %v2920 = vld [vmem:[%s609 + $0x10] sm:$0xf]
    %v2921 = vsel %vm923, %v2875, %v2920
    %2922 = vst [vmem:[%s609 + $0x10] sm:$0xf] %v2921
    %v2923 = vld [vmem:[%s609 + $0x14] sm:$0xf]
    %v2924 = vsel %vm923, %v2877, %v2923
    %2925 = vst [vmem:[%s609 + $0x14] sm:$0xf] %v2924
    %v2926 = vld [vmem:[%s609 + $0x18] sm:$0xf]
    %v2927 = vsel %vm923, %v2879, %v2926
    %2928 = vst [vmem:[%s609 + $0x18] sm:$0xf] %v2927
    %v2929 = vld [vmem:[%s609 + $0x20] sm:$0xf]
    %v2930 = vsel %vm923, %v2881, %v2929
    %2931 = vst [vmem:[%s609 + $0x20] sm:$0xf] %v2930
    %v2932 = vld [vmem:[%s609 + $0x24] sm:$0xf]
    %v2933 = vsel %vm923, %v2883, %v2932
    %2934 = vst [vmem:[%s609 + $0x24] sm:$0xf] %v2933
    %v2935 = vld [vmem:[%s609 + $0x28] sm:$0xf]
    %v2936 = vsel %vm923, %v2885, %v2935
    %2937 = vst [vmem:[%s609 + $0x28] sm:$0xf] %v2936
    %v2938 = vld [vmem:[%s609 + $0x2c] sm:$0xf]
    %v2939 = vsel %vm923, %v2887, %v2938
    %2940 = vst [vmem:[%s609 + $0x2c] sm:$0xf] %v2939
    %v2941 = vld [vmem:[%s609 + $0x30] sm:$0xf]
    %v2942 = vsel %vm923, %v2889, %v2941
    %2943 = vst [vmem:[%s609 + $0x30] sm:$0xf] %v2942
    %v2944 = vld [vmem:[%s609 + $0x34] sm:$0xf]
    %v2945 = vsel %vm923, %v2891, %v2944
    %2946 = vst [vmem:[%s609 + $0x34] sm:$0xf] %v2945
    %v2947 = vld [vmem:[%s609 + $0x38] sm:$0xf]
    %v2948 = vsel %vm923, %v2893, %v2947
    %2949 = vst [vmem:[%s609 + $0x38] sm:$0xf] %v2948
    %v2950 = vld [vmem:[#allocation3] sm:$0xf]
    %v2951 = vld [vmem:[#allocation3 + $0x4] sm:$0xf]
    %v2952 = vld [vmem:[#allocation3 + $0x8] sm:$0xf]
    %v2953 = vld [vmem:[#allocation3 + $0xc] sm:$0xf]
    %v2954 = vld [vmem:[#allocation3 + $0x10] sm:$0xf]
    %v2955 = vld [vmem:[#allocation3 + $0x14] sm:$0xf]
    %v2956 = vld [vmem:[#allocation3 + $0x18] sm:$0xf]
    %v2957 = vld [vmem:[#allocation3 + $0x1c] sm:$0xf]
    %v2958 = vld [vmem:[#allocation3 + $0x20] sm:$0xf]
    %v2959 = vld [vmem:[#allocation3 + $0x24] sm:$0xf]
    %v2960 = vld [vmem:[#allocation3 + $0x28] sm:$0xf]
    %v2961 = vld [vmem:[#allocation3 + $0x2c] sm:$0xf]
    %v2962 = vld [vmem:[#allocation3 + $0x30] sm:$0xf]
    %v2963 = vld [vmem:[#allocation3 + $0x34] sm:$0xf]
    %v2964 = vld [vmem:[#allocation3 + $0x38] sm:$0xf]
    %v2965 = vld [vmem:[#allocation3 + $0x3c] sm:$0xf]
    %v2967 = vshrl.u32 %v2950, 16
    %v2969 = vrot.slane %v2967, 7
    %v2970 = vshll.u32 %v2950, 16
    %v2972 = vor.u32 %v2969, %v2970
    %v2974 = vshrl.u32 %v2951, 16
    %v2976 = vrot.slane %v2974, 7
    %v2977 = vshll.u32 %v2951, 16
    %v2979 = vor.u32 %v2976, %v2977
    %v2981 = vshrl.u32 %v2952, 16
    %v2983 = vrot.slane %v2981, 7
    %v2984 = vshll.u32 %v2952, 16
    %v2986 = vor.u32 %v2983, %v2984
    %v2988 = vshrl.u32 %v2953, 16
    %v2990 = vrot.slane %v2988, 7
    %v2991 = vshll.u32 %v2953, 16
    %v2993 = vor.u32 %v2990, %v2991
    %v2995 = vshrl.u32 %v2954, 16
    %v2997 = vrot.slane %v2995, 7
    %v2998 = vshll.u32 %v2954, 16
    %v3000 = vor.u32 %v2997, %v2998
    %v3002 = vshrl.u32 %v2955, 16
    %v3004 = vrot.slane %v3002, 7
    %v3005 = vshll.u32 %v2955, 16
    %v3007 = vor.u32 %v3004, %v3005
    %v3009 = vshrl.u32 %v2956, 16
    %v3011 = vrot.slane %v3009, 7
    %v3012 = vshll.u32 %v2956, 16
    %v3014 = vor.u32 %v3011, %v3012
    %v3016 = vshrl.u32 %v2957, 16
    %v3018 = vrot.slane %v3016, 7
    %v3019 = vshll.u32 %v2957, 16
    %v3021 = vor.u32 %v3018, %v3019
    %v3023 = vshrl.u32 %v2958, 16
    %v3025 = vrot.slane %v3023, 7
    %v3026 = vshll.u32 %v2958, 16
    %v3028 = vor.u32 %v3025, %v3026
    %v3030 = vshrl.u32 %v2959, 16
    %v3032 = vrot.slane %v3030, 7
    %v3033 = vshll.u32 %v2959, 16
    %v3035 = vor.u32 %v3032, %v3033
    %v3037 = vshrl.u32 %v2960, 16
    %v3039 = vrot.slane %v3037, 7
    %v3040 = vshll.u32 %v2960, 16
    %v3042 = vor.u32 %v3039, %v3040
    %v3044 = vshrl.u32 %v2961, 16
    %v3046 = vrot.slane %v3044, 7
    %v3047 = vshll.u32 %v2961, 16
    %v3049 = vor.u32 %v3046, %v3047
    %v3051 = vshrl.u32 %v2962, 16
    %v3053 = vrot.slane %v3051, 7
    %v3054 = vshll.u32 %v2962, 16
    %v3056 = vor.u32 %v3053, %v3054
    %v3058 = vshrl.u32 %v2963, 16
    %v3060 = vrot.slane %v3058, 7
    %v3061 = vshll.u32 %v2963, 16
    %v3063 = vor.u32 %v3060, %v3061
    %v3065 = vshrl.u32 %v2964, 16
    %v3067 = vrot.slane %v3065, 7
    %v3068 = vshll.u32 %v2964, 16
    %v3070 = vor.u32 %v3067, %v3068
    %v3072 = vshrl.u32 %v2965, 16
    %v3074 = vrot.slane %v3072, 7
    %v3075 = vshll.u32 %v2965, 16
    %v3077 = vor.u32 %v3074, %v3075
    %3078 = vrot.lane.b32.xlu0 %v2972, 28
    %v3079 = vpop.permute.xlu0 %3078
    %3080 = vrot.lane.b32.xlu0 %v2979, 28
    %v3081 = vpop.permute.xlu0 %3080
    %3082 = vrot.lane.b32.xlu0 %v2986, 28
    %v3083 = vpop.permute.xlu0 %3082
    %3084 = vrot.lane.b32.xlu0 %v2993, 28
    %v3085 = vpop.permute.xlu0 %3084
    %3086 = vrot.lane.b32.xlu0 %v3000, 28
    %v3087 = vpop.permute.xlu0 %3086
    %3088 = vrot.lane.b32.xlu0 %v3007, 28
    %v3089 = vpop.permute.xlu0 %3088
    %3090 = vrot.lane.b32.xlu0 %v3014, 28
    %v3091 = vpop.permute.xlu0 %3090
    %3092 = vrot.lane.b32.xlu0 %v3021, 28
    %v3093 = vpop.permute.xlu0 %3092
    %3094 = vrot.lane.b32.xlu0 %v3028, 28
    %v3095 = vpop.permute.xlu0 %3094
    %3096 = vrot.lane.b32.xlu0 %v3035, 28
    %v3097 = vpop.permute.xlu0 %3096
    %3098 = vrot.lane.b32.xlu0 %v3042, 28
    %v3099 = vpop.permute.xlu0 %3098
    %3100 = vrot.lane.b32.xlu0 %v3049, 28
    %v3101 = vpop.permute.xlu0 %3100
    %3102 = vrot.lane.b32.xlu0 %v3056, 28
    %v3103 = vpop.permute.xlu0 %3102
    %3104 = vrot.lane.b32.xlu0 %v3063, 28
    %v3105 = vpop.permute.xlu0 %3104
    %3106 = vrot.lane.b32.xlu0 %v3070, 28
    %v3107 = vpop.permute.xlu0 %3106
    %3108 = vrot.lane.b32.xlu0 %v3077, 28
    %v3109 = vpop.permute.xlu0 %3108
    %v3126 = vsel %vm1143, %v3079, %v2950
    %3127 = vst [vmem:[#allocation3] sm:$0xf] %v3126
    %v3128 = vld [vmem:[#allocation3 + $0x4] sm:$0xf]
    %v3129 = vsel %vm1143, %v3081, %v3128
    %3130 = vst [vmem:[#allocation3 + $0x4] sm:$0xf] %v3129
    %v3131 = vld [vmem:[#allocation3 + $0x8] sm:$0xf]
    %v3132 = vsel %vm1143, %v3083, %v3131
    %3133 = vst [vmem:[#allocation3 + $0x8] sm:$0xf] %v3132
    %v3134 = vld [vmem:[#allocation3 + $0xc] sm:$0xf]
    %v3135 = vsel %vm1143, %v3085, %v3134
    %3136 = vst [vmem:[#allocation3 + $0xc] sm:$0xf] %v3135
    %v3137 = vld [vmem:[#allocation3 + $0x10] sm:$0xf]
    %v3138 = vsel %vm1143, %v3087, %v3137
    %3139 = vst [vmem:[#allocation3 + $0x10] sm:$0xf] %v3138
    %v3140 = vld [vmem:[#allocation3 + $0x14] sm:$0xf]
    %v3141 = vsel %vm1143, %v3089, %v3140
    %3142 = vst [vmem:[#allocation3 + $0x14] sm:$0xf] %v3141
    %v3143 = vld [vmem:[#allocation3 + $0x18] sm:$0xf]
    %v3144 = vsel %vm1143, %v3091, %v3143
    %3145 = vst [vmem:[#allocation3 + $0x18] sm:$0xf] %v3144
    %v3146 = vld [vmem:[#allocation3 + $0x1c] sm:$0xf]
    %v3147 = vsel %vm1143, %v3093, %v3146
    %3148 = vst [vmem:[#allocation3 + $0x1c] sm:$0xf] %v3147
    %v3149 = vld [vmem:[#allocation3 + $0x20] sm:$0xf]
    %v3150 = vsel %vm1143, %v3095, %v3149
    %3151 = vst [vmem:[#allocation3 + $0x20] sm:$0xf] %v3150
    %v3152 = vld [vmem:[#allocation3 + $0x24] sm:$0xf]
    %v3153 = vsel %vm1143, %v3097, %v3152
    %3154 = vst [vmem:[#allocation3 + $0x24] sm:$0xf] %v3153
    %v3155 = vld [vmem:[#allocation3 + $0x28] sm:$0xf]
    %v3156 = vsel %vm1143, %v3099, %v3155
    %3157 = vst [vmem:[#allocation3 + $0x28] sm:$0xf] %v3156
    %v3158 = vld [vmem:[#allocation3 + $0x2c] sm:$0xf]
    %v3159 = vsel %vm1143, %v3101, %v3158
    %3160 = vst [vmem:[#allocation3 + $0x2c] sm:$0xf] %v3159
    %v3161 = vld [vmem:[#allocation3 + $0x30] sm:$0xf]
    %v3162 = vsel %vm1143, %v3103, %v3161
    %3163 = vst [vmem:[#allocation3 + $0x30] sm:$0xf] %v3162
    %v3164 = vld [vmem:[#allocation3 + $0x34] sm:$0xf]
    %v3165 = vsel %vm1143, %v3105, %v3164
    %3166 = vst [vmem:[#allocation3 + $0x34] sm:$0xf] %v3165
    %v3167 = vld [vmem:[#allocation3 + $0x38] sm:$0xf]
    %v3168 = vsel %vm1143, %v3107, %v3167
    %3169 = vst [vmem:[#allocation3 + $0x38] sm:$0xf] %v3168
    %v3170 = vld [vmem:[#allocation3 + $0x3c] sm:$0xf]
    %v3171 = vsel %vm1143, %v3109, %v3170
    %3172 = vst [vmem:[#allocation3 + $0x3c] sm:$0xf] %v3171
    %v3173 = vld [vmem:[#allocation3] sm:$0xf]
    %v3174 = vld [vmem:[#allocation3 + $0x4] sm:$0xf]
    %v3175 = vld [vmem:[#allocation3 + $0x8] sm:$0xf]
    %v3176 = vld [vmem:[#allocation3 + $0xc] sm:$0xf]
    %v3177 = vld [vmem:[#allocation3 + $0x10] sm:$0xf]
    %v3178 = vld [vmem:[#allocation3 + $0x14] sm:$0xf]
    %v3179 = vld [vmem:[#allocation3 + $0x18] sm:$0xf]
    %v3180 = vld [vmem:[#allocation3 + $0x1c] sm:$0xf]
    %v3181 = vld [vmem:[#allocation3 + $0x20] sm:$0xf]
    %v3182 = vld [vmem:[#allocation3 + $0x24] sm:$0xf]
    %v3183 = vld [vmem:[#allocation3 + $0x28] sm:$0xf]
    %v3184 = vld [vmem:[#allocation3 + $0x2c] sm:$0xf]
    %v3185 = vld [vmem:[#allocation3 + $0x30] sm:$0xf]
    %v3186 = vld [vmem:[#allocation3 + $0x34] sm:$0xf]
    %v3187 = vld [vmem:[#allocation3 + $0x38] sm:$0xf]
    %v3188 = vld [vmem:[#allocation3 + $0x3c] sm:$0xf]
    %v3190 = vshrl.u32 %v3173, 16
    %v3192 = vrot.slane %v3190, 4
    %v3193 = vshll.u32 %v3173, 16
    %v3195 = vrot.slane %v3193, 5
    %v3196 = vor.u32 %v3192, %v3195
    %v3197 = vrot.slane %v3196, 4
    %v3199 = vshrl.u32 %v3174, 16
    %v3201 = vrot.slane %v3199, 4
    %v3202 = vshll.u32 %v3174, 16
    %v3204 = vrot.slane %v3202, 5
    %v3205 = vor.u32 %v3201, %v3204
    %v3206 = vrot.slane %v3205, 4
    %v3208 = vshrl.u32 %v3175, 16
    %v3210 = vrot.slane %v3208, 4
    %v3211 = vshll.u32 %v3175, 16
    %v3213 = vrot.slane %v3211, 5
    %v3214 = vor.u32 %v3210, %v3213
    %v3215 = vrot.slane %v3214, 4
    %v3217 = vshrl.u32 %v3176, 16
    %v3219 = vrot.slane %v3217, 4
    %v3220 = vshll.u32 %v3176, 16
    %v3222 = vrot.slane %v3220, 5
    %v3223 = vor.u32 %v3219, %v3222
    %v3224 = vrot.slane %v3223, 4
    %v3226 = vshrl.u32 %v3177, 16
    %v3228 = vrot.slane %v3226, 4
    %v3229 = vshll.u32 %v3177, 16
    %v3231 = vrot.slane %v3229, 5
    %v3232 = vor.u32 %v3228, %v3231
    %v3233 = vrot.slane %v3232, 4
    %v3235 = vshrl.u32 %v3178, 16
    %v3237 = vrot.slane %v3235, 4
    %v3238 = vshll.u32 %v3178, 16
    %v3240 = vrot.slane %v3238, 5
    %v3241 = vor.u32 %v3237, %v3240
    %v3242 = vrot.slane %v3241, 4
    %v3244 = vshrl.u32 %v3179, 16
    %v3246 = vrot.slane %v3244, 4
    %v3247 = vshll.u32 %v3179, 16
    %v3249 = vrot.slane %v3247, 5
    %v3250 = vor.u32 %v3246, %v3249
    %v3251 = vrot.slane %v3250, 4
    %v3253 = vshrl.u32 %v3180, 16
    %v3255 = vrot.slane %v3253, 4
    %v3256 = vshll.u32 %v3180, 16
    %v3258 = vrot.slane %v3256, 5
    %v3259 = vor.u32 %v3255, %v3258
    %v3260 = vrot.slane %v3259, 4
    %v3262 = vshrl.u32 %v3181, 16
    %v3264 = vrot.slane %v3262, 4
    %v3265 = vshll.u32 %v3181, 16
    %v3267 = vrot.slane %v3265, 5
    %v3268 = vor.u32 %v3264, %v3267
    %v3269 = vrot.slane %v3268, 4
    %v3271 = vshrl.u32 %v3182, 16
    %v3273 = vrot.slane %v3271, 4
    %v3274 = vshll.u32 %v3182, 16
    %v3276 = vrot.slane %v3274, 5
    %v3277 = vor.u32 %v3273, %v3276
    %v3278 = vrot.slane %v3277, 4
    %v3280 = vshrl.u32 %v3183, 16
    %v3282 = vrot.slane %v3280, 4
    %v3283 = vshll.u32 %v3183, 16
    %v3285 = vrot.slane %v3283, 5
    %v3286 = vor.u32 %v3282, %v3285
    %v3287 = vrot.slane %v3286, 4
    %v3289 = vshrl.u32 %v3184, 16
    %v3291 = vrot.slane %v3289, 4
    %v3292 = vshll.u32 %v3184, 16
    %v3294 = vrot.slane %v3292, 5
    %v3295 = vor.u32 %v3291, %v3294
    %v3296 = vrot.slane %v3295, 4
    %v3298 = vshrl.u32 %v3185, 16
    %v3300 = vrot.slane %v3298, 4
    %v3301 = vshll.u32 %v3185, 16
    %v3303 = vrot.slane %v3301, 5
    %v3304 = vor.u32 %v3300, %v3303
    %v3305 = vrot.slane %v3304, 4
    %v3307 = vshrl.u32 %v3186, 16
    %v3309 = vrot.slane %v3307, 4
    %v3310 = vshll.u32 %v3186, 16
    %v3312 = vrot.slane %v3310, 5
    %v3313 = vor.u32 %v3309, %v3312
    %v3314 = vrot.slane %v3313, 4
    %v3316 = vshrl.u32 %v3187, 16
    %v3318 = vrot.slane %v3316, 4
    %v3319 = vshll.u32 %v3187, 16
    %v3321 = vrot.slane %v3319, 5
    %v3322 = vor.u32 %v3318, %v3321
    %v3323 = vrot.slane %v3322, 4
    %v3325 = vshrl.u32 %v3188, 16
    %v3327 = vrot.slane %v3325, 4
    %v3328 = vshll.u32 %v3188, 16
    %v3330 = vrot.slane %v3328, 5
    %v3331 = vor.u32 %v3327, %v3330
    %v3332 = vrot.slane %v3331, 4
    %3333 = vrot.lane.b32.xlu0 %v3197, 32
    %v3334 = vpop.permute.xlu0 %3333
    %3335 = vrot.lane.b32.xlu0 %v3206, 32
    %v3336 = vpop.permute.xlu0 %3335
    %3337 = vrot.lane.b32.xlu0 %v3215, 32
    %v3338 = vpop.permute.xlu0 %3337
    %3339 = vrot.lane.b32.xlu0 %v3224, 32
    %v3340 = vpop.permute.xlu0 %3339
    %3341 = vrot.lane.b32.xlu0 %v3233, 32
    %v3342 = vpop.permute.xlu0 %3341
    %3343 = vrot.lane.b32.xlu0 %v3242, 32
    %v3344 = vpop.permute.xlu0 %3343
    %3345 = vrot.lane.b32.xlu0 %v3251, 32
    %v3346 = vpop.permute.xlu0 %3345
    %3347 = vrot.lane.b32.xlu0 %v3260, 32
    %v3348 = vpop.permute.xlu0 %3347
    %3349 = vrot.lane.b32.xlu0 %v3269, 32
    %v3350 = vpop.permute.xlu0 %3349
    %3351 = vrot.lane.b32.xlu0 %v3278, 32
    %v3352 = vpop.permute.xlu0 %3351
    %3353 = vrot.lane.b32.xlu0 %v3287, 32
    %v3354 = vpop.permute.xlu0 %3353
    %3355 = vrot.lane.b32.xlu0 %v3296, 32
    %v3356 = vpop.permute.xlu0 %3355
    %3357 = vrot.lane.b32.xlu0 %v3305, 32
    %v3358 = vpop.permute.xlu0 %3357
    %3359 = vrot.lane.b32.xlu0 %v3314, 32
    %v3360 = vpop.permute.xlu0 %3359
    %3361 = vrot.lane.b32.xlu0 %v3323, 32
    %v3362 = vpop.permute.xlu0 %3361
    %3363 = vrot.lane.b32.xlu0 %v3332, 32
    %v3364 = vpop.permute.xlu0 %3363
    %v3381 = vsel %vm1400, %v3334, %v3173
    %3382 = vst [vmem:[#allocation3] sm:$0xf] %v3381
    %v3383 = vld [vmem:[#allocation3 + $0x4] sm:$0xf]
    %v3384 = vsel %vm1400, %v3336, %v3383
    %3385 = vst [vmem:[#allocation3 + $0x4] sm:$0xf] %v3384
    %v3386 = vld [vmem:[#allocation3 + $0x8] sm:$0xf]
    %v3387 = vsel %vm1400, %v3338, %v3386
    %3388 = vst [vmem:[#allocation3 + $0x8] sm:$0xf] %v3387
    %v3389 = vld [vmem:[#allocation3 + $0xc] sm:$0xf]
    %v3390 = vsel %vm1400, %v3340, %v3389
    %3391 = vst [vmem:[#allocation3 + $0xc] sm:$0xf] %v3390
    %v3392 = vld [vmem:[#allocation3 + $0x10] sm:$0xf]
    %v3393 = vsel %vm1400, %v3342, %v3392
    %3394 = vst [vmem:[#allocation3 + $0x10] sm:$0xf] %v3393
    %v3395 = vld [vmem:[#allocation3 + $0x14] sm:$0xf]
    %v3396 = vsel %vm1400, %v3344, %v3395
    %3397 = vst [vmem:[#allocation3 + $0x14] sm:$0xf] %v3396
    %v3398 = vld [vmem:[#allocation3 + $0x18] sm:$0xf]
    %v3399 = vsel %vm1400, %v3346, %v3398
    %3400 = vst [vmem:[#allocation3 + $0x18] sm:$0xf] %v3399
    %v3401 = vld [vmem:[#allocation3 + $0x1c] sm:$0xf]
    %v3402 = vsel %vm1400, %v3348, %v3401
    %3403 = vst [vmem:[#allocation3 + $0x1c] sm:$0xf] %v3402
    %v3404 = vld [vmem:[#allocation3 + $0x20] sm:$0xf]
    %v3405 = vsel %vm1400, %v3350, %v3404
    %3406 = vst [vmem:[#allocation3 + $0x20] sm:$0xf] %v3405
    %v3407 = vld [vmem:[#allocation3 + $0x24] sm:$0xf]
    %v3408 = vsel %vm1400, %v3352, %v3407
    %3409 = vst [vmem:[#allocation3 + $0x24] sm:$0xf] %v3408
    %v3410 = vld [vmem:[#allocation3 + $0x28] sm:$0xf]
    %v3411 = vsel %vm1400, %v3354, %v3410
    %3412 = vst [vmem:[#allocation3 + $0x28] sm:$0xf] %v3411
    %v3413 = vld [vmem:[#allocation3 + $0x2c] sm:$0xf]
    %v3414 = vsel %vm1400, %v3356, %v3413
    %3415 = vst [vmem:[#allocation3 + $0x2c] sm:$0xf] %v3414
    %v3416 = vld [vmem:[#allocation3 + $0x30] sm:$0xf]
    %v3417 = vsel %vm1400, %v3358, %v3416
    %3418 = vst [vmem:[#allocation3 + $0x30] sm:$0xf] %v3417
    %v3419 = vld [vmem:[#allocation3 + $0x34] sm:$0xf]
    %v3420 = vsel %vm1400, %v3360, %v3419
    %3421 = vst [vmem:[#allocation3 + $0x34] sm:$0xf] %v3420
    %v3422 = vld [vmem:[#allocation3 + $0x38] sm:$0xf]
    %v3423 = vsel %vm1400, %v3362, %v3422
    %3424 = vst [vmem:[#allocation3 + $0x38] sm:$0xf] %v3423
    %v3425 = vld [vmem:[#allocation3 + $0x3c] sm:$0xf]
    %v3426 = vsel %vm1400, %v3364, %v3425
    %3427 = vst [vmem:[#allocation3 + $0x3c] sm:$0xf] %v3426
    %v3428 = vld [vmem:[%s609] sm:$0xf]
    %v3429 = vld [vmem:[%s609 + $0x4] sm:$0xf]
    %v3430 = vld [vmem:[%s609 + $0x8] sm:$0xf]
    %v3431 = vld [vmem:[%s609 + $0xc] sm:$0xf]
    %v3432 = vld [vmem:[%s609 + $0x10] sm:$0xf]
    %v3433 = vld [vmem:[%s609 + $0x14] sm:$0xf]
    %v3434 = vld [vmem:[%s609 + $0x18] sm:$0xf]
    %v3435 = vld [vmem:[%s609 + $0x20] sm:$0xf]
    %v3436 = vld [vmem:[%s609 + $0x24] sm:$0xf]
    %v3437 = vld [vmem:[%s609 + $0x28] sm:$0xf]
    %v3438 = vld [vmem:[%s609 + $0x2c] sm:$0xf]
    %v3439 = vld [vmem:[%s609 + $0x30] sm:$0xf]
    %v3440 = vld [vmem:[%s609 + $0x34] sm:$0xf]
    %v3441 = vld [vmem:[%s609 + $0x38] sm:$0xf]
    %v3443 = vshrl.u32 %v3428, 16
    %v3445 = vrot.slane %v3443, 7
    %v3446 = vshll.u32 %v3428, 16
    %v3448 = vor.u32 %v3445, %v3446
    %v3450 = vshrl.u32 %v3429, 16
    %v3452 = vrot.slane %v3450, 7
    %v3453 = vshll.u32 %v3429, 16
    %v3455 = vor.u32 %v3452, %v3453
    %v3457 = vshrl.u32 %v3430, 16
    %v3459 = vrot.slane %v3457, 7
    %v3460 = vshll.u32 %v3430, 16
    %v3462 = vor.u32 %v3459, %v3460
    %v3464 = vshrl.u32 %v3431, 16
    %v3466 = vrot.slane %v3464, 7
    %v3467 = vshll.u32 %v3431, 16
    %v3469 = vor.u32 %v3466, %v3467
    %v3471 = vshrl.u32 %v3432, 16
    %v3473 = vrot.slane %v3471, 7
    %v3474 = vshll.u32 %v3432, 16
    %v3476 = vor.u32 %v3473, %v3474
    %v3478 = vshrl.u32 %v3433, 16
    %v3480 = vrot.slane %v3478, 7
    %v3481 = vshll.u32 %v3433, 16
    %v3483 = vor.u32 %v3480, %v3481
    %v3485 = vshrl.u32 %v3434, 16
    %v3487 = vrot.slane %v3485, 7
    %v3488 = vshll.u32 %v3434, 16
    %v3490 = vor.u32 %v3487, %v3488
    %v3492 = vshrl.u32 %v3435, 16
    %v3494 = vrot.slane %v3492, 7
    %v3495 = vshll.u32 %v3435, 16
    %v3497 = vor.u32 %v3494, %v3495
    %v3499 = vshrl.u32 %v3436, 16
    %v3501 = vrot.slane %v3499, 7
    %v3502 = vshll.u32 %v3436, 16
    %v3504 = vor.u32 %v3501, %v3502
    %v3506 = vshrl.u32 %v3437, 16
    %v3508 = vrot.slane %v3506, 7
    %v3509 = vshll.u32 %v3437, 16
    %v3511 = vor.u32 %v3508, %v3509
    %v3513 = vshrl.u32 %v3438, 16
    %v3515 = vrot.slane %v3513, 7
    %v3516 = vshll.u32 %v3438, 16
    %v3518 = vor.u32 %v3515, %v3516
    %v3520 = vshrl.u32 %v3439, 16
    %v3522 = vrot.slane %v3520, 7
    %v3523 = vshll.u32 %v3439, 16
    %v3525 = vor.u32 %v3522, %v3523
    %v3527 = vshrl.u32 %v3440, 16
    %v3529 = vrot.slane %v3527, 7
    %v3530 = vshll.u32 %v3440, 16
    %v3532 = vor.u32 %v3529, %v3530
    %v3534 = vshrl.u32 %v3441, 16
    %v3536 = vrot.slane %v3534, 7
    %v3537 = vshll.u32 %v3441, 16
    %v3539 = vor.u32 %v3536, %v3537
    %3540 = vrot.lane.b32.xlu0 %v3448, 36
    %v3541 = vpop.permute.xlu0 %3540
    %3542 = vrot.lane.b32.xlu0 %v3455, 36
    %v3543 = vpop.permute.xlu0 %3542
    %3544 = vrot.lane.b32.xlu0 %v3462, 36
    %v3545 = vpop.permute.xlu0 %3544
    %3546 = vrot.lane.b32.xlu0 %v3469, 36
    %v3547 = vpop.permute.xlu0 %3546
    %3548 = vrot.lane.b32.xlu0 %v3476, 36
    %v3549 = vpop.permute.xlu0 %3548
    %3550 = vrot.lane.b32.xlu0 %v3483, 36
    %v3551 = vpop.permute.xlu0 %3550
    %3552 = vrot.lane.b32.xlu0 %v3490, 36
    %v3553 = vpop.permute.xlu0 %3552
    %3554 = vrot.lane.b32.xlu0 %v3497, 36
    %v3555 = vpop.permute.xlu0 %3554
    %3556 = vrot.lane.b32.xlu0 %v3504, 36
    %v3557 = vpop.permute.xlu0 %3556
    %3558 = vrot.lane.b32.xlu0 %v3511, 36
    %v3559 = vpop.permute.xlu0 %3558
    %3560 = vrot.lane.b32.xlu0 %v3518, 36
    %v3561 = vpop.permute.xlu0 %3560
    %3562 = vrot.lane.b32.xlu0 %v3525, 36
    %v3563 = vpop.permute.xlu0 %3562
    %3564 = vrot.lane.b32.xlu0 %v3532, 36
    %v3565 = vpop.permute.xlu0 %3564
    %3566 = vrot.lane.b32.xlu0 %v3539, 36
    %v3567 = vpop.permute.xlu0 %3566
    %v3582 = vld [vmem:[#allocation3] sm:$0xf]
    %v3583 = vsel %vm1603, %v3541, %v3582
    %3584 = vst [vmem:[#allocation3] sm:$0xf] %v3583
    %v3585 = vld [vmem:[#allocation3 + $0x4] sm:$0xf]
    %v3586 = vsel %vm1603, %v3543, %v3585
    %3587 = vst [vmem:[#allocation3 + $0x4] sm:$0xf] %v3586
    %v3588 = vld [vmem:[#allocation3 + $0x8] sm:$0xf]
    %v3589 = vsel %vm1603, %v3545, %v3588
    %3590 = vst [vmem:[#allocation3 + $0x8] sm:$0xf] %v3589
    %v3591 = vld [vmem:[#allocation3 + $0xc] sm:$0xf]
    %v3592 = vsel %vm1603, %v3547, %v3591
    %3593 = vst [vmem:[#allocation3 + $0xc] sm:$0xf] %v3592
    %v3594 = vld [vmem:[#allocation3 + $0x10] sm:$0xf]
    %v3595 = vsel %vm1603, %v3549, %v3594
    %3596 = vst [vmem:[#allocation3 + $0x10] sm:$0xf] %v3595
    %v3597 = vld [vmem:[#allocation3 + $0x14] sm:$0xf]
    %v3598 = vsel %vm1603, %v3551, %v3597
    %3599 = vst [vmem:[#allocation3 + $0x14] sm:$0xf] %v3598
    %v3600 = vld [vmem:[#allocation3 + $0x18] sm:$0xf]
    %v3601 = vsel %vm1603, %v3553, %v3600
    %3602 = vst [vmem:[#allocation3 + $0x18] sm:$0xf] %v3601
    %v3603 = vld [vmem:[#allocation3 + $0x20] sm:$0xf]
    %v3604 = vsel %vm1603, %v3555, %v3603
    %3605 = vst [vmem:[#allocation3 + $0x20] sm:$0xf] %v3604
    %v3606 = vld [vmem:[#allocation3 + $0x24] sm:$0xf]
    %v3607 = vsel %vm1603, %v3557, %v3606
    %3608 = vst [vmem:[#allocation3 + $0x24] sm:$0xf] %v3607
    %v3609 = vld [vmem:[#allocation3 + $0x28] sm:$0xf]
    %v3610 = vsel %vm1603, %v3559, %v3609
    %3611 = vst [vmem:[#allocation3 + $0x28] sm:$0xf] %v3610
    %v3612 = vld [vmem:[#allocation3 + $0x2c] sm:$0xf]
    %v3613 = vsel %vm1603, %v3561, %v3612
    %3614 = vst [vmem:[#allocation3 + $0x2c] sm:$0xf] %v3613
    %v3615 = vld [vmem:[#allocation3 + $0x30] sm:$0xf]
    %v3616 = vsel %vm1603, %v3563, %v3615
    %3617 = vst [vmem:[#allocation3 + $0x30] sm:$0xf] %v3616
    %v3618 = vld [vmem:[#allocation3 + $0x34] sm:$0xf]
    %v3619 = vsel %vm1603, %v3565, %v3618
    %3620 = vst [vmem:[#allocation3 + $0x34] sm:$0xf] %v3619
    %v3621 = vld [vmem:[#allocation3 + $0x38] sm:$0xf]
    %v3622 = vsel %vm1603, %v3567, %v3621
    %3623 = vst [vmem:[#allocation3 + $0x38] sm:$0xf] %v3622
    %v3624 = vld [vmem:[%s609] sm:$0xf]
    %v3625 = vld [vmem:[%s609 + $0x4] sm:$0xf]
    %v3626 = vld [vmem:[%s609 + $0x8] sm:$0xf]
    %v3627 = vld [vmem:[%s609 + $0xc] sm:$0xf]
    %v3628 = vld [vmem:[%s609 + $0x10] sm:$0xf]
    %v3629 = vld [vmem:[%s609 + $0x14] sm:$0xf]
    %v3630 = vld [vmem:[%s609 + $0x18] sm:$0xf]
    %v3631 = vld [vmem:[%s609 + $0x20] sm:$0xf]
    %v3632 = vld [vmem:[%s609 + $0x24] sm:$0xf]
    %v3633 = vld [vmem:[%s609 + $0x28] sm:$0xf]
    %v3634 = vld [vmem:[%s609 + $0x2c] sm:$0xf]
    %v3635 = vld [vmem:[%s609 + $0x30] sm:$0xf]
    %v3636 = vld [vmem:[%s609 + $0x34] sm:$0xf]
    %v3637 = vld [vmem:[%s609 + $0x38] sm:$0xf]
    %3652 = vrot.lane.b32.xlu0 %v3624, 40
    %v3653 = vpop.permute.xlu0 %3652
    %3654 = vrot.lane.b32.xlu0 %v3625, 40
    %v3655 = vpop.permute.xlu0 %3654
    %3656 = vrot.lane.b32.xlu0 %v3626, 40
    %v3657 = vpop.permute.xlu0 %3656
    %3658 = vrot.lane.b32.xlu0 %v3627, 40
    %v3659 = vpop.permute.xlu0 %3658
    %3660 = vrot.lane.b32.xlu0 %v3628, 40
    %v3661 = vpop.permute.xlu0 %3660
    %3662 = vrot.lane.b32.xlu0 %v3629, 40
    %v3663 = vpop.permute.xlu0 %3662
    %3664 = vrot.lane.b32.xlu0 %v3630, 40
    %v3665 = vpop.permute.xlu0 %3664
    %3666 = vrot.lane.b32.xlu0 %v3631, 40
    %v3667 = vpop.permute.xlu0 %3666
    %3668 = vrot.lane.b32.xlu0 %v3632, 40
    %v3669 = vpop.permute.xlu0 %3668
    %3670 = vrot.lane.b32.xlu0 %v3633, 40
    %v3671 = vpop.permute.xlu0 %3670
    %3672 = vrot.lane.b32.xlu0 %v3634, 40
    %v3673 = vpop.permute.xlu0 %3672
    %3674 = vrot.lane.b32.xlu0 %v3635, 40
    %v3675 = vpop.permute.xlu0 %3674
    %3676 = vrot.lane.b32.xlu0 %v3636, 40
    %v3677 = vpop.permute.xlu0 %3676
    %3678 = vrot.lane.b32.xlu0 %v3637, 40
    %v3679 = vpop.permute.xlu0 %3678
    %3694 = vst.msk [vmem:[#allocation3] sm:$0xf] %vm350, %v3653
    %3695 = vst.msk [vmem:[#allocation3 + $0x4] sm:$0xf] %vm350, %v3655
    %3696 = vst.msk [vmem:[#allocation3 + $0x8] sm:$0xf] %vm350, %v3657
    %3697 = vst.msk [vmem:[#allocation3 + $0xc] sm:$0xf] %vm350, %v3659
    %3698 = vst.msk [vmem:[#allocation3 + $0x10] sm:$0xf] %vm350, %v3661
    %3699 = vst.msk [vmem:[#allocation3 + $0x14] sm:$0xf] %vm350, %v3663
    %3700 = vst.msk [vmem:[#allocation3 + $0x18] sm:$0xf] %vm350, %v3665
    %3701 = vst.msk [vmem:[#allocation3 + $0x20] sm:$0xf] %vm350, %v3667
    %3702 = vst.msk [vmem:[#allocation3 + $0x24] sm:$0xf] %vm350, %v3669
    %3703 = vst.msk [vmem:[#allocation3 + $0x28] sm:$0xf] %vm350, %v3671
    %3704 = vst.msk [vmem:[#allocation3 + $0x2c] sm:$0xf] %vm350, %v3673
    %3705 = vst.msk [vmem:[#allocation3 + $0x30] sm:$0xf] %vm350, %v3675
    %3706 = vst.msk [vmem:[#allocation3 + $0x34] sm:$0xf] %vm350, %v3677
    %3707 = vst.msk [vmem:[#allocation3 + $0x38] sm:$0xf] %vm350, %v3679
    %v3708 = vld [vmem:[%s609] sm:$0xf]
    %v3709 = vld [vmem:[%s609 + $0x4] sm:$0xf]
    %v3710 = vld [vmem:[%s609 + $0x8] sm:$0xf]
    %v3711 = vld [vmem:[%s609 + $0xc] sm:$0xf]
    %v3712 = vld [vmem:[%s609 + $0x10] sm:$0xf]
    %v3713 = vld [vmem:[%s609 + $0x14] sm:$0xf]
    %v3714 = vld [vmem:[%s609 + $0x18] sm:$0xf]
    %v3715 = vld [vmem:[%s609 + $0x20] sm:$0xf]
    %v3716 = vld [vmem:[%s609 + $0x24] sm:$0xf]
    %v3717 = vld [vmem:[%s609 + $0x28] sm:$0xf]
    %v3718 = vld [vmem:[%s609 + $0x2c] sm:$0xf]
    %v3719 = vld [vmem:[%s609 + $0x30] sm:$0xf]
    %v3720 = vld [vmem:[%s609 + $0x34] sm:$0xf]
    %v3721 = vld [vmem:[%s609 + $0x38] sm:$0xf]
    %v3723 = vshrl.u32 %v3708, 16
    %v3725 = vrot.slane %v3723, 4
    %v3726 = vshll.u32 %v3708, 16
    %v3728 = vrot.slane %v3726, 5
    %v3729 = vor.u32 %v3725, %v3728
    %v3730 = vrot.slane %v3729, 4
    %v3732 = vshrl.u32 %v3709, 16
    %v3734 = vrot.slane %v3732, 4
    %v3735 = vshll.u32 %v3709, 16
    %v3737 = vrot.slane %v3735, 5
    %v3738 = vor.u32 %v3734, %v3737
    %v3739 = vrot.slane %v3738, 4
    %v3741 = vshrl.u32 %v3710, 16
    %v3743 = vrot.slane %v3741, 4
    %v3744 = vshll.u32 %v3710, 16
    %v3746 = vrot.slane %v3744, 5
    %v3747 = vor.u32 %v3743, %v3746
    %v3748 = vrot.slane %v3747, 4
    %v3750 = vshrl.u32 %v3711, 16
    %v3752 = vrot.slane %v3750, 4
    %v3753 = vshll.u32 %v3711, 16
    %v3755 = vrot.slane %v3753, 5
    %v3756 = vor.u32 %v3752, %v3755
    %v3757 = vrot.slane %v3756, 4
    %v3759 = vshrl.u32 %v3712, 16
    %v3761 = vrot.slane %v3759, 4
    %v3762 = vshll.u32 %v3712, 16
    %v3764 = vrot.slane %v3762, 5
    %v3765 = vor.u32 %v3761, %v3764
    %v3766 = vrot.slane %v3765, 4
    %v3768 = vshrl.u32 %v3713, 16
    %v3770 = vrot.slane %v3768, 4
    %v3771 = vshll.u32 %v3713, 16
    %v3773 = vrot.slane %v3771, 5
    %v3774 = vor.u32 %v3770, %v3773
    %v3775 = vrot.slane %v3774, 4
    %v3777 = vshrl.u32 %v3714, 16
    %v3779 = vrot.slane %v3777, 4
    %v3780 = vshll.u32 %v3714, 16
    %v3782 = vrot.slane %v3780, 5
    %v3783 = vor.u32 %v3779, %v3782
    %v3784 = vrot.slane %v3783, 4
    %v3786 = vshrl.u32 %v3715, 16
    %v3788 = vrot.slane %v3786, 4
    %v3789 = vshll.u32 %v3715, 16
    %v3791 = vrot.slane %v3789, 5
    %v3792 = vor.u32 %v3788, %v3791
    %v3793 = vrot.slane %v3792, 4
    %v3795 = vshrl.u32 %v3716, 16
    %v3797 = vrot.slane %v3795, 4
    %v3798 = vshll.u32 %v3716, 16
    %v3800 = vrot.slane %v3798, 5
    %v3801 = vor.u32 %v3797, %v3800
    %v3802 = vrot.slane %v3801, 4
    %v3804 = vshrl.u32 %v3717, 16
    %v3806 = vrot.slane %v3804, 4
    %v3807 = vshll.u32 %v3717, 16
    %v3809 = vrot.slane %v3807, 5
    %v3810 = vor.u32 %v3806, %v3809
    %v3811 = vrot.slane %v3810, 4
    %v3813 = vshrl.u32 %v3718, 16
    %v3815 = vrot.slane %v3813, 4
    %v3816 = vshll.u32 %v3718, 16
    %v3818 = vrot.slane %v3816, 5
    %v3819 = vor.u32 %v3815, %v3818
    %v3820 = vrot.slane %v3819, 4
    %v3822 = vshrl.u32 %v3719, 16
    %v3824 = vrot.slane %v3822, 4
    %v3825 = vshll.u32 %v3719, 16
    %v3827 = vrot.slane %v3825, 5
    %v3828 = vor.u32 %v3824, %v3827
    %v3829 = vrot.slane %v3828, 4
    %v3831 = vshrl.u32 %v3720, 16
    %v3833 = vrot.slane %v3831, 4
    %v3834 = vshll.u32 %v3720, 16
    %v3836 = vrot.slane %v3834, 5
    %v3837 = vor.u32 %v3833, %v3836
    %v3838 = vrot.slane %v3837, 4
    %v3840 = vshrl.u32 %v3721, 16
    %v3842 = vrot.slane %v3840, 4
    %v3843 = vshll.u32 %v3721, 16
    %v3845 = vrot.slane %v3843, 5
    %v3846 = vor.u32 %v3842, %v3845
    %v3847 = vrot.slane %v3846, 4
    %3848 = vrot.lane.b32.xlu0 %v3730, 44
    %v3849 = vpop.permute.xlu0 %3848
    %3850 = vrot.lane.b32.xlu0 %v3739, 44
    %v3851 = vpop.permute.xlu0 %3850
    %3852 = vrot.lane.b32.xlu0 %v3748, 44
    %v3853 = vpop.permute.xlu0 %3852
    %3854 = vrot.lane.b32.xlu0 %v3757, 44
    %v3855 = vpop.permute.xlu0 %3854
    %3856 = vrot.lane.b32.xlu0 %v3766, 44
    %v3857 = vpop.permute.xlu0 %3856
    %3858 = vrot.lane.b32.xlu0 %v3775, 44
    %v3859 = vpop.permute.xlu0 %3858
    %3860 = vrot.lane.b32.xlu0 %v3784, 44
    %v3861 = vpop.permute.xlu0 %3860
    %3862 = vrot.lane.b32.xlu0 %v3793, 44
    %v3863 = vpop.permute.xlu0 %3862
    %3864 = vrot.lane.b32.xlu0 %v3802, 44
    %v3865 = vpop.permute.xlu0 %3864
    %3866 = vrot.lane.b32.xlu0 %v3811, 44
    %v3867 = vpop.permute.xlu0 %3866
    %3868 = vrot.lane.b32.xlu0 %v3820, 44
    %v3869 = vpop.permute.xlu0 %3868
    %3870 = vrot.lane.b32.xlu0 %v3829, 44
    %v3871 = vpop.permute.xlu0 %3870
    %3872 = vrot.lane.b32.xlu0 %v3838, 44
    %v3873 = vpop.permute.xlu0 %3872
    %3874 = vrot.lane.b32.xlu0 %v3847, 44
    %v3875 = vpop.permute.xlu0 %3874
    %v3890 = vld [vmem:[#allocation3] sm:$0xf]
    %v3891 = vsel %vm1913, %v3849, %v3890
    %3892 = vst [vmem:[#allocation3] sm:$0xf] %v3891
    %v3893 = vld [vmem:[#allocation3 + $0x4] sm:$0xf]
    %v3894 = vsel %vm1913, %v3851, %v3893
    %3895 = vst [vmem:[#allocation3 + $0x4] sm:$0xf] %v3894
    %v3896 = vld [vmem:[#allocation3 + $0x8] sm:$0xf]
    %v3897 = vsel %vm1913, %v3853, %v3896
    %3898 = vst [vmem:[#allocation3 + $0x8] sm:$0xf] %v3897
    %v3899 = vld [vmem:[#allocation3 + $0xc] sm:$0xf]
    %v3900 = vsel %vm1913, %v3855, %v3899
    %3901 = vst [vmem:[#allocation3 + $0xc] sm:$0xf] %v3900
    %v3902 = vld [vmem:[#allocation3 + $0x10] sm:$0xf]
    %v3903 = vsel %vm1913, %v3857, %v3902
    %3904 = vst [vmem:[#allocation3 + $0x10] sm:$0xf] %v3903
    %v3905 = vld [vmem:[#allocation3 + $0x14] sm:$0xf]
    %v3906 = vsel %vm1913, %v3859, %v3905
    %3907 = vst [vmem:[#allocation3 + $0x14] sm:$0xf] %v3906
    %v3908 = vld [vmem:[#allocation3 + $0x18] sm:$0xf]
    %v3909 = vsel %vm1913, %v3861, %v3908
    %3910 = vst [vmem:[#allocation3 + $0x18] sm:$0xf] %v3909
    %v3911 = vld [vmem:[#allocation3 + $0x20] sm:$0xf]
    %v3912 = vsel %vm1913, %v3863, %v3911
    %3913 = vst [vmem:[#allocation3 + $0x20] sm:$0xf] %v3912
    %v3914 = vld [vmem:[#allocation3 + $0x24] sm:$0xf]
    %v3915 = vsel %vm1913, %v3865, %v3914
    %3916 = vst [vmem:[#allocation3 + $0x24] sm:$0xf] %v3915
    %v3917 = vld [vmem:[#allocation3 + $0x28] sm:$0xf]
    %v3918 = vsel %vm1913, %v3867, %v3917
    %3919 = vst [vmem:[#allocation3 + $0x28] sm:$0xf] %v3918
    %v3920 = vld [vmem:[#allocation3 + $0x2c] sm:$0xf]
    %v3921 = vsel %vm1913, %v3869, %v3920
    %3922 = vst [vmem:[#allocation3 + $0x2c] sm:$0xf] %v3921
    %v3923 = vld [vmem:[#allocation3 + $0x30] sm:$0xf]
    %v3924 = vsel %vm1913, %v3871, %v3923
    %3925 = vst [vmem:[#allocation3 + $0x30] sm:$0xf] %v3924
    %v3926 = vld [vmem:[#allocation3 + $0x34] sm:$0xf]
    %v3927 = vsel %vm1913, %v3873, %v3926
    %3928 = vst [vmem:[#allocation3 + $0x34] sm:$0xf] %v3927
    %v3929 = vld [vmem:[#allocation3 + $0x38] sm:$0xf]
    %v3930 = vsel %vm1913, %v3875, %v3929
    %3931 = vst [vmem:[#allocation3 + $0x38] sm:$0xf] %v3930
    %v3932 = vld [vmem:[#allocation3] sm:$0xf]
    %v3933 = vld [vmem:[#allocation3 + $0x4] sm:$0xf]
    %v3934 = vld [vmem:[#allocation3 + $0x8] sm:$0xf]
    %v3935 = vld [vmem:[#allocation3 + $0xc] sm:$0xf]
    %v3936 = vld [vmem:[#allocation3 + $0x10] sm:$0xf]
    %v3937 = vld [vmem:[#allocation3 + $0x14] sm:$0xf]
    %v3938 = vld [vmem:[#allocation3 + $0x18] sm:$0xf]
    %v3939 = vld [vmem:[#allocation3 + $0x1c] sm:$0xf]
    %v3940 = vld [vmem:[#allocation3 + $0x20] sm:$0xf]
    %v3941 = vld [vmem:[#allocation3 + $0x24] sm:$0xf]
    %v3942 = vld [vmem:[#allocation3 + $0x28] sm:$0xf]
    %v3943 = vld [vmem:[#allocation3 + $0x2c] sm:$0xf]
    %v3944 = vld [vmem:[#allocation3 + $0x30] sm:$0xf]
    %v3945 = vld [vmem:[#allocation3 + $0x34] sm:$0xf]
    %v3946 = vld [vmem:[#allocation3 + $0x38] sm:$0xf]
    %v3947 = vld [vmem:[#allocation3 + $0x3c] sm:$0xf]
    %s3948 = scalar_lea.vmem %s1, 64
    %v3949 = vld [vmem:[%s3948] sm:$0xf]
    %v3950 = vld [vmem:[%s3948 + $0x4] sm:$0xf]
    %v3951 = vld [vmem:[%s3948 + $0x8] sm:$0xf]
    %v3952 = vld [vmem:[%s3948 + $0xc] sm:$0xf]
    %v3953 = vld [vmem:[%s3948 + $0x10] sm:$0xf]
    %v3954 = vld [vmem:[%s3948 + $0x14] sm:$0xf]
    %v3955 = vld [vmem:[%s3948 + $0x18] sm:$0xf]
    %v3956 = vld [vmem:[%s3948 + $0x1c] sm:$0xf]
    %v3957 = vld [vmem:[%s3948 + $0x20] sm:$0xf]
    %v3958 = vld [vmem:[%s3948 + $0x24] sm:$0xf]
    %v3959 = vld [vmem:[%s3948 + $0x28] sm:$0xf]
    %v3960 = vld [vmem:[%s3948 + $0x2c] sm:$0xf]
    %v3961 = vld [vmem:[%s3948 + $0x30] sm:$0xf]
    %v3962 = vld [vmem:[%s3948 + $0x34] sm:$0xf]
    %v3963 = vld [vmem:[%s3948 + $0x38] sm:$0xf]
    %v3964 = vld [vmem:[%s3948 + $0x3c] sm:$0xf]
    %s3965 = scalar_lea.vmem %s2, 1
    %v3966 = vld [vmem:[%s3965] sm:$0x1]
    %v3968 = vlaneseq
    %v3969 = vshrl.u32 %v3968, 7
    %v3970 = vsub.s32 0, %v3969
    %v3971 = vrot.slane %v3966, %v3970
    %v3989 = vunpack.c.l.b16 %v3932
    %v3990 = vunpack.c.l.b16 %v3933
    %v3991 = vunpack.c.l.b16 %v3934
    %v3992 = vunpack.c.l.b16 %v3935
    %v3993 = vunpack.c.l.b16 %v3936
    %v3994 = vunpack.c.l.b16 %v3937
    %v3995 = vunpack.c.l.b16 %v3938
    %v3996 = vunpack.c.l.b16 %v3939
    %v3997 = vunpack.c.l.b16 %v3940
    %v3998 = vunpack.c.l.b16 %v3941
    %v3999 = vunpack.c.l.b16 %v3942
    %v4000 = vunpack.c.l.b16 %v3943
    %v4001 = vunpack.c.l.b16 %v3944
    %v4002 = vunpack.c.l.b16 %v3945
    %v4003 = vunpack.c.l.b16 %v3946
    %v4004 = vunpack.c.l.b16 %v3947
    %v4005 = vpack.c.b16 %v3990, %v3989
    %v4006 = vpack.c.b16 %v3992, %v3991
    %v4007 = vpack.c.b16 %v3994, %v3993
    %v4008 = vpack.c.b16 %v3996, %v3995
    %v4009 = vpack.c.b16 %v3998, %v3997
    %v4010 = vpack.c.b16 %v4000, %v3999
    %v4011 = vpack.c.b16 %v4002, %v4001
    %v4012 = vpack.c.b16 %v4004, %v4003
    %v4037 = vunpack.c.l.b16 %v3949
    %v4038 = vunpack.c.l.b16 %v3950
    %v4039 = vunpack.c.l.b16 %v3951
    %v4040 = vunpack.c.l.b16 %v3952
    %v4041 = vunpack.c.l.b16 %v3953
    %v4042 = vunpack.c.l.b16 %v3954
    %v4043 = vunpack.c.l.b16 %v3955
    %v4044 = vunpack.c.l.b16 %v3956
    %v4045 = vunpack.c.l.b16 %v3957
    %v4046 = vunpack.c.l.b16 %v3958
    %v4047 = vunpack.c.l.b16 %v3959
    %v4048 = vunpack.c.l.b16 %v3960
    %v4049 = vunpack.c.l.b16 %v3961
    %v4050 = vunpack.c.l.b16 %v3962
    %v4051 = vunpack.c.l.b16 %v3963
    %v4052 = vunpack.c.l.b16 %v3964
    %v4053 = vpack.c.b16 %v4038, %v4037
    %v4054 = vpack.c.b16 %v4040, %v4039
    %v4055 = vpack.c.b16 %v4042, %v4041
    %v4056 = vpack.c.b16 %v4044, %v4043
    %v4057 = vpack.c.b16 %v4046, %v4045
    %v4058 = vpack.c.b16 %v4048, %v4047
    %v4059 = vpack.c.b16 %v4050, %v4049
    %v4060 = vpack.c.b16 %v4052, %v4051
    %4069 = vmatprep.subr.bf16.mxu0 0
    %4070 = vmatpush1.bf16.msra.mxu0 %v4053
    %4071 = vmatprep.subr.bf16.mxu0 0
    %4072 = vmatpush1.bf16.msra.mxu0 %v4054
    %4073 = vmatprep.subr.bf16.mxu0 0
    %4074 = vmatpush1.bf16.msra.mxu0 %v4055
    %4075 = vmatprep.subr.bf16.mxu0 0
    %4076 = vmatpush1.bf16.msra.mxu0 %v4056
    %4077 = vmatprep.subr.bf16.mxu0 0
    %4078 = vmatpush1.bf16.msra.mxu0 %v4057
    %4079 = vmatprep.subr.bf16.mxu0 0
    %4080 = vmatpush1.bf16.msra.mxu0 %v4058
    %4081 = vmatprep.subr.bf16.mxu0 0
    %4082 = vmatpush1.bf16.msra.mxu0 %v4059
    %4083 = vmatprep.subr.bf16.mxu0 0
    %4084 = vmatpush1.bf16.msra.mxu0 %v4060
    %4085 = vmatprep.subr.bf16.mxu0 0
    %4086 = vmatpush1.bf16.msra.mxu0 0
    %4087 = vmatprep.subr.bf16.mxu0 0
    %4088 = vmatpush1.bf16.msra.mxu0 0
    %4089 = vmatprep.subr.bf16.mxu0 0
    %4090 = vmatpush1.bf16.msra.mxu0 0
    %4091 = vmatprep.subr.bf16.mxu0 0
    %4092 = vmatpush1.bf16.msra.mxu0 0
    %4093 = vmatprep.subr.bf16.mxu0 0
    %4094 = vmatpush1.bf16.msra.mxu0 0
    %4095 = vmatprep.subr.bf16.mxu0 0
    %4096 = vmatpush1.bf16.msra.mxu0 0
    %4097 = vmatprep.subr.bf16.mxu0 0
    %4098 = vmatpush1.bf16.msra.mxu0 0
    %4099 = vmatprep.subr.bf16.mxu0 0
    %4100 = vmatpush1.bf16.msra.mxu0 0
    %4101 = vmatprep.mubr.bf16.mxu0 0
    %4102 = vmatmul.mubr.bf16.gmra.mrb[0].mxu0 %v4005
    %v4103 = vpop.f32.mrb[0].mxu0
    %v4104 = vadd.f32 %v3971, %v4103
    %v4105 = vpop.f32.mrb[0].mxu0
    %v4106 = vpop.f32.mrb[0].mxu0
    %v4107 = vadd.f32 %v3971, %v4106
    %v4108 = vpop.f32.mrb[0].mxu0
    %4109 = vmatprep.mubr.bf16.mxu0 0
    %4110 = vmatmul.mubr.bf16.gmra.mrb[0].mxu0 %v4006
    %v4111 = vpop.f32.mrb[0].mxu0
    %v4112 = vadd.f32 %v3971, %v4111
    %v4113 = vpop.f32.mrb[0].mxu0
    %v4114 = vpop.f32.mrb[0].mxu0
    %v4115 = vadd.f32 %v3971, %v4114
    %v4116 = vpop.f32.mrb[0].mxu0
    %4117 = vmatprep.mubr.bf16.mxu0 0
    %4118 = vmatmul.mubr.bf16.gmra.mrb[0].mxu0 %v4007
    %v4119 = vpop.f32.mrb[0].mxu0
    %v4120 = vadd.f32 %v3971, %v4119
    %v4121 = vpop.f32.mrb[0].mxu0
    %v4122 = vpop.f32.mrb[0].mxu0
    %v4123 = vadd.f32 %v3971, %v4122
    %v4124 = vpop.f32.mrb[0].mxu0
    %4125 = vmatprep.mubr.bf16.mxu0 0
    %4126 = vmatmul.mubr.bf16.gmra.mrb[0].mxu0 %v4008
    %v4127 = vpop.f32.mrb[0].mxu0
    %v4128 = vadd.f32 %v3971, %v4127
    %v4129 = vpop.f32.mrb[0].mxu0
    %v4130 = vpop.f32.mrb[0].mxu0
    %v4131 = vadd.f32 %v3971, %v4130
    %v4132 = vpop.f32.mrb[0].mxu0
    %4133 = vmatprep.mubr.bf16.mxu0 0
    %4134 = vmatmul.mubr.bf16.gmra.mrb[0].mxu0 %v4009
    %v4135 = vpop.f32.mrb[0].mxu0
    %v4136 = vadd.f32 %v3971, %v4135
    %v4137 = vpop.f32.mrb[0].mxu0
    %v4138 = vpop.f32.mrb[0].mxu0
    %v4139 = vadd.f32 %v3971, %v4138
    %v4140 = vpop.f32.mrb[0].mxu0
    %4141 = vmatprep.mubr.bf16.mxu0 0
    %4142 = vmatmul.mubr.bf16.gmra.mrb[0].mxu0 %v4010
    %v4143 = vpop.f32.mrb[0].mxu0
    %v4144 = vadd.f32 %v3971, %v4143
    %v4145 = vpop.f32.mrb[0].mxu0
    %v4146 = vpop.f32.mrb[0].mxu0
    %v4147 = vadd.f32 %v3971, %v4146
    %v4148 = vpop.f32.mrb[0].mxu0
    %4149 = vmatprep.mubr.bf16.mxu0 0
    %4150 = vmatmul.mubr.bf16.gmra.mrb[0].mxu0 %v4011
    %v4151 = vpop.f32.mrb[0].mxu0
    %v4152 = vadd.f32 %v3971, %v4151
    %v4153 = vpop.f32.mrb[0].mxu0
    %v4154 = vpop.f32.mrb[0].mxu0
    %v4155 = vadd.f32 %v3971, %v4154
    %v4156 = vpop.f32.mrb[0].mxu0
    %4157 = vmatprep.mubr.bf16.mxu0 0
    %4158 = vmatmul.mubr.bf16.gmra.mrb[0].mxu0 %v4012
    %v4159 = vpop.f32.mrb[0].mxu0
    %v4160 = vadd.f32 %v3971, %v4159
    %v4161 = vpop.f32.mrb[0].mxu0
    %v4162 = vpop.f32.mrb[0].mxu0
    %v4163 = vadd.f32 %v3971, %v4162
    %v4164 = vpop.f32.mrb[0].mxu0
    %4165 = vdwg.mxu0
    %v4166 = vmax.f32 %v4104, 0.0
    %v4167 = vmax.f32 %v4107, 0.0
    %v4168 = vmax.f32 %v4112, 0.0
    %v4169 = vmax.f32 %v4115, 0.0
    %v4170 = vmax.f32 %v4120, 0.0
    %v4171 = vmax.f32 %v4123, 0.0
    %v4172 = vmax.f32 %v4128, 0.0
    %v4173 = vmax.f32 %v4131, 0.0
    %v4174 = vmax.f32 %v4136, 0.0
    %v4175 = vmax.f32 %v4139, 0.0
    %v4176 = vmax.f32 %v4144, 0.0
    %v4177 = vmax.f32 %v4147, 0.0
    %v4178 = vmax.f32 %v4152, 0.0
    %v4179 = vmax.f32 %v4155, 0.0
    %v4180 = vmax.f32 %v4160, 0.0
    %v4181 = vmax.f32 %v4163, 0.0
    %v4182 = vpack.c.bf16 %v4167, %v4166
    %v4183 = vpack.c.bf16 %v4169, %v4168
    %v4184 = vpack.c.bf16 %v4171, %v4170
    %v4185 = vpack.c.bf16 %v4173, %v4172
    %v4186 = vpack.c.bf16 %v4175, %v4174
    %v4187 = vpack.c.bf16 %v4177, %v4176
    %v4188 = vpack.c.bf16 %v4179, %v4178
    %v4189 = vpack.c.bf16 %v4181, %v4180
    %s4190 = scalar_lea.vmem %s3, 16
    %v4191 = vld [vmem:[%s4190] sm:$0xf]
    %v4192 = vld [vmem:[%s4190 + $0x4] sm:$0xf]
    %v4193 = vld [vmem:[%s4190 + $0x8] sm:$0xf]
    %v4194 = vld [vmem:[%s4190 + $0xc] sm:$0xf]
    %v4199 = vunpack.c.l.b16 %v4191
    %v4200 = vunpack.c.l.b16 %v4192
    %v4201 = vunpack.c.l.b16 %v4193
    %v4202 = vunpack.c.l.b16 %v4194
    %v4203 = vpack.c.b16 %v4200, %v4199
    %v4204 = vpack.c.b16 %v4202, %v4201
    %v4208 = vsel %vm2228, %v4182, 0
    %v4211 = vsel %vm2228, %v4183, 0
    %v4214 = vsel %vm2228, %v4184, 0
    %v4217 = vsel %vm2228, %v4185, 0
    %v4220 = vsel %vm2228, %v4186, 0
    %v4223 = vsel %vm2228, %v4187, 0
    %v4226 = vsel %vm2228, %v4188, 0
    %v4229 = vsel %vm2228, %v4189, 0
    %4231 = vmatprep.subr.bf16.mxu0 0
    %4232 = vmatpush1.bf16.msra.mxu0 %v4203
    %4233 = vmatprep.subr.bf16.mxu0 0
    %4234 = vmatpush1.bf16.msra.mxu0 %v4204
    %4235 = vmatprep.subr.bf16.mxu0 0
    %4236 = vmatpush1.bf16.msra.mxu0 0
    %4237 = vmatprep.subr.bf16.mxu0 0
    %4238 = vmatpush1.bf16.msra.mxu0 0
    %4239 = vmatprep.subr.bf16.mxu0 0
    %4240 = vmatpush1.bf16.msra.mxu0 0
    %4241 = vmatprep.subr.bf16.mxu0 0
    %4242 = vmatpush1.bf16.msra.mxu0 0
    %4243 = vmatprep.subr.bf16.mxu0 0
    %4244 = vmatpush1.bf16.msra.mxu0 0
    %4245 = vmatprep.subr.bf16.mxu0 0
    %4246 = vmatpush1.bf16.msra.mxu0 0
    %4247 = vmatprep.subr.bf16.mxu0 0
    %4248 = vmatpush1.bf16.msra.mxu0 0
    %4249 = vmatprep.subr.bf16.mxu0 0
    %4250 = vmatpush1.bf16.msra.mxu0 0
    %4251 = vmatprep.subr.bf16.mxu0 0
    %4252 = vmatpush1.bf16.msra.mxu0 0
    %4253 = vmatprep.subr.bf16.mxu0 0
    %4254 = vmatpush1.bf16.msra.mxu0 0
    %4255 = vmatprep.subr.bf16.mxu0 0
    %4256 = vmatpush1.bf16.msra.mxu0 0
    %4257 = vmatprep.subr.bf16.mxu0 0
    %4258 = vmatpush1.bf16.msra.mxu0 0
    %4259 = vmatprep.subr.bf16.mxu0 0
    %4260 = vmatpush1.bf16.msra.mxu0 0
    %4261 = vmatprep.subr.bf16.mxu0 0
    %4262 = vmatpush1.bf16.msra.mxu0 0
    %4263 = vmatprep.mubr.bf16.mxu0 0
    %4264 = vmatmul.mubr.bf16.gmra.mrb[0].mxu0 %v4208
    %v4265 = vpop.f32.mrb[0].mxu0
    %v4266 = vadd.f32 0.0, %v4265
    %v4267 = vpop.f32.mrb[0].mxu0
    %v4268 = vpop.f32.mrb[0].mxu0
    %v4269 = vadd.f32 0.0, %v4268
    %v4270 = vpop.f32.mrb[0].mxu0
    %4271 = vmatprep.mubr.bf16.mxu0 0
    %4272 = vmatmul.mubr.bf16.gmra.mrb[0].mxu0 %v4211
    %v4273 = vpop.f32.mrb[0].mxu0
    %v4274 = vadd.f32 0.0, %v4273
    %v4275 = vpop.f32.mrb[0].mxu0
    %v4276 = vpop.f32.mrb[0].mxu0
    %v4277 = vadd.f32 0.0, %v4276
    %v4278 = vpop.f32.mrb[0].mxu0
    %4279 = vmatprep.mubr.bf16.mxu0 0
    %4280 = vmatmul.mubr.bf16.gmra.mrb[0].mxu0 %v4214
    %v4281 = vpop.f32.mrb[0].mxu0
    %v4282 = vadd.f32 0.0, %v4281
    %v4283 = vpop.f32.mrb[0].mxu0
    %v4284 = vpop.f32.mrb[0].mxu0
    %v4285 = vadd.f32 0.0, %v4284
    %v4286 = vpop.f32.mrb[0].mxu0
    %4287 = vmatprep.mubr.bf16.mxu0 0
    %4288 = vmatmul.mubr.bf16.gmra.mrb[0].mxu0 %v4217
    %v4289 = vpop.f32.mrb[0].mxu0
    %v4290 = vadd.f32 0.0, %v4289
    %v4291 = vpop.f32.mrb[0].mxu0
    %v4292 = vpop.f32.mrb[0].mxu0
    %v4293 = vadd.f32 0.0, %v4292
    %v4294 = vpop.f32.mrb[0].mxu0
    %4295 = vmatprep.mubr.bf16.mxu0 0
    %4296 = vmatmul.mubr.bf16.gmra.mrb[0].mxu0 %v4220
    %v4297 = vpop.f32.mrb[0].mxu0
    %v4298 = vadd.f32 0.0, %v4297
    %v4299 = vpop.f32.mrb[0].mxu0
    %v4300 = vpop.f32.mrb[0].mxu0
    %v4301 = vadd.f32 0.0, %v4300
    %v4302 = vpop.f32.mrb[0].mxu0
    %4303 = vmatprep.mubr.bf16.mxu0 0
    %4304 = vmatmul.mubr.bf16.gmra.mrb[0].mxu0 %v4223
    %v4305 = vpop.f32.mrb[0].mxu0
    %v4306 = vadd.f32 0.0, %v4305
    %v4307 = vpop.f32.mrb[0].mxu0
    %v4308 = vpop.f32.mrb[0].mxu0
    %v4309 = vadd.f32 0.0, %v4308
    %v4310 = vpop.f32.mrb[0].mxu0
    %4311 = vmatprep.mubr.bf16.mxu0 0
    %4312 = vmatmul.mubr.bf16.gmra.mrb[0].mxu0 %v4226
    %v4313 = vpop.f32.mrb[0].mxu0
    %v4314 = vadd.f32 0.0, %v4313
    %v4315 = vpop.f32.mrb[0].mxu0
    %v4316 = vpop.f32.mrb[0].mxu0
    %v4317 = vadd.f32 0.0, %v4316
    %v4318 = vpop.f32.mrb[0].mxu0
    %4319 = vmatprep.mubr.bf16.mxu0 0
    %4320 = vmatmul.mubr.bf16.gmra.mrb[0].mxu0 %v4229
    %v4321 = vpop.f32.mrb[0].mxu0
    %v4322 = vadd.f32 0.0, %v4321
    %v4323 = vpop.f32.mrb[0].mxu0
    %v4324 = vpop.f32.mrb[0].mxu0
    %v4325 = vadd.f32 0.0, %v4324
    %v4326 = vpop.f32.mrb[0].mxu0
    %4327 = vdwg.mxu0
    %v4328 = vld [vmem:[#allocation2] sm:$0xff]
    %v4329 = vld [vmem:[#allocation2 + $0x8] sm:$0xff]
    %v4330 = vld [vmem:[#allocation2 + $0x10] sm:$0xff]
    %v4331 = vld [vmem:[#allocation2 + $0x18] sm:$0xff]
    %v4332 = vld [vmem:[#allocation2 + $0x20] sm:$0xff]
    %v4333 = vld [vmem:[#allocation2 + $0x28] sm:$0xff]
    %v4334 = vld [vmem:[#allocation2 + $0x30] sm:$0xff]
    %v4335 = vld [vmem:[#allocation2 + $0x38] sm:$0xff]
    %v4336 = vld [vmem:[#allocation2 + $0x40] sm:$0xff]
    %v4337 = vld [vmem:[#allocation2 + $0x48] sm:$0xff]
    %v4338 = vld [vmem:[#allocation2 + $0x50] sm:$0xff]
    %v4339 = vld [vmem:[#allocation2 + $0x58] sm:$0xff]
    %v4340 = vld [vmem:[#allocation2 + $0x60] sm:$0xff]
    %v4341 = vld [vmem:[#allocation2 + $0x68] sm:$0xff]
    %v4342 = vld [vmem:[#allocation2 + $0x70] sm:$0xff]
    %v4343 = vld [vmem:[#allocation2 + $0x78] sm:$0xff]
    %v4344 = vadd.f32 %v4328, %v4266
    %v4345 = vadd.f32 %v4329, %v4269
    %v4346 = vadd.f32 %v4330, %v4274
    %v4347 = vadd.f32 %v4331, %v4277
    %v4348 = vadd.f32 %v4332, %v4282
    %v4349 = vadd.f32 %v4333, %v4285
    %v4350 = vadd.f32 %v4334, %v4290
    %v4351 = vadd.f32 %v4335, %v4293
    %v4352 = vadd.f32 %v4336, %v4298
    %v4353 = vadd.f32 %v4337, %v4301
    %v4354 = vadd.f32 %v4338, %v4306
    %v4355 = vadd.f32 %v4339, %v4309
    %v4356 = vadd.f32 %v4340, %v4314
    %v4357 = vadd.f32 %v4341, %v4317
    %v4358 = vadd.f32 %v4342, %v4322
    %v4359 = vadd.f32 %v4343, %v4325
    %4360 = vst.msk [vmem:[#allocation2] sm:$0xff] %vm51, %v4344
    %4361 = vst.msk [vmem:[#allocation2 + $0x8] sm:$0xff] %vm51, %v4345
    %4362 = vst.msk [vmem:[#allocation2 + $0x10] sm:$0xff] %vm51, %v4346
    %4363 = vst.msk [vmem:[#allocation2 + $0x18] sm:$0xff] %vm51, %v4347
    %4364 = vst.msk [vmem:[#allocation2 + $0x20] sm:$0xff] %vm51, %v4348
    %4365 = vst.msk [vmem:[#allocation2 + $0x28] sm:$0xff] %vm51, %v4349
    %4366 = vst.msk [vmem:[#allocation2 + $0x30] sm:$0xff] %vm51, %v4350
    %4367 = vst.msk [vmem:[#allocation2 + $0x38] sm:$0xff] %vm51, %v4351
    %4368 = vst.msk [vmem:[#allocation2 + $0x40] sm:$0xff] %vm51, %v4352
    %4369 = vst.msk [vmem:[#allocation2 + $0x48] sm:$0xff] %vm51, %v4353
    %4370 = vst.msk [vmem:[#allocation2 + $0x50] sm:$0xff] %vm51, %v4354
    %4371 = vst.msk [vmem:[#allocation2 + $0x58] sm:$0xff] %vm51, %v4355
    %4372 = vst.msk [vmem:[#allocation2 + $0x60] sm:$0xff] %vm51, %v4356
    %4373 = vst.msk [vmem:[#allocation2 + $0x68] sm:$0xff] %vm51, %v4357
    %4374 = vst.msk [vmem:[#allocation2 + $0x70] sm:$0xff] %vm51, %v4358
    %4375 = vst.msk [vmem:[#allocation2 + $0x78] sm:$0xff] %vm51, %v4359
    %v4376 = vld [vmem:[#allocation2] sm:$0xff]
    %v4377 = vld [vmem:[#allocation2 + $0x8] sm:$0xff]
    %v4378 = vld [vmem:[#allocation2 + $0x10] sm:$0xff]
    %v4379 = vld [vmem:[#allocation2 + $0x18] sm:$0xff]
    %v4380 = vld [vmem:[#allocation2 + $0x20] sm:$0xff]
    %v4381 = vld [vmem:[#allocation2 + $0x28] sm:$0xff]
    %v4382 = vld [vmem:[#allocation2 + $0x30] sm:$0xff]
    %v4383 = vld [vmem:[#allocation2 + $0x38] sm:$0xff]
    %v4384 = vld [vmem:[#allocation2 + $0x40] sm:$0xff]
    %v4385 = vld [vmem:[#allocation2 + $0x48] sm:$0xff]
    %v4386 = vld [vmem:[#allocation2 + $0x50] sm:$0xff]
    %v4387 = vld [vmem:[#allocation2 + $0x58] sm:$0xff]
    %v4388 = vld [vmem:[#allocation2 + $0x60] sm:$0xff]
    %v4389 = vld [vmem:[#allocation2 + $0x68] sm:$0xff]
    %v4390 = vld [vmem:[#allocation2 + $0x70] sm:$0xff]
    %v4391 = vld [vmem:[#allocation2 + $0x78] sm:$0xff]
    %4392 = vst.msk [vmem:[#allocation4] sm:$0xff] %vm51, %v4376
    %4393 = vst.msk [vmem:[#allocation4 + $0x8] sm:$0xff] %vm51, %v4377
    %4394 = vst.msk [vmem:[#allocation4 + $0x10] sm:$0xff] %vm51, %v4378
    %4395 = vst.msk [vmem:[#allocation4 + $0x18] sm:$0xff] %vm51, %v4379
    %4396 = vst.msk [vmem:[#allocation4 + $0x20] sm:$0xff] %vm51, %v4380
    %4397 = vst.msk [vmem:[#allocation4 + $0x28] sm:$0xff] %vm51, %v4381
    %4398 = vst.msk [vmem:[#allocation4 + $0x30] sm:$0xff] %vm51, %v4382
    %4399 = vst.msk [vmem:[#allocation4 + $0x38] sm:$0xff] %vm51, %v4383
    %4400 = vst.msk [vmem:[#allocation4 + $0x40] sm:$0xff] %vm51, %v4384
    %4401 = vst.msk [vmem:[#allocation4 + $0x48] sm:$0xff] %vm51, %v4385
    %4402 = vst.msk [vmem:[#allocation4 + $0x50] sm:$0xff] %vm51, %v4386
    %4403 = vst.msk [vmem:[#allocation4 + $0x58] sm:$0xff] %vm51, %v4387
    %4404 = vst.msk [vmem:[#allocation4 + $0x60] sm:$0xff] %vm51, %v4388
    %4405 = vst.msk [vmem:[#allocation4 + $0x68] sm:$0xff] %vm51, %v4389
    %4406 = vst.msk [vmem:[#allocation4 + $0x70] sm:$0xff] %vm51, %v4390
    %4407 = vst.msk [vmem:[#allocation4 + $0x78] sm:$0xff] %vm51, %v4391
    // Predicated region
    $region18: #{tpu_custom_call.1} parent=1 // pred_check
      _
    $region19: #{tpu_custom_call.1} parent=1 // pred_check_branch
      %4409 = sbr.rel (0) target = $region21
    $region20: #{tpu_custom_call.1} parent=1 // pred_region
      %s4411 = ssub.s32 2048, 2048
      %4412 = vsyncadd [#allocation5], %s4411
      %s4413 = sshll.u32 [#allocation4], 4
      %s4414 = int_to_ptr.vmem [resolvable:$true] %s4413
      %4419 = dma.vmem_to_hbm [thread:$0]  %s4414, 2048, %s4, [#allocation5], 128, 128, 8
    $region21: #{tpu_custom_call.1} parent=1 // pred_fallthru
      _
    // Predicated region
    $region22: #{tpu_custom_call.1} parent=1 // pred_check
      _
    $region23: #{tpu_custom_call.1} parent=1 // pred_check_branch
      %4421 = sbr.rel (0) target = $region25
    $region24: #{tpu_custom_call.1} parent=1 // pred_region
      %4422 = dma.done [#allocation5], 2048
    $region25: #{tpu_custom_call.1} parent=1 // pred_fallthru
      _
    %4423 = vsyncpa [#allocation5], 1

</llo_original>
